<compile_context>
chip_gen: v7x
topology: tpu7x:2x2x1
jax: 0.10.0
libtpu: 0.0.40
codegen_flags: <defaults>
</compile_context>

<pallas_src>
import functools

import jax
import jax.numpy as jnp
from jax import lax
from jax.experimental import pallas as pl
from jax.experimental.pallas import tpu as pltpu

LANE = 128


def _round_up(x, m):
    return (x + m - 1) // m * m


# ----------------------------------------------------------------------------
# Kernel 1: 3x3 same-padded conv (per-tap MXU matmuls, f32 accumulation) +
# bias, plus per-(batch, row-tile) channel sum / sum-of-squares partials for
# the BatchNorm batch statistics.  The zero-padded image stays in HBM; a
# (TH+2)-row halo window is manually DMA'd per step, double-buffered.
# ----------------------------------------------------------------------------
def conv_stats_kernel(x_hbm, w_ref, b_ref, out_ref, stats_ref, xwin, sem,
                      *, TH, W, K, H, R):
    # x_hbm    : (N, Hp, Wpp, Cinp)   bf16, HBM (memory_space=pl.ANY)
    # w_ref    : (K, K, Cinp, Coutp)  bf16
    # b_ref    : (1, Coutp)           f32
    # out_ref  : (1, TH, W, Coutp)    bf16 conv output tile (lane-dense)
    # stats_ref: (1, 1, 8, Coutp)     f32  row0 = sum, row1 = sum of squares
    # xwin     : (2, TH+2, Wpp, Cinp) bf16 VMEM scratch (double-buffered halo)
    # sem      : DMA semaphores (2,)
    n = pl.program_id(0)
    r = pl.program_id(1)
    slot = lax.rem(r, 2)

    def halo_copy(n_idx, r_idx, s_idx):
        return pltpu.make_async_copy(
            x_hbm.at[n_idx, pl.ds(r_idx * TH, TH + 2)],
            xwin.at[s_idx],
            sem.at[s_idx])

    # Prime at the start of each image's row sweep.  The R axis is "arbitrary"
    # (executed in order within a fixed n), so this is safe per core even when
    # the N axis is sharded across v7x's two TensorCores.
    @pl.when(r == 0)
    def _():
        halo_copy(n, 0, 0).start()

    # Prefetch the next row tile's halo window into the other slot.
    @pl.when(r + 1 < R)
    def _():
        halo_copy(n, r + 1, 1 - slot).start()

    halo_copy(n, r, slot).wait()
    win = xwin.at[slot]

    # Per-tap accumulating matmuls: no im2col slab, no input casts.  ky taps
    # are leading-dim slices of the bf16 window (free); kx taps are handled by
    # slicing the f32 matmul outputs (cheap 32-bit sublane shifts).
    acc = None
    for kx in range(K):
        acc_kx = None
        for ky in range(K):
            xk = win[ky:ky + TH]                         # (TH, Wpp, Cinp) bf16
            p = jnp.einsum("hwc,co->hwo", xk, w_ref[ky, kx],
                           preferred_element_type=jnp.float32)
            acc_kx = p if acc_kx is None else acc_kx + p
        part = acc_kx[:, kx:kx + W, :]                   # (TH, W, Coutp) f32
        acc = part if acc is None else acc + part
    acc = acc + b_ref[0][None, None, :]                  # conv + bias, f32

    out_ref[0] = acc.astype(out_ref.dtype)

    # Per-channel partial sums for the BatchNorm batch statistics (f32).
    # Mask rows that only exist because H was padded up to a multiple of TH.
    if R * TH > H:
        rows = r * TH + lax.broadcasted_iota(jnp.int32, (TH, 1, 1), 0)
        acc_s = jnp.where(rows < H, acc, 0.0)
    else:
        acc_s = acc
    s = jnp.sum(acc_s, axis=(0, 1))                      # (Coutp,)
    ss = jnp.sum(acc_s * acc_s, axis=(0, 1))             # (Coutp,)
    # Stats block padded to 8 sublanes -> unmasked full-width stores.
    stats_ref[0, 0] = jnp.concatenate(
        [s[None, :], ss[None, :], jnp.zeros((6, s.shape[0]), jnp.float32)],
        axis=0)


# ----------------------------------------------------------------------------
# Kernel 2: folded BatchNorm affine + ReLU over flat lane-dense row blocks.
# ----------------------------------------------------------------------------
def bn_relu_kernel(y_ref, scale_ref, shift_ref, out_ref):
    # y_ref     : (BR, Coutp) bf16 conv intermediate rows
    # scale_ref : (1, Coutp)  f32 folded BN scale
    # shift_ref : (1, Coutp)  f32 folded BN shift
    # out_ref   : (BR, Coutp) f32
    y = y_ref[...].astype(jnp.float32)
    out_ref[...] = jnp.maximum(y * scale_ref[...] + shift_ref[...],
                               0.0).astype(out_ref.dtype)


# ----------------------------------------------------------------------------
# Wrapper
# ----------------------------------------------------------------------------
@jax.jit
def conv_bn_relu(x_nchw, w_oihw, bias, gamma, beta, eps=1e-5):
    N, Cin, H, W = x_nchw.shape
    Cout, _, K, _ = w_oihw.shape
    pad = K // 2

    Cinp = _round_up(Cin, LANE)
    Coutp = _round_up(Cout, LANE)
    Wpp = _round_up(W + 2 * pad, 8)      # sublane-aligned padded width
    Hpad = _round_up(H, 8)               # output rows padded to sublane tile
    Hp = Hpad + 2 * pad

    # Row-tile height: target TH*W >= ~512 (MXU M utilization on v6e/v7x),
    # must divide Hpad (no TH=H fallback), capped by a conservative per-step
    # VMEM working-set budget so the same tiling also fits v7x's 64 MiB.
    def ws_bytes(th):
        return (2 * (th + 2) * Wpp * Cinp * 2      # halo window double buffer
                + 2 * th * W * Coutp * 2           # output tile double buffer
                + 2 * th * Wpp * Coutp * 4         # f32 accumulators
                + 2 * K * K * Cinp * Coutp * 2)    # weights
    th_cap = min(_round_up(-(-512 // W), 8), Hpad)
    while th_cap > 8 and ws_bytes(th_cap) > 24 * 1024 * 1024:
        th_cap -= 8
    TH = 8
    t = 8
    while t <= th_cap:
        if Hpad % t == 0:
            TH = t
        t += 8
    R = Hpad // TH

    # Input layout plumbing: NCHW -> NHWC, conv + alignment zero-padding,
    # channel pad to the 128-lane boundary, bf16 cast (one fused XLA pass).
    x = jnp.transpose(x_nchw, (0, 2, 3, 1))
    x = jnp.pad(x, ((0, 0),
                    (pad, pad + (Hpad - H)),
                    (pad, Wpp - W - pad),
                    (0, Cinp - Cin)))
    x = x.astype(jnp.bfloat16)

    # OIHW -> (K, K, Cin, Cout), pad channels, bf16.
    w = jnp.transpose(w_oihw, (2, 3, 1, 0))
    w = jnp.pad(w, ((0, 0), (0, 0), (0, Cinp - Cin), (0, Coutp - Cout)))
    w = w.astype(jnp.bfloat16)

    b2 = jnp.pad(bias.astype(jnp.float32), (0, Coutp - Cout)).reshape(1, Coutp)

    conv_bytes = (x.size * 2 + w.size * 2 + b2.size * 4
                  + N * Hpad * W * Coutp * 2 + N * R * 8 * Coutp * 4)
    conv_out, stats = pl.pallas_call(
        functools.partial(conv_stats_kernel, TH=TH, W=W, K=K, H=H, R=R),
        out_shape=(
            jax.ShapeDtypeStruct((N, Hpad, W, Coutp), jnp.bfloat16),
            jax.ShapeDtypeStruct((N, R, 8, Coutp), jnp.float32),
        ),
        grid_spec=pltpu.PrefetchScalarGridSpec(
            num_scalar_prefetch=0,
            grid=(N, R),
            in_specs=[
                pl.BlockSpec(memory_space=pl.ANY),            # x stays in HBM
                pl.BlockSpec((K, K, Cinp, Coutp), lambda n, r: (0, 0, 0, 0)),
                pl.BlockSpec((1, Coutp), lambda n, r: (0, 0)),
            ],
            out_specs=(
                pl.BlockSpec((1, TH, W, Coutp), lambda n, r: (n, r, 0, 0)),
                pl.BlockSpec((1, 1, 8, Coutp), lambda n, r: (n, r, 0, 0)),
            ),
            scratch_shapes=[
                pltpu.VMEM((2, TH + 2, Wpp, Cinp), jnp.bfloat16),
                pltpu.SemaphoreType.DMA((2,)),
            ]),
        compiler_params=pltpu.CompilerParams(
            # Manual halo double-buffering carries state along R -> keep it
            # "arbitrary"; N is independent and safe to shard across cores.
            dimension_semantics=("parallel", "arbitrary"),
            vmem_limit_bytes=48 * 1024 * 1024),
        cost_estimate=pl.CostEstimate(
            flops=2 * N * Hpad * Wpp * K * K * Cinp * Coutp,
            transcendentals=0,
            bytes_accessed=conv_bytes),
    )(x, w, b2)

    # BatchNorm2d (training-mode) batch statistics: biased variance over
    # N, H, W, reduced from the per-(batch, row-tile) f32 partials.
    count = jnp.float32(N * H * W)
    ssum = jnp.sum(stats[:, :, 0, :], axis=(0, 1))
    ssq = jnp.sum(stats[:, :, 1, :], axis=(0, 1))
    mean = ssum / count
    var = jnp.maximum(ssq / count - mean * mean, 0.0)
    # TODO(synk): E[x^2]-E[x]^2 is cancellation-prone for large-mean
    # activations; switch to a two-pass / Welford reduction if that matters.
    # NOTE: padded Cout channels stay finite only because gamma/beta are
    # ZERO-padded here (-> scale = shift = 0 for those channels).
    gamma_p = jnp.pad(gamma.astype(jnp.float32), (0, Coutp - Cout))
    beta_p = jnp.pad(beta.astype(jnp.float32), (0, Coutp - Cout))
    scale = gamma_p * jax.lax.rsqrt(var + eps)
    shift = beta_p - mean * scale

    # Folded BN + ReLU over flat (N*Hpad*W, Coutp) rows with the largest
    # 8-aligned row block <= 2048 that divides the row count (mem-bound
    # kernel -> big lane-dense 1-D blocks).
    rows = N * Hpad * W
    BR = 8
    d = 8
    limit = min(2048, rows)
    while d <= limit:
        if rows % d == 0:
            BR = d
        d += 8
    y_flat = conv_out.reshape(rows, Coutp)

    bn_bytes = rows * Coutp * (2 + 4) + 2 * Coutp * 4
    y = pl.pallas_call(
        bn_relu_kernel,
        out_shape=jax.ShapeDtypeStruct((rows, Coutp), jnp.float32),
        grid_spec=pltpu.PrefetchScalarGridSpec(
            num_scalar_prefetch=0,
            grid=(rows // BR,),
            in_specs=[
                pl.BlockSpec((BR, Coutp), lambda i: (i, 0)),
                pl.BlockSpec((1, Coutp), lambda i: (0, 0)),
                pl.BlockSpec((1, Coutp), lambda i: (0, 0)),
            ],
            out_specs=pl.BlockSpec((BR, Coutp), lambda i: (i, 0))),
        compiler_params=pltpu.CompilerParams(
            dimension_semantics=("parallel",),
            vmem_limit_bytes=32 * 1024 * 1024),
        cost_estimate=pl.CostEstimate(
            flops=3 * rows * Coutp,
            transcendentals=0,
            bytes_accessed=bn_bytes),
    )(y_flat, scale.reshape(1, Coutp), shift.reshape(1, Coutp))

    # NHWC -> NCHW, drop channel / row padding (one small fused XLA pass).
    # TODO(synk): emit bf16 here / fold the transpose into the BN kernel if
    # the downstream consumer tolerates it (kernel 2 is HBM-write-bound and
    # the Coutp lane padding is pure write amplification for small Cout).
    y = y.reshape(N, Hpad, W, Coutp)
    return jnp.transpose(y, (0, 3, 1, 2))[:, :Cout, :H, :]


# ----------------------------------------------------------------------------
# Pure-JAX reference (for the sanity check).
# ----------------------------------------------------------------------------
def conv_bn_relu_ref(x_nchw, w_oihw, bias, gamma, beta, eps=1e-5):
    conv = jax.lax.conv_general_dilated(
        x_nchw, w_oihw, window_strides=(1, 1), padding=((1, 1), (1, 1)),
        dimension_numbers=("NCHW", "OIHW", "NCHW"))
    conv = conv + bias[None, :, None, None]
    mean = jnp.mean(conv, axis=(0, 2, 3))
    var = jnp.mean(conv * conv, axis=(0, 2, 3)) - mean * mean
    norm = (conv - mean[None, :, None, None]) / jnp.sqrt(
        var[None, :, None, None] + eps)
    return jnp.maximum(norm * gamma[None, :, None, None]
                       + beta[None, :, None, None], 0.0)


if __name__ == "__main__":
    key = jax.random.PRNGKey(0)
    k_x, k_w, k_b, k_g, k_be = jax.random.split(key, 5)

    N, Cin, H, W = 2, 4, 16, 16
    Cout, K = 8, 3

    x = jax.random.normal(k_x, (N, Cin, H, W), dtype=jnp.float32)
    w = 0.1 * jax.random.normal(k_w, (Cout, Cin, K, K), dtype=jnp.float32)
    b = 0.05 * jax.random.normal(k_b, (Cout,), dtype=jnp.float32)
    gamma = 1.0 + 0.1 * jax.random.normal(k_g, (Cout,), dtype=jnp.float32)
    beta = 0.1 * jax.random.normal(k_be, (Cout,), dtype=jnp.float32)

    out = conv_bn_relu(x, w, b, gamma, beta)
    out = jax.block_until_ready(out)

    ref = conv_bn_relu_ref(x, w, b, gamma, beta)
    assert out.shape == (N, Cout, H, W), out.shape
    # bf16 MXU operands + bf16 conv intermediate -> tolerance loosened vs the
    # all-f32 reference (stats / BN math stay f32).
    max_err = float(jnp.max(jnp.abs(out - ref)))
    assert jnp.allclose(out, ref, atol=5e-2, rtol=5e-2), max_err

    print("KERNEL_OK")
</pallas_src>

<mosaic_0001>
module attributes {stable_mosaic.version = 11 : i64} {
  func.func @conv_stats_kernel(%arg0: i32, %arg1: i32, %arg2: memref<2x18x24x128xbf16, #tpu.memory_space<any>>, %arg3: memref<3x3x128x128xbf16, #tpu.memory_space<vmem>>, %arg4: memref<1x128xf32, #tpu.memory_space<vmem>>, %arg5: memref<1x16x16x128xbf16, #tpu.memory_space<vmem>>, %arg6: memref<1x1x8x128xf32, #tpu.memory_space<vmem>>, %arg7: memref<2x18x24x128xbf16, #tpu.memory_space<vmem>>, %arg8: memref<2x!tpu.dma_semaphore, #tpu.memory_space<semaphore_mem>>) attributes {dimension_semantics = [#tpu.dimension_semantics<parallel>, #tpu.dimension_semantics<arbitrary>], iteration_bounds = array<i64: 2, 1>, scalar_prefetch = 0 : i64, scratch_operands = 2 : i64, tpu.core_type = #tpu.core_type<tc>, window_params = [{}, {pipeline_mode = #tpu.pipeline_mode<synchronous>, transform_indices = @transform_1, window_bounds = array<i64: 3, 3, 128, 128>}, {pipeline_mode = #tpu.pipeline_mode<synchronous>, transform_indices = @transform_2, window_bounds = array<i64: 1, 128>}, {transform_indices = @transform_3, window_bounds = array<i64: 1, 16, 16, 128>}, {transform_indices = @transform_4, window_bounds = array<i64: 1, 1, 8, 128>}]} {
    %c2_i32 = arith.constant 2 : i32
    %0 = arith.remsi %arg1, %c2_i32 : i32
    %c0_i32 = arith.constant 0 : i32
    %1 = arith.cmpi eq, %arg1, %c0_i32 : i32
    %2 = arith.extui %1 : i1 to i32
    %c0_i32_0 = arith.constant 0 : i32
    %3 = arith.cmpi ne, %2, %c0_i32_0 : i32
    scf.if %3 {
      %c0_i32_116 = arith.constant 0 : i32
      %c0_i32_117 = arith.constant 0 : i32
      %c0_i32_118 = arith.constant 0 : i32
      %c0_i32_119 = arith.constant 0 : i32
      %c0_i32_120 = arith.constant 0 : i32
      %99 = tpu.memref_slice %arg2[%arg0, %c0_i32_118, %c0_i32_119, %c0_i32_120] : memref<2x18x24x128xbf16, #tpu.memory_space<any>> -> memref<1x18x24x128xbf16, #tpu.memory_space<any>>
      %100 = tpu.memref_squeeze %99 : memref<1x18x24x128xbf16, #tpu.memory_space<any>> -> memref<18x24x128xbf16, #tpu.memory_space<any>>
      %c0_i32_121 = arith.constant 0 : i32
      %c0_i32_122 = arith.constant 0 : i32
      %c0_i32_123 = arith.constant 0 : i32
      %101 = tpu.memref_slice %arg7[%c0_i32_116, %c0_i32_121, %c0_i32_122, %c0_i32_123] : memref<2x18x24x128xbf16, #tpu.memory_space<vmem>> -> memref<1x18x24x128xbf16, #tpu.memory_space<vmem>>
      %102 = tpu.memref_squeeze %101 : memref<1x18x24x128xbf16, #tpu.memory_space<vmem>> -> memref<18x24x128xbf16, #tpu.memory_space<vmem>>
      %103 = tpu.memref_slice %arg8[%c0_i32_117] : memref<2x!tpu.dma_semaphore, #tpu.memory_space<semaphore_mem>> -> memref<1x!tpu.dma_semaphore, #tpu.memory_space<semaphore_mem>>
      %104 = tpu.memref_squeeze %103 : memref<1x!tpu.dma_semaphore, #tpu.memory_space<semaphore_mem>> -> memref<!tpu.dma_semaphore, #tpu.memory_space<semaphore_mem>>
      tpu.enqueue_dma source(%100 : memref<18x24x128xbf16, #tpu.memory_space<any>>) target(%102 : memref<18x24x128xbf16, #tpu.memory_space<vmem>>) target_semaphore(%104 : memref<!tpu.dma_semaphore, #tpu.memory_space<semaphore_mem>>)
    } else {
    }
    %c1_i32 = arith.constant 1 : i32
    %4 = arith.addi %arg1, %c1_i32 : i32
    %c1_i32_1 = arith.constant 1 : i32
    %5 = arith.cmpi slt, %4, %c1_i32_1 : i32
    %6 = arith.extui %5 : i1 to i32
    %c0_i32_2 = arith.constant 0 : i32
    %7 = arith.cmpi ne, %6, %c0_i32_2 : i32
    scf.if %7 {
      %c1_i32_116 = arith.constant 1 : i32
      %99 = arith.addi %arg1, %c1_i32_116 : i32
      %c1_i32_117 = arith.constant 1 : i32
      %100 = arith.subi %c1_i32_117, %0 : i32
      %c16_i32_118 = arith.constant 16 : i32
      %101 = arith.muli %99, %c16_i32_118 : i32
      %c0_i32_119 = arith.constant 0 : i32
      %c0_i32_120 = arith.constant 0 : i32
      %102 = tpu.memref_slice %arg2[%arg0, %101, %c0_i32_119, %c0_i32_120] : memref<2x18x24x128xbf16, #tpu.memory_space<any>> -> memref<1x18x24x128xbf16, #tpu.memory_space<any>>
      %103 = tpu.memref_squeeze %102 : memref<1x18x24x128xbf16, #tpu.memory_space<any>> -> memref<18x24x128xbf16, #tpu.memory_space<any>>
      %c0_i32_121 = arith.constant 0 : i32
      %c0_i32_122 = arith.constant 0 : i32
      %c0_i32_123 = arith.constant 0 : i32
      %104 = tpu.memref_slice %arg7[%100, %c0_i32_121, %c0_i32_122, %c0_i32_123] : memref<2x18x24x128xbf16, #tpu.memory_space<vmem>> -> memref<1x18x24x128xbf16, #tpu.memory_space<vmem>>
      %105 = tpu.memref_squeeze %104 : memref<1x18x24x128xbf16, #tpu.memory_space<vmem>> -> memref<18x24x128xbf16, #tpu.memory_space<vmem>>
      %106 = tpu.memref_slice %arg8[%100] : memref<2x!tpu.dma_semaphore, #tpu.memory_space<semaphore_mem>> -> memref<1x!tpu.dma_semaphore, #tpu.memory_space<semaphore_mem>>
      %107 = tpu.memref_squeeze %106 : memref<1x!tpu.dma_semaphore, #tpu.memory_space<semaphore_mem>> -> memref<!tpu.dma_semaphore, #tpu.memory_space<semaphore_mem>>
      tpu.enqueue_dma source(%103 : memref<18x24x128xbf16, #tpu.memory_space<any>>) target(%105 : memref<18x24x128xbf16, #tpu.memory_space<vmem>>) target_semaphore(%107 : memref<!tpu.dma_semaphore, #tpu.memory_space<semaphore_mem>>)
    } else {
    }
    %c16_i32 = arith.constant 16 : i32
    %8 = arith.muli %arg1, %c16_i32 : i32
    %c0_i32_3 = arith.constant 0 : i32
    %c0_i32_4 = arith.constant 0 : i32
    %9 = tpu.memref_slice %arg2[%arg0, %8, %c0_i32_3, %c0_i32_4] : memref<2x18x24x128xbf16, #tpu.memory_space<any>> -> memref<1x18x24x128xbf16, #tpu.memory_space<any>>
    %10 = tpu.memref_squeeze %9 : memref<1x18x24x128xbf16, #tpu.memory_space<any>> -> memref<18x24x128xbf16, #tpu.memory_space<any>>
    %c0_i32_5 = arith.constant 0 : i32
    %c0_i32_6 = arith.constant 0 : i32
    %c0_i32_7 = arith.constant 0 : i32
    %11 = tpu.memref_slice %arg7[%0, %c0_i32_5, %c0_i32_6, %c0_i32_7] : memref<2x18x24x128xbf16, #tpu.memory_space<vmem>> -> memref<1x18x24x128xbf16, #tpu.memory_space<vmem>>
    %12 = tpu.memref_squeeze %11 : memref<1x18x24x128xbf16, #tpu.memory_space<vmem>> -> memref<18x24x128xbf16, #tpu.memory_space<vmem>>
    %13 = tpu.memref_slice %arg8[%0] : memref<2x!tpu.dma_semaphore, #tpu.memory_space<semaphore_mem>> -> memref<1x!tpu.dma_semaphore, #tpu.memory_space<semaphore_mem>>
    %14 = tpu.memref_squeeze %13 : memref<1x!tpu.dma_semaphore, #tpu.memory_space<semaphore_mem>> -> memref<!tpu.dma_semaphore, #tpu.memory_space<semaphore_mem>>
    tpu.wait_dma2 semaphore(%14 : memref<!tpu.dma_semaphore, #tpu.memory_space<semaphore_mem>>) src(%10 : memref<18x24x128xbf16, #tpu.memory_space<any>>) dst(%12 : memref<18x24x128xbf16, #tpu.memory_space<vmem>>)
    %c0_i32_8 = arith.constant 0 : i32
    %c0_i32_9 = arith.constant 0 : i32
    %c0_i32_10 = arith.constant 0 : i32
    %15 = tpu.memref_slice %arg7[%0, %c0_i32_8, %c0_i32_9, %c0_i32_10] : memref<2x18x24x128xbf16, #tpu.memory_space<vmem>> -> memref<1x18x24x128xbf16, #tpu.memory_space<vmem>>
    %16 = tpu.memref_squeeze %15 : memref<1x18x24x128xbf16, #tpu.memory_space<vmem>> -> memref<18x24x128xbf16, #tpu.memory_space<vmem>>
    %c0 = arith.constant 0 : index
    %c0_11 = arith.constant 0 : index
    %c0_12 = arith.constant 0 : index
    %17 = vector.load %16[%c0, %c0_11, %c0_12] : memref<18x24x128xbf16, #tpu.memory_space<vmem>>, vector<16x24x128xbf16>
    %c0_13 = arith.constant 0 : index
    %c0_14 = arith.constant 0 : index
    %c0_15 = arith.constant 0 : index
    %c0_16 = arith.constant 0 : index
    %18 = vector.load %arg3[%c0_13, %c0_14, %c0_15, %c0_16] : memref<3x3x128x128xbf16, #tpu.memory_space<vmem>>, vector<1x1x128x128xbf16>
    %19 = vector.shape_cast %18 : vector<1x1x128x128xbf16> to vector<128x128xbf16>
    "tpu.trace_start"() <{level = 10 : i32, message = "hwc,co->hwo"}> : () -> ()
    %cst = arith.constant dense<0.000000e+00> : vector<16x24x128xf32>
    %20 = tpu.matmul %17, %19, %cst {dimension_numbers = #tpu.dot_dimension_numbers<[2], [0], [0, 1], [1], [0, 0, 0, 1, 1, 1], [], []>} : vector<16x24x128xbf16>, vector<128x128xbf16>, vector<16x24x128xf32> -> vector<16x24x128xf32>
    "tpu.trace_stop"() : () -> ()
    %c0_i32_17 = arith.constant 0 : i32
    %c0_i32_18 = arith.constant 0 : i32
    %c0_i32_19 = arith.constant 0 : i32
    %21 = tpu.memref_slice %arg7[%0, %c0_i32_17, %c0_i32_18, %c0_i32_19] : memref<2x18x24x128xbf16, #tpu.memory_space<vmem>> -> memref<1x18x24x128xbf16, #tpu.memory_space<vmem>>
    %22 = tpu.memref_squeeze %21 : memref<1x18x24x128xbf16, #tpu.memory_space<vmem>> -> memref<18x24x128xbf16, #tpu.memory_space<vmem>>
    %c1 = arith.constant 1 : index
    %c0_20 = arith.constant 0 : index
    %c0_21 = arith.constant 0 : index
    %23 = vector.load %22[%c1, %c0_20, %c0_21] : memref<18x24x128xbf16, #tpu.memory_space<vmem>>, vector<16x24x128xbf16>
    %c1_22 = arith.constant 1 : index
    %c0_23 = arith.constant 0 : index
    %c0_24 = arith.constant 0 : index
    %c0_25 = arith.constant 0 : index
    %24 = vector.load %arg3[%c1_22, %c0_23, %c0_24, %c0_25] : memref<3x3x128x128xbf16, #tpu.memory_space<vmem>>, vector<1x1x128x128xbf16>
    %25 = vector.shape_cast %24 : vector<1x1x128x128xbf16> to vector<128x128xbf16>
    "tpu.trace_start"() <{level = 10 : i32, message = "hwc,co->hwo"}> : () -> ()
    %cst_26 = arith.constant dense<0.000000e+00> : vector<16x24x128xf32>
    %26 = tpu.matmul %23, %25, %cst_26 {dimension_numbers = #tpu.dot_dimension_numbers<[2], [0], [0, 1], [1], [0, 0, 0, 1, 1, 1], [], []>} : vector<16x24x128xbf16>, vector<128x128xbf16>, vector<16x24x128xf32> -> vector<16x24x128xf32>
    "tpu.trace_stop"() : () -> ()
    %27 = arith.addf %20, %26 : vector<16x24x128xf32>
    %c0_i32_27 = arith.constant 0 : i32
    %c0_i32_28 = arith.constant 0 : i32
    %c0_i32_29 = arith.constant 0 : i32
    %28 = tpu.memref_slice %arg7[%0, %c0_i32_27, %c0_i32_28, %c0_i32_29] : memref<2x18x24x128xbf16, #tpu.memory_space<vmem>> -> memref<1x18x24x128xbf16, #tpu.memory_space<vmem>>
    %29 = tpu.memref_squeeze %28 : memref<1x18x24x128xbf16, #tpu.memory_space<vmem>> -> memref<18x24x128xbf16, #tpu.memory_space<vmem>>
    %c2 = arith.constant 2 : index
    %c0_30 = arith.constant 0 : index
    %c0_31 = arith.constant 0 : index
    %30 = vector.load %29[%c2, %c0_30, %c0_31] : memref<18x24x128xbf16, #tpu.memory_space<vmem>>, vector<16x24x128xbf16>
    %c2_32 = arith.constant 2 : index
    %c0_33 = arith.constant 0 : index
    %c0_34 = arith.constant 0 : index
    %c0_35 = arith.constant 0 : index
    %31 = vector.load %arg3[%c2_32, %c0_33, %c0_34, %c0_35] : memref<3x3x128x128xbf16, #tpu.memory_space<vmem>>, vector<1x1x128x128xbf16>
    %32 = vector.shape_cast %31 : vector<1x1x128x128xbf16> to vector<128x128xbf16>
    "tpu.trace_start"() <{level = 10 : i32, message = "hwc,co->hwo"}> : () -> ()
    %cst_36 = arith.constant dense<0.000000e+00> : vector<16x24x128xf32>
    %33 = tpu.matmul %30, %32, %cst_36 {dimension_numbers = #tpu.dot_dimension_numbers<[2], [0], [0, 1], [1], [0, 0, 0, 1, 1, 1], [], []>} : vector<16x24x128xbf16>, vector<128x128xbf16>, vector<16x24x128xf32> -> vector<16x24x128xf32>
    "tpu.trace_stop"() : () -> ()
    %34 = arith.addf %27, %33 : vector<16x24x128xf32>
    %35 = vector.extract_strided_slice %34 {offsets = [0, 0, 0], sizes = [16, 16, 128], strides = [1, 1, 1]} : vector<16x24x128xf32> to vector<16x16x128xf32>
    %c0_i32_37 = arith.constant 0 : i32
    %c0_i32_38 = arith.constant 0 : i32
    %c0_i32_39 = arith.constant 0 : i32
    %36 = tpu.memref_slice %arg7[%0, %c0_i32_37, %c0_i32_38, %c0_i32_39] : memref<2x18x24x128xbf16, #tpu.memory_space<vmem>> -> memref<1x18x24x128xbf16, #tpu.memory_space<vmem>>
    %37 = tpu.memref_squeeze %36 : memref<1x18x24x128xbf16, #tpu.memory_space<vmem>> -> memref<18x24x128xbf16, #tpu.memory_space<vmem>>
    %c0_40 = arith.constant 0 : index
    %c0_41 = arith.constant 0 : index
    %c0_42 = arith.constant 0 : index
    %38 = vector.load %37[%c0_40, %c0_41, %c0_42] : memref<18x24x128xbf16, #tpu.memory_space<vmem>>, vector<16x24x128xbf16>
    %c0_43 = arith.constant 0 : index
    %c1_44 = arith.constant 1 : index
    %c0_45 = arith.constant 0 : index
    %c0_46 = arith.constant 0 : index
    %39 = vector.load %arg3[%c0_43, %c1_44, %c0_45, %c0_46] : memref<3x3x128x128xbf16, #tpu.memory_space<vmem>>, vector<1x1x128x128xbf16>
    %40 = vector.shape_cast %39 : vector<1x1x128x128xbf16> to vector<128x128xbf16>
    "tpu.trace_start"() <{level = 10 : i32, message = "hwc,co->hwo"}> : () -> ()
    %cst_47 = arith.constant dense<0.000000e+00> : vector<16x24x128xf32>
    %41 = tpu.matmul %38, %40, %cst_47 {dimension_numbers = #tpu.dot_dimension_numbers<[2], [0], [0, 1], [1], [0, 0, 0, 1, 1, 1], [], []>} : vector<16x24x128xbf16>, vector<128x128xbf16>, vector<16x24x128xf32> -> vector<16x24x128xf32>
    "tpu.trace_stop"() : () -> ()
    %c0_i32_48 = arith.constant 0 : i32
    %c0_i32_49 = arith.constant 0 : i32
    %c0_i32_50 = arith.constant 0 : i32
    %42 = tpu.memref_slice %arg7[%0, %c0_i32_48, %c0_i32_49, %c0_i32_50] : memref<2x18x24x128xbf16, #tpu.memory_space<vmem>> -> memref<1x18x24x128xbf16, #tpu.memory_space<vmem>>
    %43 = tpu.memref_squeeze %42 : memref<1x18x24x128xbf16, #tpu.memory_space<vmem>> -> memref<18x24x128xbf16, #tpu.memory_space<vmem>>
    %c1_51 = arith.constant 1 : index
    %c0_52 = arith.constant 0 : index
    %c0_53 = arith.constant 0 : index
    %44 = vector.load %43[%c1_51, %c0_52, %c0_53] : memref<18x24x128xbf16, #tpu.memory_space<vmem>>, vector<16x24x128xbf16>
    %c1_54 = arith.constant 1 : index
    %c1_55 = arith.constant 1 : index
    %c0_56 = arith.constant 0 : index
    %c0_57 = arith.constant 0 : index
    %45 = vector.load %arg3[%c1_54, %c1_55, %c0_56, %c0_57] : memref<3x3x128x128xbf16, #tpu.memory_space<vmem>>, vector<1x1x128x128xbf16>
    %46 = vector.shape_cast %45 : vector<1x1x128x128xbf16> to vector<128x128xbf16>
    "tpu.trace_start"() <{level = 10 : i32, message = "hwc,co->hwo"}> : () -> ()
    %cst_58 = arith.constant dense<0.000000e+00> : vector<16x24x128xf32>
    %47 = tpu.matmul %44, %46, %cst_58 {dimension_numbers = #tpu.dot_dimension_numbers<[2], [0], [0, 1], [1], [0, 0, 0, 1, 1, 1], [], []>} : vector<16x24x128xbf16>, vector<128x128xbf16>, vector<16x24x128xf32> -> vector<16x24x128xf32>
    "tpu.trace_stop"() : () -> ()
    %48 = arith.addf %41, %47 : vector<16x24x128xf32>
    %c0_i32_59 = arith.constant 0 : i32
    %c0_i32_60 = arith.constant 0 : i32
    %c0_i32_61 = arith.constant 0 : i32
    %49 = tpu.memref_slice %arg7[%0, %c0_i32_59, %c0_i32_60, %c0_i32_61] : memref<2x18x24x128xbf16, #tpu.memory_space<vmem>> -> memref<1x18x24x128xbf16, #tpu.memory_space<vmem>>
    %50 = tpu.memref_squeeze %49 : memref<1x18x24x128xbf16, #tpu.memory_space<vmem>> -> memref<18x24x128xbf16, #tpu.memory_space<vmem>>
    %c2_62 = arith.constant 2 : index
    %c0_63 = arith.constant 0 : index
    %c0_64 = arith.constant 0 : index
    %51 = vector.load %50[%c2_62, %c0_63, %c0_64] : memref<18x24x128xbf16, #tpu.memory_space<vmem>>, vector<16x24x128xbf16>
    %c2_65 = arith.constant 2 : index
    %c1_66 = arith.constant 1 : index
    %c0_67 = arith.constant 0 : index
    %c0_68 = arith.constant 0 : index
    %52 = vector.load %arg3[%c2_65, %c1_66, %c0_67, %c0_68] : memref<3x3x128x128xbf16, #tpu.memory_space<vmem>>, vector<1x1x128x128xbf16>
    %53 = vector.shape_cast %52 : vector<1x1x128x128xbf16> to vector<128x128xbf16>
    "tpu.trace_start"() <{level = 10 : i32, message = "hwc,co->hwo"}> : () -> ()
    %cst_69 = arith.constant dense<0.000000e+00> : vector<16x24x128xf32>
    %54 = tpu.matmul %51, %53, %cst_69 {dimension_numbers = #tpu.dot_dimension_numbers<[2], [0], [0, 1], [1], [0, 0, 0, 1, 1, 1], [], []>} : vector<16x24x128xbf16>, vector<128x128xbf16>, vector<16x24x128xf32> -> vector<16x24x128xf32>
    "tpu.trace_stop"() : () -> ()
    %55 = arith.addf %48, %54 : vector<16x24x128xf32>
    %56 = vector.extract_strided_slice %55 {offsets = [0, 1, 0], sizes = [16, 16, 128], strides = [1, 1, 1]} : vector<16x24x128xf32> to vector<16x16x128xf32>
    %57 = arith.addf %35, %56 : vector<16x16x128xf32>
    %c0_i32_70 = arith.constant 0 : i32
    %c0_i32_71 = arith.constant 0 : i32
    %c0_i32_72 = arith.constant 0 : i32
    %58 = tpu.memref_slice %arg7[%0, %c0_i32_70, %c0_i32_71, %c0_i32_72] : memref<2x18x24x128xbf16, #tpu.memory_space<vmem>> -> memref<1x18x24x128xbf16, #tpu.memory_space<vmem>>
    %59 = tpu.memref_squeeze %58 : memref<1x18x24x128xbf16, #tpu.memory_space<vmem>> -> memref<18x24x128xbf16, #tpu.memory_space<vmem>>
    %c0_73 = arith.constant 0 : index
    %c0_74 = arith.constant 0 : index
    %c0_75 = arith.constant 0 : index
    %60 = vector.load %59[%c0_73, %c0_74, %c0_75] : memref<18x24x128xbf16, #tpu.memory_space<vmem>>, vector<16x24x128xbf16>
    %c0_76 = arith.constant 0 : index
    %c2_77 = arith.constant 2 : index
    %c0_78 = arith.constant 0 : index
    %c0_79 = arith.constant 0 : index
    %61 = vector.load %arg3[%c0_76, %c2_77, %c0_78, %c0_79] : memref<3x3x128x128xbf16, #tpu.memory_space<vmem>>, vector<1x1x128x128xbf16>
    %62 = vector.shape_cast %61 : vector<1x1x128x128xbf16> to vector<128x128xbf16>
    "tpu.trace_start"() <{level = 10 : i32, message = "hwc,co->hwo"}> : () -> ()
    %cst_80 = arith.constant dense<0.000000e+00> : vector<16x24x128xf32>
    %63 = tpu.matmul %60, %62, %cst_80 {dimension_numbers = #tpu.dot_dimension_numbers<[2], [0], [0, 1], [1], [0, 0, 0, 1, 1, 1], [], []>} : vector<16x24x128xbf16>, vector<128x128xbf16>, vector<16x24x128xf32> -> vector<16x24x128xf32>
    "tpu.trace_stop"() : () -> ()
    %c0_i32_81 = arith.constant 0 : i32
    %c0_i32_82 = arith.constant 0 : i32
    %c0_i32_83 = arith.constant 0 : i32
    %64 = tpu.memref_slice %arg7[%0, %c0_i32_81, %c0_i32_82, %c0_i32_83] : memref<2x18x24x128xbf16, #tpu.memory_space<vmem>> -> memref<1x18x24x128xbf16, #tpu.memory_space<vmem>>
    %65 = tpu.memref_squeeze %64 : memref<1x18x24x128xbf16, #tpu.memory_space<vmem>> -> memref<18x24x128xbf16, #tpu.memory_space<vmem>>
    %c1_84 = arith.constant 1 : index
    %c0_85 = arith.constant 0 : index
    %c0_86 = arith.constant 0 : index
    %66 = vector.load %65[%c1_84, %c0_85, %c0_86] : memref<18x24x128xbf16, #tpu.memory_space<vmem>>, vector<16x24x128xbf16>
    %c1_87 = arith.constant 1 : index
    %c2_88 = arith.constant 2 : index
    %c0_89 = arith.constant 0 : index
    %c0_90 = arith.constant 0 : index
    %67 = vector.load %arg3[%c1_87, %c2_88, %c0_89, %c0_90] : memref<3x3x128x128xbf16, #tpu.memory_space<vmem>>, vector<1x1x128x128xbf16>
    %68 = vector.shape_cast %67 : vector<1x1x128x128xbf16> to vector<128x128xbf16>
    "tpu.trace_start"() <{level = 10 : i32, message = "hwc,co->hwo"}> : () -> ()
    %cst_91 = arith.constant dense<0.000000e+00> : vector<16x24x128xf32>
    %69 = tpu.matmul %66, %68, %cst_91 {dimension_numbers = #tpu.dot_dimension_numbers<[2], [0], [0, 1], [1], [0, 0, 0, 1, 1, 1], [], []>} : vector<16x24x128xbf16>, vector<128x128xbf16>, vector<16x24x128xf32> -> vector<16x24x128xf32>
    "tpu.trace_stop"() : () -> ()
    %70 = arith.addf %63, %69 : vector<16x24x128xf32>
    %c0_i32_92 = arith.constant 0 : i32
    %c0_i32_93 = arith.constant 0 : i32
    %c0_i32_94 = arith.constant 0 : i32
    %71 = tpu.memref_slice %arg7[%0, %c0_i32_92, %c0_i32_93, %c0_i32_94] : memref<2x18x24x128xbf16, #tpu.memory_space<vmem>> -> memref<1x18x24x128xbf16, #tpu.memory_space<vmem>>
    %72 = tpu.memref_squeeze %71 : memref<1x18x24x128xbf16, #tpu.memory_space<vmem>> -> memref<18x24x128xbf16, #tpu.memory_space<vmem>>
    %c2_95 = arith.constant 2 : index
    %c0_96 = arith.constant 0 : index
    %c0_97 = arith.constant 0 : index
    %73 = vector.load %72[%c2_95, %c0_96, %c0_97] : memref<18x24x128xbf16, #tpu.memory_space<vmem>>, vector<16x24x128xbf16>
    %c2_98 = arith.constant 2 : index
    %c2_99 = arith.constant 2 : index
    %c0_100 = arith.constant 0 : index
    %c0_101 = arith.constant 0 : index
    %74 = vector.load %arg3[%c2_98, %c2_99, %c0_100, %c0_101] : memref<3x3x128x128xbf16, #tpu.memory_space<vmem>>, vector<1x1x128x128xbf16>
    %75 = vector.shape_cast %74 : vector<1x1x128x128xbf16> to vector<128x128xbf16>
    "tpu.trace_start"() <{level = 10 : i32, message = "hwc,co->hwo"}> : () -> ()
    %cst_102 = arith.constant dense<0.000000e+00> : vector<16x24x128xf32>
    %76 = tpu.matmul %73, %75, %cst_102 {dimension_numbers = #tpu.dot_dimension_numbers<[2], [0], [0, 1], [1], [0, 0, 0, 1, 1, 1], [], []>} : vector<16x24x128xbf16>, vector<128x128xbf16>, vector<16x24x128xf32> -> vector<16x24x128xf32>
    "tpu.trace_stop"() : () -> ()
    %77 = arith.addf %70, %76 : vector<16x24x128xf32>
    %78 = vector.extract_strided_slice %77 {offsets = [0, 2, 0], sizes = [16, 16, 128], strides = [1, 1, 1]} : vector<16x24x128xf32> to vector<16x16x128xf32>
    %79 = arith.addf %57, %78 : vector<16x16x128xf32>
    %c0_103 = arith.constant 0 : index
    %c0_104 = arith.constant 0 : index
    %80 = vector.load %arg4[%c0_103, %c0_104] : memref<1x128xf32, #tpu.memory_space<vmem>>, vector<1x128xf32>
    %81 = vector.shape_cast %80 : vector<1x128xf32> to vector<128xf32>
    %82 = vector.shape_cast %81 : vector<128xf32> to vector<1x1x128xf32>
    %83 = vector.broadcast %82 : vector<1x1x128xf32> to vector<16x16x128xf32>
    %84 = arith.addf %79, %83 : vector<16x16x128xf32>
    %85 = arith.truncf %84 : vector<16x16x128xf32> to vector<16x16x128xbf16>
    %c0_105 = arith.constant 0 : index
    %c0_106 = arith.constant 0 : index
    %c0_107 = arith.constant 0 : index
    %c0_108 = arith.constant 0 : index
    %86 = vector.load %arg5[%c0_105, %c0_106, %c0_107, %c0_108] : memref<1x16x16x128xbf16, #tpu.memory_space<vmem>>, vector<1x16x16x128xbf16>
    %87 = vector.shape_cast %86 : vector<1x16x16x128xbf16> to vector<16x16x128xbf16>
    %88 = vector.shape_cast %85 : vector<16x16x128xbf16> to vector<1x16x16x128xbf16>
    tpu.vector_store %arg5[%c0_105, %c0_106, %c0_107, %c0_108], %88 {strides = array<i32>} : memref<1x16x16x128xbf16, #tpu.memory_space<vmem>>, vector<1x16x16x128xbf16>,
    %cst_109 = arith.constant dense<0.000000e+00> : vector<128xf32>
    %89 = vector.multi_reduction <add>, %84, %cst_109 [0, 1] : vector<16x16x128xf32> to vector<128xf32>
    %90 = arith.mulf %84, %84 : vector<16x16x128xf32>
    %cst_110 = arith.constant dense<0.000000e+00> : vector<128xf32>
    %91 = vector.multi_reduction <add>, %90, %cst_110 [0, 1] : vector<16x16x128xf32> to vector<128xf32>
    %92 = vector.shape_cast %89 : vector<128xf32> to vector<1x128xf32>
    %93 = vector.shape_cast %91 : vector<128xf32> to vector<1x128xf32>
    %cst_111 = arith.constant 0.000000e+00 : f32
    %94 = vector.broadcast %cst_111 : f32 to vector<6x128xf32>
    %95 = tpu.concatenate %92, %93, %94 in 0 : vector<1x128xf32>, vector<1x128xf32>, vector<6x128xf32> -> vector<8x128xf32>
    %c0_112 = arith.constant 0 : index
    %c0_113 = arith.constant 0 : index
    %c0_114 = arith.constant 0 : index
    %c0_115 = arith.constant 0 : index
    %96 = vector.load %arg6[%c0_112, %c0_113, %c0_114, %c0_115] : memref<1x1x8x128xf32, #tpu.memory_space<vmem>>, vector<1x1x8x128xf32>
    %97 = vector.shape_cast %96 : vector<1x1x8x128xf32> to vector<8x128xf32>
    %98 = vector.shape_cast %95 : vector<8x128xf32> to vector<1x1x8x128xf32>
    tpu.vector_store %arg6[%c0_112, %c0_113, %c0_114, %c0_115], %98 {strides = array<i32>} : memref<1x1x8x128xf32, #tpu.memory_space<vmem>>, vector<1x1x8x128xf32>,
    return
  }
  func.func @transform_1(%arg0: i32, %arg1: i32) -> (i32, i32, i32, i32) {
    %c0_i32 = arith.constant 0 : i32
    %c0_i32_0 = arith.constant 0 : i32
    %c0_i32_1 = arith.constant 0 : i32
    %c0_i32_2 = arith.constant 0 : i32
    %c0_i32_3 = arith.constant 0 : i32
    return %c0_i32, %c0_i32_0, %c0_i32_1, %c0_i32_2 : i32, i32, i32, i32
  }
  func.func @transform_2(%arg0: i32, %arg1: i32) -> (i32, i32) {
    %c0_i32 = arith.constant 0 : i32
    %c0_i32_0 = arith.constant 0 : i32
    %c0_i32_1 = arith.constant 0 : i32
    return %c0_i32, %c0_i32_0 : i32, i32
  }
  func.func @transform_3(%arg0: i32, %arg1: i32) -> (i32, i32, i32, i32) {
    %c0_i32 = arith.constant 0 : i32
    %c0_i32_0 = arith.constant 0 : i32
    %c0_i32_1 = arith.constant 0 : i32
    return %arg0, %arg1, %c0_i32, %c0_i32_0 : i32, i32, i32, i32
  }
  func.func @transform_4(%arg0: i32, %arg1: i32) -> (i32, i32, i32, i32) {
    %c0_i32 = arith.constant 0 : i32
    %c0_i32_0 = arith.constant 0 : i32
    %c0_i32_1 = arith.constant 0 : i32
    return %arg0, %arg1, %c0_i32, %c0_i32_0 : i32, i32, i32, i32
  }
}

module attributes {stable_mosaic.version = 11 : i64} {
  func.func @bn_relu_kernel(%arg0: i32, %arg1: memref<512x128xbf16, #tpu.memory_space<vmem>>, %arg2: memref<1x128xf32, #tpu.memory_space<vmem>>, %arg3: memref<1x128xf32, #tpu.memory_space<vmem>>, %arg4: memref<512x128xf32, #tpu.memory_space<vmem>>) attributes {dimension_semantics = [#tpu.dimension_semantics<parallel>], iteration_bounds = array<i64: 1>, scalar_prefetch = 0 : i64, scratch_operands = 0 : i64, tpu.core_type = #tpu.core_type<tc>, window_params = [{transform_indices = @transform_0, window_bounds = array<i64: 512, 128>}, {pipeline_mode = #tpu.pipeline_mode<synchronous>, transform_indices = @transform_1, window_bounds = array<i64: 1, 128>}, {pipeline_mode = #tpu.pipeline_mode<synchronous>, transform_indices = @transform_2, window_bounds = array<i64: 1, 128>}, {transform_indices = @transform_3, window_bounds = array<i64: 512, 128>}]} {
    %c0 = arith.constant 0 : index
    %c0_0 = arith.constant 0 : index
    %0 = vector.load %arg1[%c0, %c0_0] : memref<512x128xbf16, #tpu.memory_space<vmem>>, vector<512x128xbf16>
    %1 = arith.extf %0 : vector<512x128xbf16> to vector<512x128xf32>
    %c0_1 = arith.constant 0 : index
    %c0_2 = arith.constant 0 : index
    %2 = vector.load %arg2[%c0_1, %c0_2] : memref<1x128xf32, #tpu.memory_space<vmem>>, vector<1x128xf32>
    %3 = vector.broadcast %2 : vector<1x128xf32> to vector<512x128xf32>
    %4 = arith.mulf %1, %3 : vector<512x128xf32>
    %c0_3 = arith.constant 0 : index
    %c0_4 = arith.constant 0 : index
    %5 = vector.load %arg3[%c0_3, %c0_4] : memref<1x128xf32, #tpu.memory_space<vmem>>, vector<1x128xf32>
    %6 = vector.broadcast %5 : vector<1x128xf32> to vector<512x128xf32>
    %7 = arith.addf %4, %6 : vector<512x128xf32>
    %cst = arith.constant 0.000000e+00 : f32
    %8 = vector.broadcast %cst : f32 to vector<512x128xf32>
    %9 = arith.maximumf %7, %8 : vector<512x128xf32>
    %c0_5 = arith.constant 0 : index
    %c0_6 = arith.constant 0 : index
    %10 = vector.load %arg4[%c0_5, %c0_6] : memref<512x128xf32, #tpu.memory_space<vmem>>, vector<512x128xf32>
    tpu.vector_store %arg4[%c0_5, %c0_6], %9 {strides = array<i32>} : memref<512x128xf32, #tpu.memory_space<vmem>>, vector<512x128xf32>,
    return
  }
  func.func @transform_0(%arg0: i32) -> (i32, i32) {
    %c0_i32 = arith.constant 0 : i32
    %c0_i32_0 = arith.constant 0 : i32
    return %arg0, %c0_i32 : i32, i32
  }
  func.func @transform_1(%arg0: i32) -> (i32, i32) {
    %c0_i32 = arith.constant 0 : i32
    %c0_i32_0 = arith.constant 0 : i32
    %c0_i32_1 = arith.constant 0 : i32
    return %c0_i32, %c0_i32_0 : i32, i32
  }
  func.func @transform_2(%arg0: i32) -> (i32, i32) {
    %c0_i32 = arith.constant 0 : i32
    %c0_i32_0 = arith.constant 0 : i32
    %c0_i32_1 = arith.constant 0 : i32
    return %c0_i32, %c0_i32_0 : i32, i32
  }
  func.func @transform_3(%arg0: i32) -> (i32, i32) {
    %c0_i32 = arith.constant 0 : i32
    %c0_i32_0 = arith.constant 0 : i32
    return %arg0, %c0_i32 : i32, i32
  }
}

</mosaic_0001>

<llo_original>
// kernel: conv_bn_relu.3
$region0: #{conv_bn_relu.3}
  #allocation0 [shape = 'u32[]', space=smem, size = 0x4, offset = 0x4, fixed_abs, tag = 'smem constant byte address 0x4 - core index']
  #allocation1 [shape = 'u32[144,128]{1,0:T(1,128)}', space=vmem, size = 0x12000, scoped, tag = 'internal scratch']
  %s0 = inlined_call_operand.vmem [shape: bf16[512,128], index: 0, kind: input, shape index: {}]
  %s1 = inlined_call_operand.vmem [shape: f32[1,128], index: 1, kind: input, shape index: {}]
  %s2 = inlined_call_operand.vmem [shape: f32[1,128], index: 2, kind: input, shape index: {}]
  %s3 = inlined_call_operand.vmem [shape: f32[512,128], index: 3, kind: output, shape index: {}]
  %s4 = sld [smem:[#allocation0]]
  $region22: #{conv_bn_relu.3} parent=0
    _
  %s6 = ssub.s32 1, %s4
  %s7 = scalar_select 0, %s6, %s4
  // Predicated region
  $region2: #{conv_bn_relu.3} parent=0 // pred_check
    _
  $region3: #{conv_bn_relu.3} parent=0 // pred_check_branch
    %9 = sbr.rel (0) target = $region5
  $region4: #{conv_bn_relu.3} parent=0 // pred_region
    _
  $region5: #{conv_bn_relu.3} parent=0 // pred_fallthru
    _
  // Predicated region
  $region6: #{conv_bn_relu.3} parent=0 // pred_check
    _
  $region7: #{conv_bn_relu.3} parent=0 // pred_check_branch
    %11 = sbr.rel (0) target = $region9
  $region8: #{conv_bn_relu.3} parent=0 // pred_region
    _
  $region9: #{conv_bn_relu.3} parent=0 // pred_fallthru
    _
  // Predicated region
  $region10: #{conv_bn_relu.3} parent=0 // pred_check
    _
  $region11: #{conv_bn_relu.3} parent=0 // pred_check_branch
    %13 = sbr.rel (0) target = $region13
  $region12: #{conv_bn_relu.3} parent=0 // pred_region
    _
  $region13: #{conv_bn_relu.3} parent=0 // pred_fallthru
    _
  %v14 = vld [vmem:[%s0] sm:$0xf]
  %v15 = vld [vmem:[%s0 + $0x4] sm:$0xf]
  %v16 = vld [vmem:[%s0 + $0x8] sm:$0xf]
  %v17 = vld [vmem:[%s0 + $0xc] sm:$0xf]
  %v18 = vld [vmem:[%s0 + $0x10] sm:$0xf]
  %v19 = vld [vmem:[%s0 + $0x14] sm:$0xf]
  %v20 = vld [vmem:[%s0 + $0x18] sm:$0xf]
  %v21 = vld [vmem:[%s0 + $0x1c] sm:$0xf]
  %v22 = vld [vmem:[%s0 + $0x20] sm:$0xf]
  %v23 = vld [vmem:[%s0 + $0x24] sm:$0xf]
  %v24 = vld [vmem:[%s0 + $0x28] sm:$0xf]
  %v25 = vld [vmem:[%s0 + $0x2c] sm:$0xf]
  %v26 = vld [vmem:[%s0 + $0x30] sm:$0xf]
  %v27 = vld [vmem:[%s0 + $0x34] sm:$0xf]
  %v28 = vld [vmem:[%s0 + $0x38] sm:$0xf]
  %v29 = vld [vmem:[%s0 + $0x3c] sm:$0xf]
  %v30 = vld [vmem:[%s0 + $0x40] sm:$0xf]
  %v31 = vld [vmem:[%s0 + $0x44] sm:$0xf]
  %v32 = vld [vmem:[%s0 + $0x48] sm:$0xf]
  %v33 = vld [vmem:[%s0 + $0x4c] sm:$0xf]
  %v34 = vld [vmem:[%s0 + $0x50] sm:$0xf]
  %v35 = vld [vmem:[%s0 + $0x54] sm:$0xf]
  %v36 = vld [vmem:[%s0 + $0x58] sm:$0xf]
  %v37 = vld [vmem:[%s0 + $0x5c] sm:$0xf]
  %v38 = vld [vmem:[%s0 + $0x60] sm:$0xf]
  %v39 = vld [vmem:[%s0 + $0x64] sm:$0xf]
  %v40 = vld [vmem:[%s0 + $0x68] sm:$0xf]
  %v41 = vld [vmem:[%s0 + $0x6c] sm:$0xf]
  %v42 = vld [vmem:[%s0 + $0x70] sm:$0xf]
  %v43 = vld [vmem:[%s0 + $0x74] sm:$0xf]
  %v44 = vld [vmem:[%s0 + $0x78] sm:$0xf]
  %v45 = vld [vmem:[%s0 + $0x7c] sm:$0xf]
  %v46 = vld [vmem:[%s0 + $0x80] sm:$0xf]
  %v47 = vld [vmem:[%s0 + $0x84] sm:$0xf]
  %v48 = vld [vmem:[%s0 + $0x88] sm:$0xf]
  %v49 = vld [vmem:[%s0 + $0x8c] sm:$0xf]
  %v50 = vld [vmem:[%s0 + $0x90] sm:$0xf]
  %v51 = vld [vmem:[%s0 + $0x94] sm:$0xf]
  %v52 = vld [vmem:[%s0 + $0x98] sm:$0xf]
  %v53 = vld [vmem:[%s0 + $0x9c] sm:$0xf]
  %v54 = vld [vmem:[%s0 + $0xa0] sm:$0xf]
  %v55 = vld [vmem:[%s0 + $0xa4] sm:$0xf]
  %v56 = vld [vmem:[%s0 + $0xa8] sm:$0xf]
  %v57 = vld [vmem:[%s0 + $0xac] sm:$0xf]
  %v58 = vld [vmem:[%s0 + $0xb0] sm:$0xf]
  %v59 = vld [vmem:[%s0 + $0xb4] sm:$0xf]
  %v60 = vld [vmem:[%s0 + $0xb8] sm:$0xf]
  %v61 = vld [vmem:[%s0 + $0xbc] sm:$0xf]
  %v62 = vld [vmem:[%s0 + $0xc0] sm:$0xf]
  %v63 = vld [vmem:[%s0 + $0xc4] sm:$0xf]
  %v64 = vld [vmem:[%s0 + $0xc8] sm:$0xf]
  %v65 = vld [vmem:[%s0 + $0xcc] sm:$0xf]
  %v66 = vld [vmem:[%s0 + $0xd0] sm:$0xf]
  %v67 = vld [vmem:[%s0 + $0xd4] sm:$0xf]
  %v68 = vld [vmem:[%s0 + $0xd8] sm:$0xf]
  %v69 = vld [vmem:[%s0 + $0xdc] sm:$0xf]
  %v70 = vld [vmem:[%s0 + $0xe0] sm:$0xf]
  %v71 = vld [vmem:[%s0 + $0xe4] sm:$0xf]
  %v72 = vld [vmem:[%s0 + $0xe8] sm:$0xf]
  %v73 = vld [vmem:[%s0 + $0xec] sm:$0xf]
  %v74 = vld [vmem:[%s0 + $0xf0] sm:$0xf]
  %v75 = vld [vmem:[%s0 + $0xf4] sm:$0xf]
  %v76 = vld [vmem:[%s0 + $0xf8] sm:$0xf]
  %v77 = vld [vmem:[%s0 + $0xfc] sm:$0xf]
  %v78 = vunpack.c.l.bf16 %v14
  %v79 = vunpack.c.l.bf16 %v15
  %v80 = vunpack.c.l.bf16 %v16
  %v81 = vunpack.c.l.bf16 %v17
  %v82 = vunpack.c.l.bf16 %v18
  %v83 = vunpack.c.l.bf16 %v19
  %v84 = vunpack.c.l.bf16 %v20
  %v85 = vunpack.c.l.bf16 %v21
  %v86 = vunpack.c.l.bf16 %v22
  %v87 = vunpack.c.l.bf16 %v23
  %v88 = vunpack.c.l.bf16 %v24
  %v89 = vunpack.c.l.bf16 %v25
  %v90 = vunpack.c.l.bf16 %v26
  %v91 = vunpack.c.l.bf16 %v27
  %v92 = vunpack.c.l.bf16 %v28
  %v93 = vunpack.c.l.bf16 %v29
  %v94 = vunpack.c.l.bf16 %v30
  %v95 = vunpack.c.l.bf16 %v31
  %v96 = vunpack.c.l.bf16 %v32
  %v97 = vunpack.c.l.bf16 %v33
  %v98 = vunpack.c.l.bf16 %v34
  %v99 = vunpack.c.l.bf16 %v35
  %v100 = vunpack.c.l.bf16 %v36
  %v101 = vunpack.c.l.bf16 %v37
  %v102 = vunpack.c.l.bf16 %v38
  %v103 = vunpack.c.l.bf16 %v39
  %v104 = vunpack.c.l.bf16 %v40
  %v105 = vunpack.c.l.bf16 %v41
  %v106 = vunpack.c.l.bf16 %v42
  %v107 = vunpack.c.l.bf16 %v43
  %v108 = vunpack.c.l.bf16 %v44
  %v109 = vunpack.c.l.bf16 %v45
  %v110 = vunpack.c.l.bf16 %v46
  %v111 = vunpack.c.l.bf16 %v47
  %v112 = vunpack.c.l.bf16 %v48
  %v113 = vunpack.c.l.bf16 %v49
  %v114 = vunpack.c.l.bf16 %v50
  %v115 = vunpack.c.l.bf16 %v51
  %v116 = vunpack.c.l.bf16 %v52
  %v117 = vunpack.c.l.bf16 %v53
  %v118 = vunpack.c.l.bf16 %v54
  %v119 = vunpack.c.l.bf16 %v55
  %v120 = vunpack.c.l.bf16 %v56
  %v121 = vunpack.c.l.bf16 %v57
  %v122 = vunpack.c.l.bf16 %v58
  %v123 = vunpack.c.l.bf16 %v59
  %v124 = vunpack.c.l.bf16 %v60
  %v125 = vunpack.c.l.bf16 %v61
  %v126 = vunpack.c.l.bf16 %v62
  %v127 = vunpack.c.l.bf16 %v63
  %v128 = vunpack.c.l.bf16 %v64
  %v129 = vunpack.c.l.bf16 %v65
  %v130 = vunpack.c.l.bf16 %v66
  %v131 = vunpack.c.l.bf16 %v67
  %v132 = vunpack.c.l.bf16 %v68
  %v133 = vunpack.c.l.bf16 %v69
  %v134 = vunpack.c.l.bf16 %v70
  %v135 = vunpack.c.l.bf16 %v71
  %v136 = vunpack.c.l.bf16 %v72
  %v137 = vunpack.c.l.bf16 %v73
  %v138 = vunpack.c.l.bf16 %v74
  %v139 = vunpack.c.l.bf16 %v75
  %v140 = vunpack.c.l.bf16 %v76
  %v141 = vunpack.c.l.bf16 %v77
  %v142 = vld [vmem:[%s1] sm:$0x1]
  %v144 = vlaneseq
  %v145 = vshrl.u32 %v144, 7
  %v146 = vsub.s32 0, %v145
  %v147 = vrot.slane %v142, %v146
  %v149 = vmul.f32 %v78, %v147
  %v150 = vmul.f32 %v79, %v147
  %v151 = vmul.f32 %v80, %v147
  %v152 = vmul.f32 %v81, %v147
  %v153 = vmul.f32 %v82, %v147
  %v154 = vmul.f32 %v83, %v147
  %v155 = vmul.f32 %v84, %v147
  %v156 = vmul.f32 %v85, %v147
  %v157 = vmul.f32 %v86, %v147
  %v158 = vmul.f32 %v87, %v147
  %v159 = vmul.f32 %v88, %v147
  %v160 = vmul.f32 %v89, %v147
  %v161 = vmul.f32 %v90, %v147
  %v162 = vmul.f32 %v91, %v147
  %v163 = vmul.f32 %v92, %v147
  %v164 = vmul.f32 %v93, %v147
  %v165 = vmul.f32 %v94, %v147
  %v166 = vmul.f32 %v95, %v147
  %v167 = vmul.f32 %v96, %v147
  %v168 = vmul.f32 %v97, %v147
  %v169 = vmul.f32 %v98, %v147
  %v170 = vmul.f32 %v99, %v147
  %v171 = vmul.f32 %v100, %v147
  %v172 = vmul.f32 %v101, %v147
  %v173 = vmul.f32 %v102, %v147
  %v174 = vmul.f32 %v103, %v147
  %v175 = vmul.f32 %v104, %v147
  %v176 = vmul.f32 %v105, %v147
  %v177 = vmul.f32 %v106, %v147
  %v178 = vmul.f32 %v107, %v147
  %v179 = vmul.f32 %v108, %v147
  %v180 = vmul.f32 %v109, %v147
  %v181 = vmul.f32 %v110, %v147
  %v182 = vmul.f32 %v111, %v147
  %v183 = vmul.f32 %v112, %v147
  %v184 = vmul.f32 %v113, %v147
  %v185 = vmul.f32 %v114, %v147
  %v186 = vmul.f32 %v115, %v147
  %v187 = vmul.f32 %v116, %v147
  %v188 = vmul.f32 %v117, %v147
  %v189 = vmul.f32 %v118, %v147
  %v190 = vmul.f32 %v119, %v147
  %v191 = vmul.f32 %v120, %v147
  %v192 = vmul.f32 %v121, %v147
  %v193 = vmul.f32 %v122, %v147
  %v194 = vmul.f32 %v123, %v147
  %v195 = vmul.f32 %v124, %v147
  %v196 = vmul.f32 %v125, %v147
  %v197 = vmul.f32 %v126, %v147
  %v198 = vmul.f32 %v127, %v147
  %v199 = vmul.f32 %v128, %v147
  %v200 = vmul.f32 %v129, %v147
  %v201 = vmul.f32 %v130, %v147
  %v202 = vmul.f32 %v131, %v147
  %v203 = vmul.f32 %v132, %v147
  %v204 = vmul.f32 %v133, %v147
  %v205 = vmul.f32 %v134, %v147
  %v206 = vmul.f32 %v135, %v147
  %v207 = vmul.f32 %v136, %v147
  %v208 = vmul.f32 %v137, %v147
  %v209 = vmul.f32 %v138, %v147
  %v210 = vmul.f32 %v139, %v147
  %v211 = vmul.f32 %v140, %v147
  %v212 = vmul.f32 %v141, %v147
  %v213 = vld [vmem:[%s2] sm:$0x1]
  %v215 = vlaneseq
  %v216 = vshrl.u32 %v215, 7
  %v217 = vsub.s32 0, %v216
  %v218 = vrot.slane %v213, %v217
  %v220 = vadd.f32 %v149, %v218
  %v221 = vadd.f32 %v150, %v218
  %v222 = vadd.f32 %v151, %v218
  %v223 = vadd.f32 %v152, %v218
  %v224 = vadd.f32 %v153, %v218
  %v225 = vadd.f32 %v154, %v218
  %v226 = vadd.f32 %v155, %v218
  %v227 = vadd.f32 %v156, %v218
  %v228 = vadd.f32 %v157, %v218
  %v229 = vadd.f32 %v158, %v218
  %v230 = vadd.f32 %v159, %v218
  %v231 = vadd.f32 %v160, %v218
  %v232 = vadd.f32 %v161, %v218
  %v233 = vadd.f32 %v162, %v218
  %v234 = vadd.f32 %v163, %v218
  %v235 = vadd.f32 %v164, %v218
  %v236 = vadd.f32 %v165, %v218
  %v237 = vadd.f32 %v166, %v218
  %v238 = vadd.f32 %v167, %v218
  %v239 = vadd.f32 %v168, %v218
  %v240 = vadd.f32 %v169, %v218
  %v241 = vadd.f32 %v170, %v218
  %v242 = vadd.f32 %v171, %v218
  %v243 = vadd.f32 %v172, %v218
  %v244 = vadd.f32 %v173, %v218
  %v245 = vadd.f32 %v174, %v218
  %v246 = vadd.f32 %v175, %v218
  %v247 = vadd.f32 %v176, %v218
  %v248 = vadd.f32 %v177, %v218
  %v249 = vadd.f32 %v178, %v218
  %v250 = vadd.f32 %v179, %v218
  %v251 = vadd.f32 %v180, %v218
  %v252 = vadd.f32 %v181, %v218
  %v253 = vadd.f32 %v182, %v218
  %v254 = vadd.f32 %v183, %v218
  %v255 = vadd.f32 %v184, %v218
  %v256 = vadd.f32 %v185, %v218
  %v257 = vadd.f32 %v186, %v218
  %v258 = vadd.f32 %v187, %v218
  %v259 = vadd.f32 %v188, %v218
  %v260 = vadd.f32 %v189, %v218
  %v261 = vadd.f32 %v190, %v218
  %v262 = vadd.f32 %v191, %v218
  %v263 = vadd.f32 %v192, %v218
  %v264 = vadd.f32 %v193, %v218
  %v265 = vadd.f32 %v194, %v218
  %v266 = vadd.f32 %v195, %v218
  %v267 = vadd.f32 %v196, %v218
  %v268 = vadd.f32 %v197, %v218
  %v269 = vadd.f32 %v198, %v218
  %v270 = vadd.f32 %v199, %v218
  %v271 = vadd.f32 %v200, %v218
  %v272 = vadd.f32 %v201, %v218
  %v273 = vadd.f32 %v202, %v218
  %v274 = vadd.f32 %v203, %v218
  %v275 = vadd.f32 %v204, %v218
  %v276 = vadd.f32 %v205, %v218
  %v277 = vadd.f32 %v206, %v218
  %v278 = vadd.f32 %v207, %v218
  %v279 = vadd.f32 %v208, %v218
  %v280 = vadd.f32 %v209, %v218
  %v281 = vadd.f32 %v210, %v218
  %v282 = vadd.f32 %v211, %v218
  %v283 = vadd.f32 %v212, %v218
  %v284 = vmax.f32 %v220, 0.0
  %v285 = vmax.f32 %v221, 0.0
  %v286 = vmax.f32 %v222, 0.0
  %v287 = vmax.f32 %v223, 0.0
  %v288 = vmax.f32 %v224, 0.0
  %v289 = vmax.f32 %v225, 0.0
  %v290 = vmax.f32 %v226, 0.0
  %v291 = vmax.f32 %v227, 0.0
  %v292 = vmax.f32 %v228, 0.0
  %v293 = vmax.f32 %v229, 0.0
  %v294 = vmax.f32 %v230, 0.0
  %v295 = vmax.f32 %v231, 0.0
  %v296 = vmax.f32 %v232, 0.0
  %v297 = vmax.f32 %v233, 0.0
  %v298 = vmax.f32 %v234, 0.0
  %v299 = vmax.f32 %v235, 0.0
  %v300 = vmax.f32 %v236, 0.0
  %v301 = vmax.f32 %v237, 0.0
  %v302 = vmax.f32 %v238, 0.0
  %v303 = vmax.f32 %v239, 0.0
  %v304 = vmax.f32 %v240, 0.0
  %v305 = vmax.f32 %v241, 0.0
  %v306 = vmax.f32 %v242, 0.0
  %v307 = vmax.f32 %v243, 0.0
  %v308 = vmax.f32 %v244, 0.0
  %v309 = vmax.f32 %v245, 0.0
  %v310 = vmax.f32 %v246, 0.0
  %v311 = vmax.f32 %v247, 0.0
  %v312 = vmax.f32 %v248, 0.0
  %v313 = vmax.f32 %v249, 0.0
  %v314 = vmax.f32 %v250, 0.0
  %v315 = vmax.f32 %v251, 0.0
  %v316 = vmax.f32 %v252, 0.0
  %v317 = vmax.f32 %v253, 0.0
  %v318 = vmax.f32 %v254, 0.0
  %v319 = vmax.f32 %v255, 0.0
  %v320 = vmax.f32 %v256, 0.0
  %v321 = vmax.f32 %v257, 0.0
  %v322 = vmax.f32 %v258, 0.0
  %v323 = vmax.f32 %v259, 0.0
  %v324 = vmax.f32 %v260, 0.0
  %v325 = vmax.f32 %v261, 0.0
  %v326 = vmax.f32 %v262, 0.0
  %v327 = vmax.f32 %v263, 0.0
  %v328 = vmax.f32 %v264, 0.0
  %v329 = vmax.f32 %v265, 0.0
  %v330 = vmax.f32 %v266, 0.0
  %v331 = vmax.f32 %v267, 0.0
  %v332 = vmax.f32 %v268, 0.0
  %v333 = vmax.f32 %v269, 0.0
  %v334 = vmax.f32 %v270, 0.0
  %v335 = vmax.f32 %v271, 0.0
  %v336 = vmax.f32 %v272, 0.0
  %v337 = vmax.f32 %v273, 0.0
  %v338 = vmax.f32 %v274, 0.0
  %v339 = vmax.f32 %v275, 0.0
  %v340 = vmax.f32 %v276, 0.0
  %v341 = vmax.f32 %v277, 0.0
  %v342 = vmax.f32 %v278, 0.0
  %v343 = vmax.f32 %v279, 0.0
  %v344 = vmax.f32 %v280, 0.0
  %v345 = vmax.f32 %v281, 0.0
  %v346 = vmax.f32 %v282, 0.0
  %v347 = vmax.f32 %v283, 0.0
  %348 = vst [vmem:[%s3] sm:$0xff] %v284
  %349 = vst [vmem:[%s3 + $0x8] sm:$0xff] %v285
  %350 = vst [vmem:[%s3 + $0x10] sm:$0xff] %v286
  %351 = vst [vmem:[%s3 + $0x18] sm:$0xff] %v287
  %352 = vst [vmem:[%s3 + $0x20] sm:$0xff] %v288
  %353 = vst [vmem:[%s3 + $0x28] sm:$0xff] %v289
  %354 = vst [vmem:[%s3 + $0x30] sm:$0xff] %v290
  %355 = vst [vmem:[%s3 + $0x38] sm:$0xff] %v291
  %356 = vst [vmem:[%s3 + $0x40] sm:$0xff] %v292
  %357 = vst [vmem:[%s3 + $0x48] sm:$0xff] %v293
  %358 = vst [vmem:[%s3 + $0x50] sm:$0xff] %v294
  %359 = vst [vmem:[%s3 + $0x58] sm:$0xff] %v295
  %360 = vst [vmem:[%s3 + $0x60] sm:$0xff] %v296
  %361 = vst [vmem:[%s3 + $0x68] sm:$0xff] %v297
  %362 = vst [vmem:[%s3 + $0x70] sm:$0xff] %v298
  %363 = vst [vmem:[%s3 + $0x78] sm:$0xff] %v299
  %364 = vst [vmem:[%s3 + $0x80] sm:$0xff] %v300
  %365 = vst [vmem:[%s3 + $0x88] sm:$0xff] %v301
  %366 = vst [vmem:[%s3 + $0x90] sm:$0xff] %v302
  %367 = vst [vmem:[%s3 + $0x98] sm:$0xff] %v303
  %368 = vst [vmem:[%s3 + $0xa0] sm:$0xff] %v304
  %369 = vst [vmem:[%s3 + $0xa8] sm:$0xff] %v305
  %370 = vst [vmem:[%s3 + $0xb0] sm:$0xff] %v306
  %371 = vst [vmem:[%s3 + $0xb8] sm:$0xff] %v307
  %372 = vst [vmem:[%s3 + $0xc0] sm:$0xff] %v308
  %373 = vst [vmem:[%s3 + $0xc8] sm:$0xff] %v309
  %374 = vst [vmem:[%s3 + $0xd0] sm:$0xff] %v310
  %375 = vst [vmem:[%s3 + $0xd8] sm:$0xff] %v311
  %376 = vst [vmem:[%s3 + $0xe0] sm:$0xff] %v312
  %377 = vst [vmem:[%s3 + $0xe8] sm:$0xff] %v313
  %378 = vst [vmem:[%s3 + $0xf0] sm:$0xff] %v314
  %379 = vst [vmem:[%s3 + $0xf8] sm:$0xff] %v315
  %380 = vst [vmem:[%s3 + $0x100] sm:$0xff] %v316
  %381 = vst [vmem:[%s3 + $0x108] sm:$0xff] %v317
  %382 = vst [vmem:[%s3 + $0x110] sm:$0xff] %v318
  %383 = vst [vmem:[%s3 + $0x118] sm:$0xff] %v319
  %384 = vst [vmem:[%s3 + $0x120] sm:$0xff] %v320
  %385 = vst [vmem:[%s3 + $0x128] sm:$0xff] %v321
  %386 = vst [vmem:[%s3 + $0x130] sm:$0xff] %v322
  %387 = vst [vmem:[%s3 + $0x138] sm:$0xff] %v323
  %388 = vst [vmem:[%s3 + $0x140] sm:$0xff] %v324
  %389 = vst [vmem:[%s3 + $0x148] sm:$0xff] %v325
  %390 = vst [vmem:[%s3 + $0x150] sm:$0xff] %v326
  %391 = vst [vmem:[%s3 + $0x158] sm:$0xff] %v327
  %392 = vst [vmem:[%s3 + $0x160] sm:$0xff] %v328
  %393 = vst [vmem:[%s3 + $0x168] sm:$0xff] %v329
  %394 = vst [vmem:[%s3 + $0x170] sm:$0xff] %v330
  %395 = vst [vmem:[%s3 + $0x178] sm:$0xff] %v331
  %396 = vst [vmem:[%s3 + $0x180] sm:$0xff] %v332
  %397 = vst [vmem:[%s3 + $0x188] sm:$0xff] %v333
  %398 = vst [vmem:[%s3 + $0x190] sm:$0xff] %v334
  %399 = vst [vmem:[%s3 + $0x198] sm:$0xff] %v335
  %400 = vst [vmem:[%s3 + $0x1a0] sm:$0xff] %v336
  %401 = vst [vmem:[%s3 + $0x1a8] sm:$0xff] %v337
  %402 = vst [vmem:[%s3 + $0x1b0] sm:$0xff] %v338
  %403 = vst [vmem:[%s3 + $0x1b8] sm:$0xff] %v339
  %404 = vst [vmem:[%s3 + $0x1c0] sm:$0xff] %v340
  %405 = vst [vmem:[%s3 + $0x1c8] sm:$0xff] %v341
  %406 = vst [vmem:[%s3 + $0x1d0] sm:$0xff] %v342
  %407 = vst [vmem:[%s3 + $0x1d8] sm:$0xff] %v343
  %408 = vst [vmem:[%s3 + $0x1e0] sm:$0xff] %v344
  %409 = vst [vmem:[%s3 + $0x1e8] sm:$0xff] %v345
  %410 = vst [vmem:[%s3 + $0x1f0] sm:$0xff] %v346
  %411 = vst [vmem:[%s3 + $0x1f8] sm:$0xff] %v347
  // Predicated region
  $region14: #{conv_bn_relu.3} parent=0 // pred_check
    _
  $region15: #{conv_bn_relu.3} parent=0 // pred_check_branch
    %413 = sbr.rel (0) target = $region17
  $region16: #{conv_bn_relu.3} parent=0 // pred_region
    _
  $region17: #{conv_bn_relu.3} parent=0 // pred_fallthru
    _
  // Predicated region
  $region18: #{conv_bn_relu.3} parent=0 // pred_check
    _
  $region19: #{conv_bn_relu.3} parent=0 // pred_check_branch
    %415 = sbr.rel (0) target = $region21
  $region20: #{conv_bn_relu.3} parent=0 // pred_region
    _
  $region21: #{conv_bn_relu.3} parent=0 // pred_fallthru
    _

// kernel: conv_bn_relu.2
$region0: #{conv_bn_relu.2}
  #allocation0 [shape = 'u32[]', space=smem, size = 0x4, offset = 0x4, fixed_abs, tag = 'smem constant byte address 0x4 - core index']
  #allocation1 [shape = 'u32[144,128]{1,0:T(1,128)}', space=vmem, size = 0x12000, scoped, tag = 'internal scratch']
  #allocation2 [shape = 'bf16[2,18,24,128]{3,2,1,0:T(8,128)(2,1)}', space=vmem, size = 0x36000, scoped, tag = 'scratch operand']
  #allocation3 [shape = 's32[2]{0}', space=sflag, size = 0x8, scoped, tag = 'scratch operand']
  #allocation4 [shape = 's32[]', space=sflag, size = 0x4, offset = 0, fixed_abs, tag = 'sflag constant byte address 0x0 - dummy sync flag']
  #allocation5 [shape = 's32[]', space=sflag, size = 0x4, offset = 0, fixed_abs, tag = 'sflag constant byte address 0x0 - dummy sync flag']
  %s0 = inlined_call_operand.vmem [shape: bf16[2,18,24,128], index: 0, kind: input, shape index: {}]
  %s1 = inlined_call_operand.vmem [shape: bf16[3,3,128,128], index: 1, kind: input, shape index: {}]
  %s2 = inlined_call_operand.vmem [shape: f32[1,128], index: 2, kind: input, shape index: {}]
  %s3 = inlined_call_operand.vmem [shape: bf16[2,16,16,128], index: 3, kind: output, shape index: {0}]
  %s4 = inlined_call_operand.vmem [shape: f32[2,1,8,128], index: 4, kind: output, shape index: {1}]
  %5 = xla_tuple %s3, %s4
  %s6 = sld [smem:[#allocation0]]
  $region125: #{conv_bn_relu.2} parent=0
    _
  %s8 = ssub.s32 1, %s6
  %s9 = scalar_select 0, %s8, %s6
  loop: start=0, step=1, limit=4
  $region2: #{conv_bn_relu.2} parent=0 // loop_pre_header
    _
  $region3: #{conv_bn_relu.2} parent=0 // loop_header
    %s11 = sphi 0, %s15
    %p12 = scmp.ge.s32.totalorder %s11, 4
    %s18 = sphi 0, %s30
    %s19 = sphi 0, %s26
    %s20 = sphi 0, %s18
    %s21 = sphi 0, %s19
    %s22 = sphi 0, %s20
    %s23 = sphi 0, %s21
    %s31 = sphi 0, %s31
    %s33 = sphi 0, %s31
    %s34 = sphi 0, %s33
    %s48 = sphi 0, %s34
    %s52 = sphi 0, %s52
    %s54 = sphi 0, %s52
    %s55 = sphi 0, %s54
    %s69 = sphi 0, %s55
    %s77 = sphi 0, %s79
    %s80 = sphi 0, %s77
    %s81 = sphi 0, %s80
    %s97 = sphi 0, %s81
    %s105 = sphi 0, %s107
    %s108 = sphi 0, %s105
    %s109 = sphi 0, %s108
    %s125 = sphi 0, %s109
  $region4: #{conv_bn_relu.2} parent=0 // loop_header_branch
    %14 = sbr.rel (%p12) target = $region8
  $region5: #{conv_bn_relu.2} parent=0 // loop_body
    %s16 = ssub.s32 %s11, 1
    %s17 = ssub.s32 %s11, 2
    %s24 = sadd.s32 1, %s19
    %p25 = scmp.ge.s32.totalorder %s24, 1
    %s26 = scalar_select %p25, 0, %s24
    %s27 = sadd.s32 1, %s18
    %s28 = scalar_select %p25, %s27, %s18
    %p29 = scmp.ge.s32.totalorder %s28, 2
    %s30 = scalar_select %p29, 0, %s28
    %s32 = sadd.s32 %s31, 1
    %p35 = scmp.eq.s32.totalorder %s11, 1
    %p36 = scmp.ne.s32.totalorder %s31, %s33
    %p37 = scmp.eq.s32.totalorder %s11, 0
    %p38 = por %p36, %p37
    %p39 = scmp.ne.s32.totalorder %s31, %s33
    %p40 = scmp.eq.s32.totalorder %s16, 1
    %p41 = por %p39, %p40
    %p42 = scmp.ne.s32.totalorder %s33, %s34
    %p43 = scmp.eq.s32.totalorder %s16, 0
    %p44 = por %p42, %p43
    %p45 = scmp.ne.s32.totalorder %s33, %s34
    %p46 = scmp.eq.s32.totalorder %s17, 1
    %p47 = por %p45, %p46
    %p49 = scmp.ne.s32.totalorder %s34, %s48
    %p50 = scmp.eq.s32.totalorder %s17, 0
    %p51 = por %p49, %p50
    %s53 = sadd.s32 %s52, 1
    %p56 = scmp.eq.s32.totalorder %s11, 1
    %p57 = scmp.ne.s32.totalorder %s52, %s54
    %p58 = scmp.eq.s32.totalorder %s11, 0
    %p59 = por %p57, %p58
    %p60 = scmp.ne.s32.totalorder %s52, %s54
    %p61 = scmp.eq.s32.totalorder %s16, 1
    %p62 = por %p60, %p61
    %p63 = scmp.ne.s32.totalorder %s54, %s55
    %p64 = scmp.eq.s32.totalorder %s16, 0
    %p65 = por %p63, %p64
    %p66 = scmp.ne.s32.totalorder %s54, %s55
    %p67 = scmp.eq.s32.totalorder %s17, 1
    %p68 = por %p66, %p67
    %p70 = scmp.ne.s32.totalorder %s55, %s69
    %p71 = scmp.eq.s32.totalorder %s17, 0
    %p72 = por %p70, %p71
    %s73 = ssub.s32 %s18, %s30
    %s74 = ssub.s32 %s19, %s26
    %s75 = sor.u32 %s73, %s74
    %p76 = scmp.eq.s32.totalorder %s75, 0
    %s78 = sadd.s32 %s77, 1
    %s79 = scalar_select %p76, %s77, %s78
    %p82 = pneg %p76
    %p83 = scmp.eq.s32.totalorder %s11, 1
    %p84 = por %p82, %p83
    %p85 = scmp.ne.s32.totalorder %s77, %s80
    %p86 = scmp.eq.s32.totalorder %s11, 0
    %p87 = por %p85, %p86
    %p88 = scmp.ne.s32.totalorder %s77, %s80
    %p89 = scmp.eq.s32.totalorder %s16, 1
    %p90 = por %p88, %p89
    %p91 = scmp.ne.s32.totalorder %s80, %s81
    %p92 = scmp.eq.s32.totalorder %s16, 0
    %p93 = por %p91, %p92
    %p94 = scmp.ne.s32.totalorder %s80, %s81
    %p95 = scmp.eq.s32.totalorder %s17, 1
    %p96 = por %p94, %p95
    %p98 = scmp.ne.s32.totalorder %s81, %s97
    %p99 = scmp.eq.s32.totalorder %s17, 0
    %p100 = por %p98, %p99
    %s101 = ssub.s32 %s18, %s30
    %s102 = ssub.s32 %s19, %s26
    %s103 = sor.u32 %s101, %s102
    %p104 = scmp.eq.s32.totalorder %s103, 0
    %s106 = sadd.s32 %s105, 1
    %s107 = scalar_select %p104, %s105, %s106
    %p110 = pneg %p104
    %p111 = scmp.eq.s32.totalorder %s11, 1
    %p112 = por %p110, %p111
    %p113 = scmp.ne.s32.totalorder %s105, %s108
    %p114 = scmp.eq.s32.totalorder %s11, 0
    %p115 = por %p113, %p114
    %p116 = scmp.ne.s32.totalorder %s105, %s108
    %p117 = scmp.eq.s32.totalorder %s16, 1
    %p118 = por %p116, %p117
    %p119 = scmp.ne.s32.totalorder %s108, %s109
    %p120 = scmp.eq.s32.totalorder %s16, 0
    %p121 = por %p119, %p120
    %p122 = scmp.ne.s32.totalorder %s108, %s109
    %p123 = scmp.eq.s32.totalorder %s17, 1
    %p124 = por %p122, %p123
    %p126 = scmp.ne.s32.totalorder %s109, %s125
    %p127 = scmp.eq.s32.totalorder %s17, 0
    %p128 = por %p126, %p127
    %p129 = scmp.le.s32.totalorder 1, %s11
    %p130 = scmp.lt.s32.totalorder %s11, 3
    %p131 = pnand %p129, %p130
    %p132 = pneg %p131
    // Predicated region
    $region9: #{conv_bn_relu.2} parent=5 // pred_check
      _
    $region10: #{conv_bn_relu.2} parent=5 // pred_check_branch
      %134 = sbr.rel (%p131) target = $region12
    $region11: #{conv_bn_relu.2} parent=5 // pred_region
      %s135 = ssub.s32 %s11, 1
      // Predicated region
      $region13: #{conv_bn_relu.2} parent=11 // pred_check
        %p136 = pneg %p44
      $region14: #{conv_bn_relu.2} parent=11 // pred_check_branch
        %138 = sbr.rel (%p136) target = $region16
      $region15: #{conv_bn_relu.2} parent=11 // pred_region
        _
      $region16: #{conv_bn_relu.2} parent=11 // pred_fallthru
        _
      // Predicated region
      $region17: #{conv_bn_relu.2} parent=11 // pred_check
        %p139 = pneg %p65
      $region18: #{conv_bn_relu.2} parent=11 // pred_check_branch
        %141 = sbr.rel (%p139) target = $region20
      $region19: #{conv_bn_relu.2} parent=11 // pred_region
        _
      $region20: #{conv_bn_relu.2} parent=11 // pred_fallthru
        _
    $region12: #{conv_bn_relu.2} parent=5 // pred_fallthru
      _
    %p142 = scmp.lt.s32.totalorder %s11, 2
    // Predicated region
    $region21: #{conv_bn_relu.2} parent=5 // pred_check
      %p143 = pneg %p142
    $region22: #{conv_bn_relu.2} parent=5 // pred_check_branch
      %145 = sbr.rel (%p143) target = $region24
    $region23: #{conv_bn_relu.2} parent=5 // pred_region
      _
    $region24: #{conv_bn_relu.2} parent=5 // pred_fallthru
      _
    %p146 = scmp.le.s32.totalorder 1, %s11
    %p147 = scmp.lt.s32.totalorder %s11, 3
    %p148 = pnand %p146, %p147
    %p149 = pneg %p148
    // Predicated region
    $region25: #{conv_bn_relu.2} parent=5 // pred_check
      _
    $region26: #{conv_bn_relu.2} parent=5 // pred_check_branch
      %151 = sbr.rel (%p148) target = $region28
    $region27: #{conv_bn_relu.2} parent=5 // pred_region
      %s152 = ssub.s32 %s11, 1
      %p153 = pneg %p44
      %p154 = pneg %p41
      %p155 = pneg %p65
      %p156 = pneg %p62
      %p157 = pneg %p93
      %p158 = pneg %p90
      %s159 = smul.u32 16, %s21
      %p160 = scmp.lt.s32.totalorder %s20, 1
      %s161 = scalar_select %p160, %s20, 1
      %p162 = scmp.lt.s32.totalorder %s159, 15
      %s163 = scalar_select %p162, %s159, 15
      %s164 = smul.addr %s163, 2
      %s165 = smul.addr %s161, 32
      %s166 = sadd.s32 %s164, %s165
      %s167 = smul.addr %s166, 4
      %s168 = scalar_lea.vmem %s3, %s167
      %p169 = pneg %p121
      %p170 = pneg %p118
      %p171 = scmp.lt.s32.totalorder %s20, 1
      %s172 = scalar_select %p171, %s20, 1
      %p173 = scmp.lt.s32.totalorder %s21, 0
      %s174 = scalar_select %p173, %s21, 0
      %s175 = sadd.s32 %s174, %s172
      %s176 = smul.addr %s175, 8
      %s177 = scalar_lea.vmem %s4, %s176
      %s178 = smul.u32 16, %s21
      %p179 = scmp.lt.s32.totalorder %s20, 1
      %s180 = scalar_select %p179, %s20, 1
      %p181 = scmp.lt.s32.totalorder %s178, 15
      %s182 = scalar_select %p181, %s178, 15
      %s183 = smul.addr %s182, 2
      %s184 = smul.addr %s180, 32
      %s185 = sadd.s32 %s183, %s184
      %s186 = smul.addr %s185, 4
      %s187 = scalar_lea.vmem %s3, %s186
      %s188 = smul.u32 16, %s21
      %p189 = scmp.lt.s32.totalorder %s20, 1
      %s190 = scalar_select %p189, %s20, 1
      %p191 = scmp.lt.s32.totalorder %s21, 0
      %s192 = scalar_select %p191, %s21, 0
      %s193 = sadd.s32 %s192, %s190
      %s194 = smul.addr %s193, 8
      %s195 = scalar_lea.vmem %s4, %s194
      %p197 = scmp.lt.s32.totalorder %s21, 0
      %s198 = ssub.s32 0, %s21
      %s199 = scalar_select %p197, %s198, %s21
      %s200 = sand.u32 %s199, 1
      %s201 = ssub.s32 0, %s200
      %s202 = scalar_select %p197, %s201, %s200
      %p203 = scmp.eq.s32.totalorder %s21, 0
      // Predicated region
      $region29: #{conv_bn_relu.2} parent=27 // pred_check
        %p204 = pneg %p203
      $region30: #{conv_bn_relu.2} parent=27 // pred_check_branch
        %206 = sbr.rel (%p204) target = $region32
      $region31: #{conv_bn_relu.2} parent=27 // pred_region
        %s207 = smul.u32 %s20, 54
        %s208 = smul.addr %s207, 4
        %s209 = scalar_lea.vmem %s0, %s208
        %p211 = scmp.lt.u32.totalorder 216, 8
        %p212 = pneg %p211
        // Predicated region
        $region33: #{conv_bn_relu.2} parent=31 // pred_check
          _
        $region34: #{conv_bn_relu.2} parent=31 // pred_check_branch
          %214 = sbr.rel (%p211) target = $region36
        $region35: #{conv_bn_relu.2} parent=31 // pred_region
          %s229 = sand.u32 216, 7
          %p230 = scmp.eq.s32.totalorder %s229, 0
          // Predicated region
          $region48: #{conv_bn_relu.2} parent=35 // pred_check
            %p231 = pneg %p230
          $region49: #{conv_bn_relu.2} parent=35 // pred_check_branch
            %233 = sbr.rel (%p231) target = $region51
          $region50: #{conv_bn_relu.2} parent=35 // pred_region
            loop: start=0, step=1, limit=1
            $region52: #{conv_bn_relu.2} parent=50 // loop_pre_header
              _
            $region53: #{conv_bn_relu.2} parent=50 // loop_header
              %s235 = sphi 0, %s239
              %p236 = scmp.ge.s32.totalorder %s235, 1
              %s240 = sphi %s209, %s209
              %s241 = sphi [#allocation2], [#allocation2]
            $region54: #{conv_bn_relu.2} parent=50 // loop_header_branch
              %238 = sbr.rel (%p236) target = $region58
            $region55: #{conv_bn_relu.2} parent=50 // loop_body
              %v242 = vld [vmem:[%s240] sm:$0xff]
              %243 = vst [vmem:[%s241] sm:$0xff] %v242
              %v244 = vld [vmem:[%s240 + $0x8] sm:$0xff]
              %245 = vst [vmem:[%s241 + $0x8] sm:$0xff] %v244
              %v246 = vld [vmem:[%s240 + $0x10] sm:$0xff]
              %247 = vst [vmem:[%s241 + $0x10] sm:$0xff] %v246
              %v248 = vld [vmem:[%s240 + $0x18] sm:$0xff]
              %249 = vst [vmem:[%s241 + $0x18] sm:$0xff] %v248
              %v250 = vld [vmem:[%s240 + $0x20] sm:$0xff]
              %251 = vst [vmem:[%s241 + $0x20] sm:$0xff] %v250
              %v252 = vld [vmem:[%s240 + $0x28] sm:$0xff]
              %253 = vst [vmem:[%s241 + $0x28] sm:$0xff] %v252
              %v254 = vld [vmem:[%s240 + $0x30] sm:$0xff]
              %255 = vst [vmem:[%s241 + $0x30] sm:$0xff] %v254
              %v256 = vld [vmem:[%s240 + $0x38] sm:$0xff]
              %257 = vst [vmem:[%s241 + $0x38] sm:$0xff] %v256
              %v258 = vld [vmem:[%s240 + $0x40] sm:$0xff]
              %259 = vst [vmem:[%s241 + $0x40] sm:$0xff] %v258
              %v260 = vld [vmem:[%s240 + $0x48] sm:$0xff]
              %261 = vst [vmem:[%s241 + $0x48] sm:$0xff] %v260
              %v262 = vld [vmem:[%s240 + $0x50] sm:$0xff]
              %263 = vst [vmem:[%s241 + $0x50] sm:$0xff] %v262
              %v264 = vld [vmem:[%s240 + $0x58] sm:$0xff]
              %265 = vst [vmem:[%s241 + $0x58] sm:$0xff] %v264
              %v266 = vld [vmem:[%s240 + $0x60] sm:$0xff]
              %267 = vst [vmem:[%s241 + $0x60] sm:$0xff] %v266
              %v268 = vld [vmem:[%s240 + $0x68] sm:$0xff]
              %269 = vst [vmem:[%s241 + $0x68] sm:$0xff] %v268
              %v270 = vld [vmem:[%s240 + $0x70] sm:$0xff]
              %271 = vst [vmem:[%s241 + $0x70] sm:$0xff] %v270
              %v272 = vld [vmem:[%s240 + $0x78] sm:$0xff]
              %273 = vst [vmem:[%s241 + $0x78] sm:$0xff] %v272
              %v274 = vld [vmem:[%s240 + $0x80] sm:$0xff]
              %275 = vst [vmem:[%s241 + $0x80] sm:$0xff] %v274
              %v276 = vld [vmem:[%s240 + $0x88] sm:$0xff]
              %277 = vst [vmem:[%s241 + $0x88] sm:$0xff] %v276
              %v278 = vld [vmem:[%s240 + $0x90] sm:$0xff]
              %279 = vst [vmem:[%s241 + $0x90] sm:$0xff] %v278
              %v280 = vld [vmem:[%s240 + $0x98] sm:$0xff]
              %281 = vst [vmem:[%s241 + $0x98] sm:$0xff] %v280
              %v282 = vld [vmem:[%s240 + $0xa0] sm:$0xff]
              %283 = vst [vmem:[%s241 + $0xa0] sm:$0xff] %v282
              %v284 = vld [vmem:[%s240 + $0xa8] sm:$0xff]
              %285 = vst [vmem:[%s241 + $0xa8] sm:$0xff] %v284
              %v286 = vld [vmem:[%s240 + $0xb0] sm:$0xff]
              %287 = vst [vmem:[%s241 + $0xb0] sm:$0xff] %v286
              %v288 = vld [vmem:[%s240 + $0xb8] sm:$0xff]
              %289 = vst [vmem:[%s241 + $0xb8] sm:$0xff] %v288
              %v290 = vld [vmem:[%s240 + $0xc0] sm:$0xff]
              %291 = vst [vmem:[%s241 + $0xc0] sm:$0xff] %v290
              %v292 = vld [vmem:[%s240 + $0xc8] sm:$0xff]
              %293 = vst [vmem:[%s241 + $0xc8] sm:$0xff] %v292
              %v294 = vld [vmem:[%s240 + $0xd0] sm:$0xff]
              %295 = vst [vmem:[%s241 + $0xd0] sm:$0xff] %v294
            $region56: #{conv_bn_relu.2} parent=50 // loop_footer
              %s239 = sadd.s32 1, %s235
            $region57: #{conv_bn_relu.2} parent=50 // loop_footer_branch
              %234 = sbr.rel target = $region53
            $region58: #{conv_bn_relu.2} parent=50 // loop_exit
              _
          $region51: #{conv_bn_relu.2} parent=35 // pred_fallthru
            _
          %p296 = pneg %p230
          // Predicated region
          $region59: #{conv_bn_relu.2} parent=35 // pred_check
            _
          $region60: #{conv_bn_relu.2} parent=35 // pred_check_branch
            %298 = sbr.rel (%p230) target = $region62
          $region61: #{conv_bn_relu.2} parent=35 // pred_region
            %s299 = sand.u32 216, 7
          $region62: #{conv_bn_relu.2} parent=35 // pred_fallthru
            _
        $region36: #{conv_bn_relu.2} parent=31 // pred_fallthru
          _
        // Predicated region
        $region37: #{conv_bn_relu.2} parent=31 // pred_check
          %p215 = pneg %p211
        $region38: #{conv_bn_relu.2} parent=31 // pred_check_branch
          %217 = sbr.rel (%p215) target = $region40
        $region39: #{conv_bn_relu.2} parent=31 // pred_region
          %s218 = sshllo.u32 0, 216
          loop: start=0, step=1, limit=1
          $region41: #{conv_bn_relu.2} parent=39 // loop_pre_header
            _
          $region42: #{conv_bn_relu.2} parent=39 // loop_header
            %s220 = sphi 0, %s224
            %p221 = scmp.ge.s32.totalorder %s220, 1
            %s225 = sphi %s209, %s209
            %s226 = sphi [#allocation2], [#allocation2]
          $region43: #{conv_bn_relu.2} parent=39 // loop_header_branch
            %223 = sbr.rel (%p221) target = $region47
          $region44: #{conv_bn_relu.2} parent=39 // loop_body
            %v227 = vld [vmem:[%s225] sm:%s218]
            %228 = vst [vmem:[%s226] sm:%s218] %v227
          $region45: #{conv_bn_relu.2} parent=39 // loop_footer
            %s224 = sadd.s32 1, %s220
          $region46: #{conv_bn_relu.2} parent=39 // loop_footer_branch
            %219 = sbr.rel target = $region42
          $region47: #{conv_bn_relu.2} parent=39 // loop_exit
            _
        $region40: #{conv_bn_relu.2} parent=31 // pred_fallthru
          _
        // Predicated region
        $region63: #{conv_bn_relu.2} parent=31 // pred_check
          _
        $region64: #{conv_bn_relu.2} parent=31 // pred_check_branch
          %302 = sbr.rel (0) target = $region66
        $region65: #{conv_bn_relu.2} parent=31 // pred_region
          %303 = vsyncadd [#allocation3], 3456
        $region66: #{conv_bn_relu.2} parent=31 // pred_fallthru
          _
      $region32: #{conv_bn_relu.2} parent=27 // pred_fallthru
        _
      %s304 = sadd.s32 %s21, 1
      %p305 = scmp.lt.s32.totalorder %s304, 1
      // Predicated region
      $region67: #{conv_bn_relu.2} parent=27 // pred_check
        %p306 = pneg %p305
      $region68: #{conv_bn_relu.2} parent=27 // pred_check_branch
        %308 = sbr.rel (%p306) target = $region70
      $region69: #{conv_bn_relu.2} parent=27 // pred_region
        %s309 = ssub.s32 1, %s202
        %s310 = smul.u32 %s304, 16
        %s311 = smul.u32 %s310, 3
        %s312 = smul.u32 %s20, 54
        %s313 = sadd.s32 %s311, %s312
        %s314 = smul.addr %s313, 4
        %s315 = scalar_lea.vmem %s0, %s314
        %s316 = smul.u32 %s309, 54
        %s317 = smul.addr %s316, 4
        %s318 = scalar_lea.vmem [#allocation2], %s317
        %s319 = scalar_lea.sflag [#allocation3], %s309
        %p321 = scmp.lt.u32.totalorder 216, 8
        %p322 = pneg %p321
        // Predicated region
        $region71: #{conv_bn_relu.2} parent=69 // pred_check
          _
        $region72: #{conv_bn_relu.2} parent=69 // pred_check_branch
          %324 = sbr.rel (%p321) target = $region74
        $region73: #{conv_bn_relu.2} parent=69 // pred_region
          %s339 = sand.u32 216, 7
          %p340 = scmp.eq.s32.totalorder %s339, 0
          // Predicated region
          $region86: #{conv_bn_relu.2} parent=73 // pred_check
            %p341 = pneg %p340
          $region87: #{conv_bn_relu.2} parent=73 // pred_check_branch
            %343 = sbr.rel (%p341) target = $region89
          $region88: #{conv_bn_relu.2} parent=73 // pred_region
            loop: start=0, step=1, limit=1
            $region90: #{conv_bn_relu.2} parent=88 // loop_pre_header
              _
            $region91: #{conv_bn_relu.2} parent=88 // loop_header
              %s345 = sphi 0, %s349
              %p346 = scmp.ge.s32.totalorder %s345, 1
              %s350 = sphi %s315, %s315
              %s351 = sphi %s318, %s318
            $region92: #{conv_bn_relu.2} parent=88 // loop_header_branch
              %348 = sbr.rel (%p346) target = $region96
            $region93: #{conv_bn_relu.2} parent=88 // loop_body
              %v352 = vld [vmem:[%s350] sm:$0xff]
              %353 = vst [vmem:[%s351] sm:$0xff] %v352
              %v354 = vld [vmem:[%s350 + $0x8] sm:$0xff]
              %355 = vst [vmem:[%s351 + $0x8] sm:$0xff] %v354
              %v356 = vld [vmem:[%s350 + $0x10] sm:$0xff]
              %357 = vst [vmem:[%s351 + $0x10] sm:$0xff] %v356
              %v358 = vld [vmem:[%s350 + $0x18] sm:$0xff]
              %359 = vst [vmem:[%s351 + $0x18] sm:$0xff] %v358
              %v360 = vld [vmem:[%s350 + $0x20] sm:$0xff]
              %361 = vst [vmem:[%s351 + $0x20] sm:$0xff] %v360
              %v362 = vld [vmem:[%s350 + $0x28] sm:$0xff]
              %363 = vst [vmem:[%s351 + $0x28] sm:$0xff] %v362
              %v364 = vld [vmem:[%s350 + $0x30] sm:$0xff]
              %365 = vst [vmem:[%s351 + $0x30] sm:$0xff] %v364
              %v366 = vld [vmem:[%s350 + $0x38] sm:$0xff]
              %367 = vst [vmem:[%s351 + $0x38] sm:$0xff] %v366
              %v368 = vld [vmem:[%s350 + $0x40] sm:$0xff]
              %369 = vst [vmem:[%s351 + $0x40] sm:$0xff] %v368
              %v370 = vld [vmem:[%s350 + $0x48] sm:$0xff]
              %371 = vst [vmem:[%s351 + $0x48] sm:$0xff] %v370
              %v372 = vld [vmem:[%s350 + $0x50] sm:$0xff]
              %373 = vst [vmem:[%s351 + $0x50] sm:$0xff] %v372
              %v374 = vld [vmem:[%s350 + $0x58] sm:$0xff]
              %375 = vst [vmem:[%s351 + $0x58] sm:$0xff] %v374
              %v376 = vld [vmem:[%s350 + $0x60] sm:$0xff]
              %377 = vst [vmem:[%s351 + $0x60] sm:$0xff] %v376
              %v378 = vld [vmem:[%s350 + $0x68] sm:$0xff]
              %379 = vst [vmem:[%s351 + $0x68] sm:$0xff] %v378
              %v380 = vld [vmem:[%s350 + $0x70] sm:$0xff]
              %381 = vst [vmem:[%s351 + $0x70] sm:$0xff] %v380
              %v382 = vld [vmem:[%s350 + $0x78] sm:$0xff]
              %383 = vst [vmem:[%s351 + $0x78] sm:$0xff] %v382
              %v384 = vld [vmem:[%s350 + $0x80] sm:$0xff]
              %385 = vst [vmem:[%s351 + $0x80] sm:$0xff] %v384
              %v386 = vld [vmem:[%s350 + $0x88] sm:$0xff]
              %387 = vst [vmem:[%s351 + $0x88] sm:$0xff] %v386
              %v388 = vld [vmem:[%s350 + $0x90] sm:$0xff]
              %389 = vst [vmem:[%s351 + $0x90] sm:$0xff] %v388
              %v390 = vld [vmem:[%s350 + $0x98] sm:$0xff]
              %391 = vst [vmem:[%s351 + $0x98] sm:$0xff] %v390
              %v392 = vld [vmem:[%s350 + $0xa0] sm:$0xff]
              %393 = vst [vmem:[%s351 + $0xa0] sm:$0xff] %v392
              %v394 = vld [vmem:[%s350 + $0xa8] sm:$0xff]
              %395 = vst [vmem:[%s351 + $0xa8] sm:$0xff] %v394
              %v396 = vld [vmem:[%s350 + $0xb0] sm:$0xff]
              %397 = vst [vmem:[%s351 + $0xb0] sm:$0xff] %v396
              %v398 = vld [vmem:[%s350 + $0xb8] sm:$0xff]
              %399 = vst [vmem:[%s351 + $0xb8] sm:$0xff] %v398
              %v400 = vld [vmem:[%s350 + $0xc0] sm:$0xff]
              %401 = vst [vmem:[%s351 + $0xc0] sm:$0xff] %v400
              %v402 = vld [vmem:[%s350 + $0xc8] sm:$0xff]
              %403 = vst [vmem:[%s351 + $0xc8] sm:$0xff] %v402
              %v404 = vld [vmem:[%s350 + $0xd0] sm:$0xff]
              %405 = vst [vmem:[%s351 + $0xd0] sm:$0xff] %v404
            $region94: #{conv_bn_relu.2} parent=88 // loop_footer
              %s349 = sadd.s32 1, %s345
            $region95: #{conv_bn_relu.2} parent=88 // loop_footer_branch
              %344 = sbr.rel target = $region91
            $region96: #{conv_bn_relu.2} parent=88 // loop_exit
              _
          $region89: #{conv_bn_relu.2} parent=73 // pred_fallthru
            _
          %p406 = pneg %p340
          // Predicated region
          $region97: #{conv_bn_relu.2} parent=73 // pred_check
            _
          $region98: #{conv_bn_relu.2} parent=73 // pred_check_branch
            %408 = sbr.rel (%p340) target = $region100
          $region99: #{conv_bn_relu.2} parent=73 // pred_region
            %s409 = sand.u32 216, 7
          $region100: #{conv_bn_relu.2} parent=73 // pred_fallthru
            _
        $region74: #{conv_bn_relu.2} parent=69 // pred_fallthru
          _
        // Predicated region
        $region75: #{conv_bn_relu.2} parent=69 // pred_check
          %p325 = pneg %p321
        $region76: #{conv_bn_relu.2} parent=69 // pred_check_branch
          %327 = sbr.rel (%p325) target = $region78
        $region77: #{conv_bn_relu.2} parent=69 // pred_region
          %s328 = sshllo.u32 0, 216
          loop: start=0, step=1, limit=1
          $region79: #{conv_bn_relu.2} parent=77 // loop_pre_header
            _
          $region80: #{conv_bn_relu.2} parent=77 // loop_header
            %s330 = sphi 0, %s334
            %p331 = scmp.ge.s32.totalorder %s330, 1
            %s335 = sphi %s315, %s315
            %s336 = sphi %s318, %s318
          $region81: #{conv_bn_relu.2} parent=77 // loop_header_branch
            %333 = sbr.rel (%p331) target = $region85
          $region82: #{conv_bn_relu.2} parent=77 // loop_body
            %v337 = vld [vmem:[%s335] sm:%s328]
            %338 = vst [vmem:[%s336] sm:%s328] %v337
          $region83: #{conv_bn_relu.2} parent=77 // loop_footer
            %s334 = sadd.s32 1, %s330
          $region84: #{conv_bn_relu.2} parent=77 // loop_footer_branch
            %329 = sbr.rel target = $region80
          $region85: #{conv_bn_relu.2} parent=77 // loop_exit
            _
        $region78: #{conv_bn_relu.2} parent=69 // pred_fallthru
          _
        // Predicated region
        $region101: #{conv_bn_relu.2} parent=69 // pred_check
          _
        $region102: #{conv_bn_relu.2} parent=69 // pred_check_branch
          %412 = sbr.rel (0) target = $region104
        $region103: #{conv_bn_relu.2} parent=69 // pred_region
          %413 = vsyncadd %s319, 3456
        $region104: #{conv_bn_relu.2} parent=69 // pred_fallthru
          _
      $region70: #{conv_bn_relu.2} parent=27 // pred_fallthru
        _
      %s414 = smul.u32 %s202, 54
      %s415 = smul.addr %s414, 4
      %s416 = scalar_lea.vmem [#allocation2], %s415
      %s417 = scalar_lea.sflag [#allocation3], %s202
      %s418 = smul.u32 4, 18
      %s419 = smul.u32 %s418, 3
      %s420 = smul.u32 %s419, 1
      %s421 = sshll.u32 %s420, 4
      %422 = dma.done %s417, %s421
      %v423 = vld [vmem:[%s416] sm:$0xf]
      %v424 = vld [vmem:[%s416 + $0x4] sm:$0xf]
      %v425 = vld [vmem:[%s416 + $0x8] sm:$0xf]
      %v426 = vld [vmem:[%s416 + $0xc] sm:$0xf]
      %v427 = vld [vmem:[%s416 + $0x10] sm:$0xf]
      %v428 = vld [vmem:[%s416 + $0x14] sm:$0xf]
      %v429 = vld [vmem:[%s416 + $0x18] sm:$0xf]
      %v430 = vld [vmem:[%s416 + $0x1c] sm:$0xf]
      %v431 = vld [vmem:[%s416 + $0x20] sm:$0xf]
      %v432 = vld [vmem:[%s416 + $0x24] sm:$0xf]
      %v433 = vld [vmem:[%s416 + $0x28] sm:$0xf]
      %v434 = vld [vmem:[%s416 + $0x2c] sm:$0xf]
      %v435 = vld [vmem:[%s416 + $0x30] sm:$0xf]
      %v436 = vld [vmem:[%s416 + $0x34] sm:$0xf]
      %v437 = vld [vmem:[%s416 + $0x38] sm:$0xf]
      %v438 = vld [vmem:[%s416 + $0x3c] sm:$0xf]
      %v439 = vld [vmem:[%s416 + $0x40] sm:$0xf]
      %v440 = vld [vmem:[%s416 + $0x44] sm:$0xf]
      %v441 = vld [vmem:[%s416 + $0x48] sm:$0xf]
      %v442 = vld [vmem:[%s416 + $0x4c] sm:$0xf]
      %v443 = vld [vmem:[%s416 + $0x50] sm:$0xf]
      %v444 = vld [vmem:[%s416 + $0x54] sm:$0xf]
      %v445 = vld [vmem:[%s416 + $0x58] sm:$0xf]
      %v446 = vld [vmem:[%s416 + $0x5c] sm:$0xf]
      %v447 = vld [vmem:[%s416 + $0x60] sm:$0xf]
      %v448 = vld [vmem:[%s416 + $0x64] sm:$0xf]
      %v449 = vld [vmem:[%s416 + $0x68] sm:$0xf]
      %v450 = vld [vmem:[%s416 + $0x6c] sm:$0xf]
      %v451 = vld [vmem:[%s416 + $0x70] sm:$0xf]
      %v452 = vld [vmem:[%s416 + $0x74] sm:$0xf]
      %v453 = vld [vmem:[%s416 + $0x78] sm:$0xf]
      %v454 = vld [vmem:[%s416 + $0x7c] sm:$0xf]
      %v455 = vld [vmem:[%s416 + $0x80] sm:$0xf]
      %v456 = vld [vmem:[%s416 + $0x84] sm:$0xf]
      %v457 = vld [vmem:[%s416 + $0x88] sm:$0xf]
      %v458 = vld [vmem:[%s416 + $0x8c] sm:$0xf]
      %v459 = vld [vmem:[%s416 + $0x90] sm:$0xf]
      %v460 = vld [vmem:[%s416 + $0x94] sm:$0xf]
      %v461 = vld [vmem:[%s416 + $0x98] sm:$0xf]
      %v462 = vld [vmem:[%s416 + $0x9c] sm:$0xf]
      %v463 = vld [vmem:[%s416 + $0xa0] sm:$0xf]
      %v464 = vld [vmem:[%s416 + $0xa4] sm:$0xf]
      %v465 = vld [vmem:[%s416 + $0xa8] sm:$0xf]
      %v466 = vld [vmem:[%s416 + $0xac] sm:$0xf]
      %v467 = vld [vmem:[%s416 + $0xb0] sm:$0xf]
      %v468 = vld [vmem:[%s416 + $0xb4] sm:$0xf]
      %v469 = vld [vmem:[%s416 + $0xb8] sm:$0xf]
      %v470 = vld [vmem:[%s416 + $0xbc] sm:$0xf]
      %v471 = vld [vmem:[%s1] sm:$0xf]
      %v472 = vld [vmem:[%s1 + $0x4] sm:$0xf]
      %v473 = vld [vmem:[%s1 + $0x8] sm:$0xf]
      %v474 = vld [vmem:[%s1 + $0xc] sm:$0xf]
      %v475 = vld [vmem:[%s1 + $0x10] sm:$0xf]
      %v476 = vld [vmem:[%s1 + $0x14] sm:$0xf]
      %v477 = vld [vmem:[%s1 + $0x18] sm:$0xf]
      %v478 = vld [vmem:[%s1 + $0x1c] sm:$0xf]
      %v479 = vld [vmem:[%s1 + $0x20] sm:$0xf]
      %v480 = vld [vmem:[%s1 + $0x24] sm:$0xf]
      %v481 = vld [vmem:[%s1 + $0x28] sm:$0xf]
      %v482 = vld [vmem:[%s1 + $0x2c] sm:$0xf]
      %v483 = vld [vmem:[%s1 + $0x30] sm:$0xf]
      %v484 = vld [vmem:[%s1 + $0x34] sm:$0xf]
      %v485 = vld [vmem:[%s1 + $0x38] sm:$0xf]
      %v486 = vld [vmem:[%s1 + $0x3c] sm:$0xf]
      %s487 = scalar_lea.vmem %s416, 12 [#allocation2]
      %v488 = vld [vmem:[%s487] sm:$0xf]
      %v489 = vld [vmem:[%s487 + $0x4] sm:$0xf]
      %v490 = vld [vmem:[%s487 + $0x8] sm:$0xf]
      %v491 = vld [vmem:[%s487 + $0xc] sm:$0xf]
      %v492 = vld [vmem:[%s487 + $0x10] sm:$0xf]
      %v493 = vld [vmem:[%s487 + $0x14] sm:$0xf]
      %v494 = vld [vmem:[%s487 + $0x18] sm:$0xf]
      %v495 = vld [vmem:[%s487 + $0x1c] sm:$0xf]
      %v496 = vld [vmem:[%s487 + $0x20] sm:$0xf]
      %v497 = vld [vmem:[%s487 + $0x24] sm:$0xf]
      %v498 = vld [vmem:[%s487 + $0x28] sm:$0xf]
      %v499 = vld [vmem:[%s487 + $0x2c] sm:$0xf]
      %v500 = vld [vmem:[%s487 + $0x30] sm:$0xf]
      %v501 = vld [vmem:[%s487 + $0x34] sm:$0xf]
      %v502 = vld [vmem:[%s487 + $0x38] sm:$0xf]
      %v503 = vld [vmem:[%s487 + $0x3c] sm:$0xf]
      %v504 = vld [vmem:[%s487 + $0x40] sm:$0xf]
      %v505 = vld [vmem:[%s487 + $0x44] sm:$0xf]
      %v506 = vld [vmem:[%s487 + $0x48] sm:$0xf]
      %v507 = vld [vmem:[%s487 + $0x4c] sm:$0xf]
      %v508 = vld [vmem:[%s487 + $0x50] sm:$0xf]
      %v509 = vld [vmem:[%s487 + $0x54] sm:$0xf]
      %v510 = vld [vmem:[%s487 + $0x58] sm:$0xf]
      %v511 = vld [vmem:[%s487 + $0x5c] sm:$0xf]
      %v512 = vld [vmem:[%s487 + $0x60] sm:$0xf]
      %v513 = vld [vmem:[%s487 + $0x64] sm:$0xf]
      %v514 = vld [vmem:[%s487 + $0x68] sm:$0xf]
      %v515 = vld [vmem:[%s487 + $0x6c] sm:$0xf]
      %v516 = vld [vmem:[%s487 + $0x70] sm:$0xf]
      %v517 = vld [vmem:[%s487 + $0x74] sm:$0xf]
      %v518 = vld [vmem:[%s487 + $0x78] sm:$0xf]
      %v519 = vld [vmem:[%s487 + $0x7c] sm:$0xf]
      %v520 = vld [vmem:[%s487 + $0x80] sm:$0xf]
      %v521 = vld [vmem:[%s487 + $0x84] sm:$0xf]
      %v522 = vld [vmem:[%s487 + $0x88] sm:$0xf]
      %v523 = vld [vmem:[%s487 + $0x8c] sm:$0xf]
      %v524 = vld [vmem:[%s487 + $0x90] sm:$0xf]
      %v525 = vld [vmem:[%s487 + $0x94] sm:$0xf]
      %v526 = vld [vmem:[%s487 + $0x98] sm:$0xf]
      %v527 = vld [vmem:[%s487 + $0x9c] sm:$0xf]
      %v528 = vld [vmem:[%s487 + $0xa0] sm:$0xf]
      %v529 = vld [vmem:[%s487 + $0xa4] sm:$0xf]
      %v530 = vld [vmem:[%s487 + $0xa8] sm:$0xf]
      %v531 = vld [vmem:[%s487 + $0xac] sm:$0xf]
      %v532 = vld [vmem:[%s487 + $0xb0] sm:$0xf]
      %v533 = vld [vmem:[%s487 + $0xb4] sm:$0xf]
      %v534 = vld [vmem:[%s487 + $0xb8] sm:$0xf]
      %v535 = vld [vmem:[%s487 + $0xbc] sm:$0xf]
      %s536 = scalar_lea.vmem %s1, 192
      %v537 = vld [vmem:[%s536] sm:$0xf]
      %v538 = vld [vmem:[%s536 + $0x4] sm:$0xf]
      %v539 = vld [vmem:[%s536 + $0x8] sm:$0xf]
      %v540 = vld [vmem:[%s536 + $0xc] sm:$0xf]
      %v541 = vld [vmem:[%s536 + $0x10] sm:$0xf]
      %v542 = vld [vmem:[%s536 + $0x14] sm:$0xf]
      %v543 = vld [vmem:[%s536 + $0x18] sm:$0xf]
      %v544 = vld [vmem:[%s536 + $0x1c] sm:$0xf]
      %v545 = vld [vmem:[%s536 + $0x20] sm:$0xf]
      %v546 = vld [vmem:[%s536 + $0x24] sm:$0xf]
      %v547 = vld [vmem:[%s536 + $0x28] sm:$0xf]
      %v548 = vld [vmem:[%s536 + $0x2c] sm:$0xf]
      %v549 = vld [vmem:[%s536 + $0x30] sm:$0xf]
      %v550 = vld [vmem:[%s536 + $0x34] sm:$0xf]
      %v551 = vld [vmem:[%s536 + $0x38] sm:$0xf]
      %v552 = vld [vmem:[%s536 + $0x3c] sm:$0xf]
      %v601 = vunpack.c.l.b16 %v488
      %v602 = vunpack.c.l.b16 %v489
      %v603 = vunpack.c.l.b16 %v490
      %v604 = vunpack.c.l.b16 %v491
      %v605 = vunpack.c.l.b16 %v492
      %v606 = vunpack.c.l.b16 %v493
      %v607 = vunpack.c.l.b16 %v494
      %v608 = vunpack.c.l.b16 %v495
      %v609 = vunpack.c.l.b16 %v496
      %v610 = vunpack.c.l.b16 %v497
      %v611 = vunpack.c.l.b16 %v498
      %v612 = vunpack.c.l.b16 %v499
      %v613 = vunpack.c.l.b16 %v500
      %v614 = vunpack.c.l.b16 %v501
      %v615 = vunpack.c.l.b16 %v502
      %v616 = vunpack.c.l.b16 %v503
      %v617 = vunpack.c.l.b16 %v504
      %v618 = vunpack.c.l.b16 %v505
      %v619 = vunpack.c.l.b16 %v506
      %v620 = vunpack.c.l.b16 %v507
      %v621 = vunpack.c.l.b16 %v508
      %v622 = vunpack.c.l.b16 %v509
      %v623 = vunpack.c.l.b16 %v510
      %v624 = vunpack.c.l.b16 %v511
      %v625 = vunpack.c.l.b16 %v512
      %v626 = vunpack.c.l.b16 %v513
      %v627 = vunpack.c.l.b16 %v514
      %v628 = vunpack.c.l.b16 %v515
      %v629 = vunpack.c.l.b16 %v516
      %v630 = vunpack.c.l.b16 %v517
      %v631 = vunpack.c.l.b16 %v518
      %v632 = vunpack.c.l.b16 %v519
      %v633 = vunpack.c.l.b16 %v520
      %v634 = vunpack.c.l.b16 %v521
      %v635 = vunpack.c.l.b16 %v522
      %v636 = vunpack.c.l.b16 %v523
      %v637 = vunpack.c.l.b16 %v524
      %v638 = vunpack.c.l.b16 %v525
      %v639 = vunpack.c.l.b16 %v526
      %v640 = vunpack.c.l.b16 %v527
      %v641 = vunpack.c.l.b16 %v528
      %v642 = vunpack.c.l.b16 %v529
      %v643 = vunpack.c.l.b16 %v530
      %v644 = vunpack.c.l.b16 %v531
      %v645 = vunpack.c.l.b16 %v532
      %v646 = vunpack.c.l.b16 %v533
      %v647 = vunpack.c.l.b16 %v534
      %v648 = vunpack.c.l.b16 %v535
      %v649 = vpack.c.b16 %v602, %v601
      %v650 = vpack.c.b16 %v604, %v603
      %v651 = vpack.c.b16 %v606, %v605
      %v652 = vpack.c.b16 %v608, %v607
      %v653 = vpack.c.b16 %v610, %v609
      %v654 = vpack.c.b16 %v612, %v611
      %v655 = vpack.c.b16 %v614, %v613
      %v656 = vpack.c.b16 %v616, %v615
      %v657 = vpack.c.b16 %v618, %v617
      %v658 = vpack.c.b16 %v620, %v619
      %v659 = vpack.c.b16 %v622, %v621
      %v660 = vpack.c.b16 %v624, %v623
      %v661 = vpack.c.b16 %v626, %v625
      %v662 = vpack.c.b16 %v628, %v627
      %v663 = vpack.c.b16 %v630, %v629
      %v664 = vpack.c.b16 %v632, %v631
      %v665 = vpack.c.b16 %v634, %v633
      %v666 = vpack.c.b16 %v636, %v635
      %v667 = vpack.c.b16 %v638, %v637
      %v668 = vpack.c.b16 %v640, %v639
      %v669 = vpack.c.b16 %v642, %v641
      %v670 = vpack.c.b16 %v644, %v643
      %v671 = vpack.c.b16 %v646, %v645
      %v672 = vpack.c.b16 %v648, %v647
      %v713 = vunpack.c.l.b16 %v537
      %v714 = vunpack.c.l.b16 %v538
      %v715 = vunpack.c.l.b16 %v539
      %v716 = vunpack.c.l.b16 %v540
      %v717 = vunpack.c.l.b16 %v541
      %v718 = vunpack.c.l.b16 %v542
      %v719 = vunpack.c.l.b16 %v543
      %v720 = vunpack.c.l.b16 %v544
      %v721 = vunpack.c.l.b16 %v545
      %v722 = vunpack.c.l.b16 %v546
      %v723 = vunpack.c.l.b16 %v547
      %v724 = vunpack.c.l.b16 %v548
      %v725 = vunpack.c.l.b16 %v549
      %v726 = vunpack.c.l.b16 %v550
      %v727 = vunpack.c.l.b16 %v551
      %v728 = vunpack.c.l.b16 %v552
      %v729 = vpack.c.b16 %v714, %v713
      %v730 = vpack.c.b16 %v716, %v715
      %v731 = vpack.c.b16 %v718, %v717
      %v732 = vpack.c.b16 %v720, %v719
      %v733 = vpack.c.b16 %v722, %v721
      %v734 = vpack.c.b16 %v724, %v723
      %v735 = vpack.c.b16 %v726, %v725
      %v736 = vpack.c.b16 %v728, %v727
      %745 = vmatprep.subr.bf16.mxu0 0
      %746 = vmatpush1.bf16.msra.mxu0 %v729
      %747 = vmatprep.subr.bf16.mxu0 0
      %748 = vmatpush1.bf16.msra.mxu0 %v730
      %749 = vmatprep.subr.bf16.mxu0 0
      %750 = vmatpush1.bf16.msra.mxu0 %v731
      %751 = vmatprep.subr.bf16.mxu0 0
      %752 = vmatpush1.bf16.msra.mxu0 %v732
      %753 = vmatprep.subr.bf16.mxu0 0
      %754 = vmatpush1.bf16.msra.mxu0 %v733
      %755 = vmatprep.subr.bf16.mxu0 0
      %756 = vmatpush1.bf16.msra.mxu0 %v734
      %757 = vmatprep.subr.bf16.mxu0 0
      %758 = vmatpush1.bf16.msra.mxu0 %v735
      %759 = vmatprep.subr.bf16.mxu0 0
      %760 = vmatpush1.bf16.msra.mxu0 %v736
      %761 = vmatprep.subr.bf16.mxu0 0
      %762 = vmatpush1.bf16.msra.mxu0 0
      %763 = vmatprep.subr.bf16.mxu0 0
      %764 = vmatpush1.bf16.msra.mxu0 0
      %765 = vmatprep.subr.bf16.mxu0 0
      %766 = vmatpush1.bf16.msra.mxu0 0
      %767 = vmatprep.subr.bf16.mxu0 0
      %768 = vmatpush1.bf16.msra.mxu0 0
      %769 = vmatprep.subr.bf16.mxu0 0
      %770 = vmatpush1.bf16.msra.mxu0 0
      %771 = vmatprep.subr.bf16.mxu0 0
      %772 = vmatpush1.bf16.msra.mxu0 0
      %773 = vmatprep.subr.bf16.mxu0 0
      %774 = vmatpush1.bf16.msra.mxu0 0
      %775 = vmatprep.subr.bf16.mxu0 0
      %776 = vmatpush1.bf16.msra.mxu0 0
      %777 = vmatprep.mubr.bf16.mxu0 0
      %778 = vmatmul.mubr.bf16.gmra.mrb[0].mxu0 %v649
      %v779 = vpop.f32.mrb[0].mxu0
      %v780 = vadd.f32 0.0, %v779
      %v781 = vpop.f32.mrb[0].mxu0
      %v782 = vpop.f32.mrb[0].mxu0
      %v783 = vadd.f32 0.0, %v782
      %v784 = vpop.f32.mrb[0].mxu0
      %785 = vmatprep.mubr.bf16.mxu0 0
      %786 = vmatmul.mubr.bf16.gmra.mrb[0].mxu0 %v650
      %v787 = vpop.f32.mrb[0].mxu0
      %v788 = vpop.f32.mrb[0].mxu0
      %v789 = vpop.f32.mrb[0].mxu0
      %v790 = vadd.f32 0.0, %v789
      %v791 = vpop.f32.mrb[0].mxu0
      %792 = vmatprep.mubr.bf16.mxu0 0
      %793 = vmatmul.mubr.bf16.gmra.mrb[0].mxu0 %v651
      %v794 = vpop.f32.mrb[0].mxu0
      %v795 = vadd.f32 0.0, %v794
      %v796 = vpop.f32.mrb[0].mxu0
      %v797 = vpop.f32.mrb[0].mxu0
      %v798 = vpop.f32.mrb[0].mxu0
      %799 = vmatprep.mubr.bf16.mxu0 0
      %800 = vmatmul.mubr.bf16.gmra.mrb[0].mxu0 %v652
      %v801 = vpop.f32.mrb[0].mxu0
      %v802 = vadd.f32 0.0, %v801
      %v803 = vpop.f32.mrb[0].mxu0
      %v804 = vpop.f32.mrb[0].mxu0
      %v805 = vadd.f32 0.0, %v804
      %v806 = vpop.f32.mrb[0].mxu0
      %807 = vmatprep.mubr.bf16.mxu0 0
      %808 = vmatmul.mubr.bf16.gmra.mrb[0].mxu0 %v653
      %v809 = vpop.f32.mrb[0].mxu0
      %v810 = vpop.f32.mrb[0].mxu0
      %v811 = vpop.f32.mrb[0].mxu0
      %v812 = vadd.f32 0.0, %v811
      %v813 = vpop.f32.mrb[0].mxu0
      %814 = vmatprep.mubr.bf16.mxu0 0
      %815 = vmatmul.mubr.bf16.gmra.mrb[0].mxu0 %v654
      %v816 = vpop.f32.mrb[0].mxu0
      %v817 = vadd.f32 0.0, %v816
      %v818 = vpop.f32.mrb[0].mxu0
      %v819 = vpop.f32.mrb[0].mxu0
      %v820 = vpop.f32.mrb[0].mxu0
      %821 = vmatprep.mubr.bf16.mxu0 0
      %822 = vmatmul.mubr.bf16.gmra.mrb[0].mxu0 %v655
      %v823 = vpop.f32.mrb[0].mxu0
      %v824 = vadd.f32 0.0, %v823
      %v825 = vpop.f32.mrb[0].mxu0
      %v826 = vpop.f32.mrb[0].mxu0
      %v827 = vadd.f32 0.0, %v826
      %v828 = vpop.f32.mrb[0].mxu0
      %829 = vmatprep.mubr.bf16.mxu0 0
      %830 = vmatmul.mubr.bf16.gmra.mrb[0].mxu0 %v656
      %v831 = vpop.f32.mrb[0].mxu0
      %v832 = vpop.f32.mrb[0].mxu0
      %v833 = vpop.f32.mrb[0].mxu0
      %v834 = vadd.f32 0.0, %v833
      %v835 = vpop.f32.mrb[0].mxu0
      %836 = vmatprep.mubr.bf16.mxu0 0
      %837 = vmatmul.mubr.bf16.gmra.mrb[0].mxu0 %v657
      %v838 = vpop.f32.mrb[0].mxu0
      %v839 = vadd.f32 0.0, %v838
      %v840 = vpop.f32.mrb[0].mxu0
      %v841 = vpop.f32.mrb[0].mxu0
      %v842 = vpop.f32.mrb[0].mxu0
      %843 = vmatprep.mubr.bf16.mxu0 0
      %844 = vmatmul.mubr.bf16.gmra.mrb[0].mxu0 %v658
      %v845 = vpop.f32.mrb[0].mxu0
      %v846 = vadd.f32 0.0, %v845
      %v847 = vpop.f32.mrb[0].mxu0
      %v848 = vpop.f32.mrb[0].mxu0
      %v849 = vadd.f32 0.0, %v848
      %v850 = vpop.f32.mrb[0].mxu0
      %851 = vmatprep.mubr.bf16.mxu0 0
      %852 = vmatmul.mubr.bf16.gmra.mrb[0].mxu0 %v659
      %v853 = vpop.f32.mrb[0].mxu0
      %v854 = vpop.f32.mrb[0].mxu0
      %v855 = vpop.f32.mrb[0].mxu0
      %v856 = vadd.f32 0.0, %v855
      %v857 = vpop.f32.mrb[0].mxu0
      %858 = vmatprep.mubr.bf16.mxu0 0
      %859 = vmatmul.mubr.bf16.gmra.mrb[0].mxu0 %v660
      %v860 = vpop.f32.mrb[0].mxu0
      %v861 = vadd.f32 0.0, %v860
      %v862 = vpop.f32.mrb[0].mxu0
      %v863 = vpop.f32.mrb[0].mxu0
      %v864 = vpop.f32.mrb[0].mxu0
      %865 = vmatprep.mubr.bf16.mxu0 0
      %866 = vmatmul.mubr.bf16.gmra.mrb[0].mxu0 %v661
      %v867 = vpop.f32.mrb[0].mxu0
      %v868 = vadd.f32 0.0, %v867
      %v869 = vpop.f32.mrb[0].mxu0
      %v870 = vpop.f32.mrb[0].mxu0
      %v871 = vadd.f32 0.0, %v870
      %v872 = vpop.f32.mrb[0].mxu0
      %873 = vmatprep.mubr.bf16.mxu0 0
      %874 = vmatmul.mubr.bf16.gmra.mrb[0].mxu0 %v662
      %v875 = vpop.f32.mrb[0].mxu0
      %v876 = vpop.f32.mrb[0].mxu0
      %v877 = vpop.f32.mrb[0].mxu0
      %v878 = vadd.f32 0.0, %v877
      %v879 = vpop.f32.mrb[0].mxu0
      %880 = vmatprep.mubr.bf16.mxu0 0
      %881 = vmatmul.mubr.bf16.gmra.mrb[0].mxu0 %v663
      %v882 = vpop.f32.mrb[0].mxu0
      %v883 = vadd.f32 0.0, %v882
      %v884 = vpop.f32.mrb[0].mxu0
      %v885 = vpop.f32.mrb[0].mxu0
      %v886 = vpop.f32.mrb[0].mxu0
      %887 = vmatprep.mubr.bf16.mxu0 0
      %888 = vmatmul.mubr.bf16.gmra.mrb[0].mxu0 %v664
      %v889 = vpop.f32.mrb[0].mxu0
      %v890 = vadd.f32 0.0, %v889
      %v891 = vpop.f32.mrb[0].mxu0
      %v892 = vpop.f32.mrb[0].mxu0
      %v893 = vadd.f32 0.0, %v892
      %v894 = vpop.f32.mrb[0].mxu0
      %895 = vmatprep.mubr.bf16.mxu0 0
      %896 = vmatmul.mubr.bf16.gmra.mrb[0].mxu0 %v665
      %v897 = vpop.f32.mrb[0].mxu0
      %v898 = vpop.f32.mrb[0].mxu0
      %v899 = vpop.f32.mrb[0].mxu0
      %v900 = vadd.f32 0.0, %v899
      %v901 = vpop.f32.mrb[0].mxu0
      %902 = vmatprep.mubr.bf16.mxu0 0
      %903 = vmatmul.mubr.bf16.gmra.mrb[0].mxu0 %v666
      %v904 = vpop.f32.mrb[0].mxu0
      %v905 = vadd.f32 0.0, %v904
      %v906 = vpop.f32.mrb[0].mxu0
      %v907 = vpop.f32.mrb[0].mxu0
      %v908 = vpop.f32.mrb[0].mxu0
      %909 = vmatprep.mubr.bf16.mxu0 0
      %910 = vmatmul.mubr.bf16.gmra.mrb[0].mxu0 %v667
      %v911 = vpop.f32.mrb[0].mxu0
      %v912 = vadd.f32 0.0, %v911
      %v913 = vpop.f32.mrb[0].mxu0
      %v914 = vpop.f32.mrb[0].mxu0
      %v915 = vadd.f32 0.0, %v914
      %v916 = vpop.f32.mrb[0].mxu0
      %917 = vmatprep.mubr.bf16.mxu0 0
      %918 = vmatmul.mubr.bf16.gmra.mrb[0].mxu0 %v668
      %v919 = vpop.f32.mrb[0].mxu0
      %v920 = vpop.f32.mrb[0].mxu0
      %v921 = vpop.f32.mrb[0].mxu0
      %v922 = vadd.f32 0.0, %v921
      %v923 = vpop.f32.mrb[0].mxu0
      %924 = vmatprep.mubr.bf16.mxu0 0
      %925 = vmatmul.mubr.bf16.gmra.mrb[0].mxu0 %v669
      %v926 = vpop.f32.mrb[0].mxu0
      %v927 = vadd.f32 0.0, %v926
      %v928 = vpop.f32.mrb[0].mxu0
      %v929 = vpop.f32.mrb[0].mxu0
      %v930 = vpop.f32.mrb[0].mxu0
      %931 = vmatprep.mubr.bf16.mxu0 0
      %932 = vmatmul.mubr.bf16.gmra.mrb[0].mxu0 %v670
      %v933 = vpop.f32.mrb[0].mxu0
      %v934 = vadd.f32 0.0, %v933
      %v935 = vpop.f32.mrb[0].mxu0
      %v936 = vpop.f32.mrb[0].mxu0
      %v937 = vadd.f32 0.0, %v936
      %v938 = vpop.f32.mrb[0].mxu0
      %939 = vmatprep.mubr.bf16.mxu0 0
      %940 = vmatmul.mubr.bf16.gmra.mrb[0].mxu0 %v671
      %v941 = vpop.f32.mrb[0].mxu0
      %v942 = vpop.f32.mrb[0].mxu0
      %v943 = vpop.f32.mrb[0].mxu0
      %v944 = vadd.f32 0.0, %v943
      %v945 = vpop.f32.mrb[0].mxu0
      %946 = vmatprep.mubr.bf16.mxu0 0
      %947 = vmatmul.mubr.bf16.gmra.mrb[0].mxu0 %v672
      %v948 = vpop.f32.mrb[0].mxu0
      %v949 = vadd.f32 0.0, %v948
      %v950 = vpop.f32.mrb[0].mxu0
      %v951 = vpop.f32.mrb[0].mxu0
      %v952 = vpop.f32.mrb[0].mxu0
      %953 = vdwg.mxu0
      %v1002 = vunpack.c.l.b16 %v423
      %v1003 = vunpack.c.l.b16 %v424
      %v1004 = vunpack.c.l.b16 %v425
      %v1005 = vunpack.c.l.b16 %v426
      %v1006 = vunpack.c.l.b16 %v427
      %v1007 = vunpack.c.l.b16 %v428
      %v1008 = vunpack.c.l.b16 %v429
      %v1009 = vunpack.c.l.b16 %v430
      %v1010 = vunpack.c.l.b16 %v431
      %v1011 = vunpack.c.l.b16 %v432
      %v1012 = vunpack.c.l.b16 %v433
      %v1013 = vunpack.c.l.b16 %v434
      %v1014 = vunpack.c.l.b16 %v435
      %v1015 = vunpack.c.l.b16 %v436
      %v1016 = vunpack.c.l.b16 %v437
      %v1017 = vunpack.c.l.b16 %v438
      %v1018 = vunpack.c.l.b16 %v439
      %v1019 = vunpack.c.l.b16 %v440
      %v1020 = vunpack.c.l.b16 %v441
      %v1021 = vunpack.c.l.b16 %v442
      %v1022 = vunpack.c.l.b16 %v443
      %v1023 = vunpack.c.l.b16 %v444
      %v1024 = vunpack.c.l.b16 %v445
      %v1025 = vunpack.c.l.b16 %v446
      %v1026 = vunpack.c.l.b16 %v447
      %v1027 = vunpack.c.l.b16 %v448
      %v1028 = vunpack.c.l.b16 %v449
      %v1029 = vunpack.c.l.b16 %v450
      %v1030 = vunpack.c.l.b16 %v451
      %v1031 = vunpack.c.l.b16 %v452
      %v1032 = vunpack.c.l.b16 %v453
      %v1033 = vunpack.c.l.b16 %v454
      %v1034 = vunpack.c.l.b16 %v455
      %v1035 = vunpack.c.l.b16 %v456
      %v1036 = vunpack.c.l.b16 %v457
      %v1037 = vunpack.c.l.b16 %v458
      %v1038 = vunpack.c.l.b16 %v459
      %v1039 = vunpack.c.l.b16 %v460
      %v1040 = vunpack.c.l.b16 %v461
      %v1041 = vunpack.c.l.b16 %v462
      %v1042 = vunpack.c.l.b16 %v463
      %v1043 = vunpack.c.l.b16 %v464
      %v1044 = vunpack.c.l.b16 %v465
      %v1045 = vunpack.c.l.b16 %v466
      %v1046 = vunpack.c.l.b16 %v467
      %v1047 = vunpack.c.l.b16 %v468
      %v1048 = vunpack.c.l.b16 %v469
      %v1049 = vunpack.c.l.b16 %v470
      %v1050 = vpack.c.b16 %v1003, %v1002
      %v1051 = vpack.c.b16 %v1005, %v1004
      %v1052 = vpack.c.b16 %v1007, %v1006
      %v1053 = vpack.c.b16 %v1009, %v1008
      %v1054 = vpack.c.b16 %v1011, %v1010
      %v1055 = vpack.c.b16 %v1013, %v1012
      %v1056 = vpack.c.b16 %v1015, %v1014
      %v1057 = vpack.c.b16 %v1017, %v1016
      %v1058 = vpack.c.b16 %v1019, %v1018
      %v1059 = vpack.c.b16 %v1021, %v1020
      %v1060 = vpack.c.b16 %v1023, %v1022
      %v1061 = vpack.c.b16 %v1025, %v1024
      %v1062 = vpack.c.b16 %v1027, %v1026
      %v1063 = vpack.c.b16 %v1029, %v1028
      %v1064 = vpack.c.b16 %v1031, %v1030
      %v1065 = vpack.c.b16 %v1033, %v1032
      %v1066 = vpack.c.b16 %v1035, %v1034
      %v1067 = vpack.c.b16 %v1037, %v1036
      %v1068 = vpack.c.b16 %v1039, %v1038
      %v1069 = vpack.c.b16 %v1041, %v1040
      %v1070 = vpack.c.b16 %v1043, %v1042
      %v1071 = vpack.c.b16 %v1045, %v1044
      %v1072 = vpack.c.b16 %v1047, %v1046
      %v1073 = vpack.c.b16 %v1049, %v1048
      %v1114 = vunpack.c.l.b16 %v471
      %v1115 = vunpack.c.l.b16 %v472
      %v1116 = vunpack.c.l.b16 %v473
      %v1117 = vunpack.c.l.b16 %v474
      %v1118 = vunpack.c.l.b16 %v475
      %v1119 = vunpack.c.l.b16 %v476
      %v1120 = vunpack.c.l.b16 %v477
      %v1121 = vunpack.c.l.b16 %v478
      %v1122 = vunpack.c.l.b16 %v479
      %v1123 = vunpack.c.l.b16 %v480
      %v1124 = vunpack.c.l.b16 %v481
      %v1125 = vunpack.c.l.b16 %v482
      %v1126 = vunpack.c.l.b16 %v483
      %v1127 = vunpack.c.l.b16 %v484
      %v1128 = vunpack.c.l.b16 %v485
      %v1129 = vunpack.c.l.b16 %v486
      %v1130 = vpack.c.b16 %v1115, %v1114
      %v1131 = vpack.c.b16 %v1117, %v1116
      %v1132 = vpack.c.b16 %v1119, %v1118
      %v1133 = vpack.c.b16 %v1121, %v1120
      %v1134 = vpack.c.b16 %v1123, %v1122
      %v1135 = vpack.c.b16 %v1125, %v1124
      %v1136 = vpack.c.b16 %v1127, %v1126
      %v1137 = vpack.c.b16 %v1129, %v1128
      %1146 = vmatprep.subr.bf16.mxu0 0
      %1147 = vmatpush1.bf16.msra.mxu0 %v1130
      %1148 = vmatprep.subr.bf16.mxu0 0
      %1149 = vmatpush1.bf16.msra.mxu0 %v1131
      %1150 = vmatprep.subr.bf16.mxu0 0
      %1151 = vmatpush1.bf16.msra.mxu0 %v1132
      %1152 = vmatprep.subr.bf16.mxu0 0
      %1153 = vmatpush1.bf16.msra.mxu0 %v1133
      %1154 = vmatprep.subr.bf16.mxu0 0
      %1155 = vmatpush1.bf16.msra.mxu0 %v1134
      %1156 = vmatprep.subr.bf16.mxu0 0
      %1157 = vmatpush1.bf16.msra.mxu0 %v1135
      %1158 = vmatprep.subr.bf16.mxu0 0
      %1159 = vmatpush1.bf16.msra.mxu0 %v1136
      %1160 = vmatprep.subr.bf16.mxu0 0
      %1161 = vmatpush1.bf16.msra.mxu0 %v1137
      %1162 = vmatprep.subr.bf16.mxu0 0
      %1163 = vmatpush1.bf16.msra.mxu0 0
      %1164 = vmatprep.subr.bf16.mxu0 0
      %1165 = vmatpush1.bf16.msra.mxu0 0
      %1166 = vmatprep.subr.bf16.mxu0 0
      %1167 = vmatpush1.bf16.msra.mxu0 0
      %1168 = vmatprep.subr.bf16.mxu0 0
      %1169 = vmatpush1.bf16.msra.mxu0 0
      %1170 = vmatprep.subr.bf16.mxu0 0
      %1171 = vmatpush1.bf16.msra.mxu0 0
      %1172 = vmatprep.subr.bf16.mxu0 0
      %1173 = vmatpush1.bf16.msra.mxu0 0
      %1174 = vmatprep.subr.bf16.mxu0 0
      %1175 = vmatpush1.bf16.msra.mxu0 0
      %1176 = vmatprep.subr.bf16.mxu0 0
      %1177 = vmatpush1.bf16.msra.mxu0 0
      %1178 = vmatprep.mubr.bf16.mxu0 0
      %1179 = vmatmul.mubr.bf16.gmra.mrb[0].mxu0 %v1050
      %v1180 = vpop.f32.mrb[0].mxu0
      %v1181 = vadd.f32 %v780, %v1180
      %v1182 = vpop.f32.mrb[0].mxu0
      %v1183 = vpop.f32.mrb[0].mxu0
      %v1184 = vadd.f32 %v783, %v1183
      %v1185 = vpop.f32.mrb[0].mxu0
      %1186 = vmatprep.mubr.bf16.mxu0 0
      %1187 = vmatmul.mubr.bf16.gmra.mrb[0].mxu0 %v1051
      %v1188 = vpop.f32.mrb[0].mxu0
      %v1189 = vpop.f32.mrb[0].mxu0
      %v1190 = vpop.f32.mrb[0].mxu0
      %v1191 = vadd.f32 %v790, %v1190
      %v1192 = vpop.f32.mrb[0].mxu0
      %1193 = vmatprep.mubr.bf16.mxu0 0
      %1194 = vmatmul.mubr.bf16.gmra.mrb[0].mxu0 %v1052
      %v1195 = vpop.f32.mrb[0].mxu0
      %v1196 = vadd.f32 %v795, %v1195
      %v1197 = vpop.f32.mrb[0].mxu0
      %v1198 = vpop.f32.mrb[0].mxu0
      %v1199 = vpop.f32.mrb[0].mxu0
      %1200 = vmatprep.mubr.bf16.mxu0 0
      %1201 = vmatmul.mubr.bf16.gmra.mrb[0].mxu0 %v1053
      %v1202 = vpop.f32.mrb[0].mxu0
      %v1203 = vadd.f32 %v802, %v1202
      %v1204 = vpop.f32.mrb[0].mxu0
      %v1205 = vpop.f32.mrb[0].mxu0
      %v1206 = vadd.f32 %v805, %v1205
      %v1207 = vpop.f32.mrb[0].mxu0
      %1208 = vmatprep.mubr.bf16.mxu0 0
      %1209 = vmatmul.mubr.bf16.gmra.mrb[0].mxu0 %v1054
      %v1210 = vpop.f32.mrb[0].mxu0
      %v1211 = vpop.f32.mrb[0].mxu0
      %v1212 = vpop.f32.mrb[0].mxu0
      %v1213 = vadd.f32 %v812, %v1212
      %v1214 = vpop.f32.mrb[0].mxu0
      %1215 = vmatprep.mubr.bf16.mxu0 0
      %1216 = vmatmul.mubr.bf16.gmra.mrb[0].mxu0 %v1055
      %v1217 = vpop.f32.mrb[0].mxu0
      %v1218 = vadd.f32 %v817, %v1217
      %v1219 = vpop.f32.mrb[0].mxu0
      %v1220 = vpop.f32.mrb[0].mxu0
      %v1221 = vpop.f32.mrb[0].mxu0
      %1222 = vmatprep.mubr.bf16.mxu0 0
      %1223 = vmatmul.mubr.bf16.gmra.mrb[0].mxu0 %v1056
      %v1224 = vpop.f32.mrb[0].mxu0
      %v1225 = vadd.f32 %v824, %v1224
      %v1226 = vpop.f32.mrb[0].mxu0
      %v1227 = vpop.f32.mrb[0].mxu0
      %v1228 = vadd.f32 %v827, %v1227
      %v1229 = vpop.f32.mrb[0].mxu0
      %1230 = vmatprep.mubr.bf16.mxu0 0
      %1231 = vmatmul.mubr.bf16.gmra.mrb[0].mxu0 %v1057
      %v1232 = vpop.f32.mrb[0].mxu0
      %v1233 = vpop.f32.mrb[0].mxu0
      %v1234 = vpop.f32.mrb[0].mxu0
      %v1235 = vadd.f32 %v834, %v1234
      %v1236 = vpop.f32.mrb[0].mxu0
      %1237 = vmatprep.mubr.bf16.mxu0 0
      %1238 = vmatmul.mubr.bf16.gmra.mrb[0].mxu0 %v1058
      %v1239 = vpop.f32.mrb[0].mxu0
      %v1240 = vadd.f32 %v839, %v1239
      %v1241 = vpop.f32.mrb[0].mxu0
      %v1242 = vpop.f32.mrb[0].mxu0
      %v1243 = vpop.f32.mrb[0].mxu0
      %1244 = vmatprep.mubr.bf16.mxu0 0
      %1245 = vmatmul.mubr.bf16.gmra.mrb[0].mxu0 %v1059
      %v1246 = vpop.f32.mrb[0].mxu0
      %v1247 = vadd.f32 %v846, %v1246
      %v1248 = vpop.f32.mrb[0].mxu0
      %v1249 = vpop.f32.mrb[0].mxu0
      %v1250 = vadd.f32 %v849, %v1249
      %v1251 = vpop.f32.mrb[0].mxu0
      %1252 = vmatprep.mubr.bf16.mxu0 0
      %1253 = vmatmul.mubr.bf16.gmra.mrb[0].mxu0 %v1060
      %v1254 = vpop.f32.mrb[0].mxu0
      %v1255 = vpop.f32.mrb[0].mxu0
      %v1256 = vpop.f32.mrb[0].mxu0
      %v1257 = vadd.f32 %v856, %v1256
      %v1258 = vpop.f32.mrb[0].mxu0
      %1259 = vmatprep.mubr.bf16.mxu0 0
      %1260 = vmatmul.mubr.bf16.gmra.mrb[0].mxu0 %v1061
      %v1261 = vpop.f32.mrb[0].mxu0
      %v1262 = vadd.f32 %v861, %v1261
      %v1263 = vpop.f32.mrb[0].mxu0
      %v1264 = vpop.f32.mrb[0].mxu0
      %v1265 = vpop.f32.mrb[0].mxu0
      %1266 = vmatprep.mubr.bf16.mxu0 0
      %1267 = vmatmul.mubr.bf16.gmra.mrb[0].mxu0 %v1062
      %v1268 = vpop.f32.mrb[0].mxu0
      %v1269 = vadd.f32 %v868, %v1268
      %v1270 = vpop.f32.mrb[0].mxu0
      %v1271 = vpop.f32.mrb[0].mxu0
      %v1272 = vadd.f32 %v871, %v1271
      %v1273 = vpop.f32.mrb[0].mxu0
      %1274 = vmatprep.mubr.bf16.mxu0 0
      %1275 = vmatmul.mubr.bf16.gmra.mrb[0].mxu0 %v1063
      %v1276 = vpop.f32.mrb[0].mxu0
      %v1277 = vpop.f32.mrb[0].mxu0
      %v1278 = vpop.f32.mrb[0].mxu0
      %v1279 = vadd.f32 %v878, %v1278
      %v1280 = vpop.f32.mrb[0].mxu0
      %1281 = vmatprep.mubr.bf16.mxu0 0
      %1282 = vmatmul.mubr.bf16.gmra.mrb[0].mxu0 %v1064
      %v1283 = vpop.f32.mrb[0].mxu0
      %v1284 = vadd.f32 %v883, %v1283
      %v1285 = vpop.f32.mrb[0].mxu0
      %v1286 = vpop.f32.mrb[0].mxu0
      %v1287 = vpop.f32.mrb[0].mxu0
      %1288 = vmatprep.mubr.bf16.mxu0 0
      %1289 = vmatmul.mubr.bf16.gmra.mrb[0].mxu0 %v1065
      %v1290 = vpop.f32.mrb[0].mxu0
      %v1291 = vadd.f32 %v890, %v1290
      %v1292 = vpop.f32.mrb[0].mxu0
      %v1293 = vpop.f32.mrb[0].mxu0
      %v1294 = vadd.f32 %v893, %v1293
      %v1295 = vpop.f32.mrb[0].mxu0
      %1296 = vmatprep.mubr.bf16.mxu0 0
      %1297 = vmatmul.mubr.bf16.gmra.mrb[0].mxu0 %v1066
      %v1298 = vpop.f32.mrb[0].mxu0
      %v1299 = vpop.f32.mrb[0].mxu0
      %v1300 = vpop.f32.mrb[0].mxu0
      %v1301 = vadd.f32 %v900, %v1300
      %v1302 = vpop.f32.mrb[0].mxu0
      %1303 = vmatprep.mubr.bf16.mxu0 0
      %1304 = vmatmul.mubr.bf16.gmra.mrb[0].mxu0 %v1067
      %v1305 = vpop.f32.mrb[0].mxu0
      %v1306 = vadd.f32 %v905, %v1305
      %v1307 = vpop.f32.mrb[0].mxu0
      %v1308 = vpop.f32.mrb[0].mxu0
      %v1309 = vpop.f32.mrb[0].mxu0
      %1310 = vmatprep.mubr.bf16.mxu0 0
      %1311 = vmatmul.mubr.bf16.gmra.mrb[0].mxu0 %v1068
      %v1312 = vpop.f32.mrb[0].mxu0
      %v1313 = vadd.f32 %v912, %v1312
      %v1314 = vpop.f32.mrb[0].mxu0
      %v1315 = vpop.f32.mrb[0].mxu0
      %v1316 = vadd.f32 %v915, %v1315
      %v1317 = vpop.f32.mrb[0].mxu0
      %1318 = vmatprep.mubr.bf16.mxu0 0
      %1319 = vmatmul.mubr.bf16.gmra.mrb[0].mxu0 %v1069
      %v1320 = vpop.f32.mrb[0].mxu0
      %v1321 = vpop.f32.mrb[0].mxu0
      %v1322 = vpop.f32.mrb[0].mxu0
      %v1323 = vadd.f32 %v922, %v1322
      %v1324 = vpop.f32.mrb[0].mxu0
      %1325 = vmatprep.mubr.bf16.mxu0 0
      %1326 = vmatmul.mubr.bf16.gmra.mrb[0].mxu0 %v1070
      %v1327 = vpop.f32.mrb[0].mxu0
      %v1328 = vadd.f32 %v927, %v1327
      %v1329 = vpop.f32.mrb[0].mxu0
      %v1330 = vpop.f32.mrb[0].mxu0
      %v1331 = vpop.f32.mrb[0].mxu0
      %1332 = vmatprep.mubr.bf16.mxu0 0
      %1333 = vmatmul.mubr.bf16.gmra.mrb[0].mxu0 %v1071
      %v1334 = vpop.f32.mrb[0].mxu0
      %v1335 = vadd.f32 %v934, %v1334
      %v1336 = vpop.f32.mrb[0].mxu0
      %v1337 = vpop.f32.mrb[0].mxu0
      %v1338 = vadd.f32 %v937, %v1337
      %v1339 = vpop.f32.mrb[0].mxu0
      %1340 = vmatprep.mubr.bf16.mxu0 0
      %1341 = vmatmul.mubr.bf16.gmra.mrb[0].mxu0 %v1072
      %v1342 = vpop.f32.mrb[0].mxu0
      %v1343 = vpop.f32.mrb[0].mxu0
      %v1344 = vpop.f32.mrb[0].mxu0
      %v1345 = vadd.f32 %v944, %v1344
      %v1346 = vpop.f32.mrb[0].mxu0
      %1347 = vmatprep.mubr.bf16.mxu0 0
      %1348 = vmatmul.mubr.bf16.gmra.mrb[0].mxu0 %v1073
      %v1349 = vpop.f32.mrb[0].mxu0
      %v1350 = vadd.f32 %v949, %v1349
      %v1351 = vpop.f32.mrb[0].mxu0
      %v1352 = vpop.f32.mrb[0].mxu0
      %v1353 = vpop.f32.mrb[0].mxu0
      %1354 = vdwg.mxu0
      %s1355 = scalar_lea.vmem %s416, 24 [#allocation2]
      %v1356 = vld [vmem:[%s1355] sm:$0xf]
      %v1357 = vld [vmem:[%s1355 + $0x4] sm:$0xf]
      %v1358 = vld [vmem:[%s1355 + $0x8] sm:$0xf]
      %v1359 = vld [vmem:[%s1355 + $0xc] sm:$0xf]
      %v1360 = vld [vmem:[%s1355 + $0x10] sm:$0xf]
      %v1361 = vld [vmem:[%s1355 + $0x14] sm:$0xf]
      %v1362 = vld [vmem:[%s1355 + $0x18] sm:$0xf]
      %v1363 = vld [vmem:[%s1355 + $0x1c] sm:$0xf]
      %v1364 = vld [vmem:[%s1355 + $0x20] sm:$0xf]
      %v1365 = vld [vmem:[%s1355 + $0x24] sm:$0xf]
      %v1366 = vld [vmem:[%s1355 + $0x28] sm:$0xf]
      %v1367 = vld [vmem:[%s1355 + $0x2c] sm:$0xf]
      %v1368 = vld [vmem:[%s1355 + $0x30] sm:$0xf]
      %v1369 = vld [vmem:[%s1355 + $0x34] sm:$0xf]
      %v1370 = vld [vmem:[%s1355 + $0x38] sm:$0xf]
      %v1371 = vld [vmem:[%s1355 + $0x3c] sm:$0xf]
      %v1372 = vld [vmem:[%s1355 + $0x40] sm:$0xf]
      %v1373 = vld [vmem:[%s1355 + $0x44] sm:$0xf]
      %v1374 = vld [vmem:[%s1355 + $0x48] sm:$0xf]
      %v1375 = vld [vmem:[%s1355 + $0x4c] sm:$0xf]
      %v1376 = vld [vmem:[%s1355 + $0x50] sm:$0xf]
      %v1377 = vld [vmem:[%s1355 + $0x54] sm:$0xf]
      %v1378 = vld [vmem:[%s1355 + $0x58] sm:$0xf]
      %v1379 = vld [vmem:[%s1355 + $0x5c] sm:$0xf]
      %v1380 = vld [vmem:[%s1355 + $0x60] sm:$0xf]
      %v1381 = vld [vmem:[%s1355 + $0x64] sm:$0xf]
      %v1382 = vld [vmem:[%s1355 + $0x68] sm:$0xf]
      %v1383 = vld [vmem:[%s1355 + $0x6c] sm:$0xf]
      %v1384 = vld [vmem:[%s1355 + $0x70] sm:$0xf]
      %v1385 = vld [vmem:[%s1355 + $0x74] sm:$0xf]
      %v1386 = vld [vmem:[%s1355 + $0x78] sm:$0xf]
      %v1387 = vld [vmem:[%s1355 + $0x7c] sm:$0xf]
      %v1388 = vld [vmem:[%s1355 + $0x80] sm:$0xf]
      %v1389 = vld [vmem:[%s1355 + $0x84] sm:$0xf]
      %v1390 = vld [vmem:[%s1355 + $0x88] sm:$0xf]
      %v1391 = vld [vmem:[%s1355 + $0x8c] sm:$0xf]
      %v1392 = vld [vmem:[%s1355 + $0x90] sm:$0xf]
      %v1393 = vld [vmem:[%s1355 + $0x94] sm:$0xf]
      %v1394 = vld [vmem:[%s1355 + $0x98] sm:$0xf]
      %v1395 = vld [vmem:[%s1355 + $0x9c] sm:$0xf]
      %v1396 = vld [vmem:[%s1355 + $0xa0] sm:$0xf]
      %v1397 = vld [vmem:[%s1355 + $0xa4] sm:$0xf]
      %v1398 = vld [vmem:[%s1355 + $0xa8] sm:$0xf]
      %v1399 = vld [vmem:[%s1355 + $0xac] sm:$0xf]
      %v1400 = vld [vmem:[%s1355 + $0xb0] sm:$0xf]
      %v1401 = vld [vmem:[%s1355 + $0xb4] sm:$0xf]
      %v1402 = vld [vmem:[%s1355 + $0xb8] sm:$0xf]
      %v1403 = vld [vmem:[%s1355 + $0xbc] sm:$0xf]
      %s1404 = scalar_lea.vmem %s1, 384
      %v1405 = vld [vmem:[%s1404] sm:$0xf]
      %v1406 = vld [vmem:[%s1404 + $0x4] sm:$0xf]
      %v1407 = vld [vmem:[%s1404 + $0x8] sm:$0xf]
      %v1408 = vld [vmem:[%s1404 + $0xc] sm:$0xf]
      %v1409 = vld [vmem:[%s1404 + $0x10] sm:$0xf]
      %v1410 = vld [vmem:[%s1404 + $0x14] sm:$0xf]
      %v1411 = vld [vmem:[%s1404 + $0x18] sm:$0xf]
      %v1412 = vld [vmem:[%s1404 + $0x1c] sm:$0xf]
      %v1413 = vld [vmem:[%s1404 + $0x20] sm:$0xf]
      %v1414 = vld [vmem:[%s1404 + $0x24] sm:$0xf]
      %v1415 = vld [vmem:[%s1404 + $0x28] sm:$0xf]
      %v1416 = vld [vmem:[%s1404 + $0x2c] sm:$0xf]
      %v1417 = vld [vmem:[%s1404 + $0x30] sm:$0xf]
      %v1418 = vld [vmem:[%s1404 + $0x34] sm:$0xf]
      %v1419 = vld [vmem:[%s1404 + $0x38] sm:$0xf]
      %v1420 = vld [vmem:[%s1404 + $0x3c] sm:$0xf]
      %v1469 = vunpack.c.l.b16 %v1356
      %v1470 = vunpack.c.l.b16 %v1357
      %v1471 = vunpack.c.l.b16 %v1358
      %v1472 = vunpack.c.l.b16 %v1359
      %v1473 = vunpack.c.l.b16 %v1360
      %v1474 = vunpack.c.l.b16 %v1361
      %v1475 = vunpack.c.l.b16 %v1362
      %v1476 = vunpack.c.l.b16 %v1363
      %v1477 = vunpack.c.l.b16 %v1364
      %v1478 = vunpack.c.l.b16 %v1365
      %v1479 = vunpack.c.l.b16 %v1366
      %v1480 = vunpack.c.l.b16 %v1367
      %v1481 = vunpack.c.l.b16 %v1368
      %v1482 = vunpack.c.l.b16 %v1369
      %v1483 = vunpack.c.l.b16 %v1370
      %v1484 = vunpack.c.l.b16 %v1371
      %v1485 = vunpack.c.l.b16 %v1372
      %v1486 = vunpack.c.l.b16 %v1373
      %v1487 = vunpack.c.l.b16 %v1374
      %v1488 = vunpack.c.l.b16 %v1375
      %v1489 = vunpack.c.l.b16 %v1376
      %v1490 = vunpack.c.l.b16 %v1377
      %v1491 = vunpack.c.l.b16 %v1378
      %v1492 = vunpack.c.l.b16 %v1379
      %v1493 = vunpack.c.l.b16 %v1380
      %v1494 = vunpack.c.l.b16 %v1381
      %v1495 = vunpack.c.l.b16 %v1382
      %v1496 = vunpack.c.l.b16 %v1383
      %v1497 = vunpack.c.l.b16 %v1384
      %v1498 = vunpack.c.l.b16 %v1385
      %v1499 = vunpack.c.l.b16 %v1386
      %v1500 = vunpack.c.l.b16 %v1387
      %v1501 = vunpack.c.l.b16 %v1388
      %v1502 = vunpack.c.l.b16 %v1389
      %v1503 = vunpack.c.l.b16 %v1390
      %v1504 = vunpack.c.l.b16 %v1391
      %v1505 = vunpack.c.l.b16 %v1392
      %v1506 = vunpack.c.l.b16 %v1393
      %v1507 = vunpack.c.l.b16 %v1394
      %v1508 = vunpack.c.l.b16 %v1395
      %v1509 = vunpack.c.l.b16 %v1396
      %v1510 = vunpack.c.l.b16 %v1397
      %v1511 = vunpack.c.l.b16 %v1398
      %v1512 = vunpack.c.l.b16 %v1399
      %v1513 = vunpack.c.l.b16 %v1400
      %v1514 = vunpack.c.l.b16 %v1401
      %v1515 = vunpack.c.l.b16 %v1402
      %v1516 = vunpack.c.l.b16 %v1403
      %v1517 = vpack.c.b16 %v1470, %v1469
      %v1518 = vpack.c.b16 %v1472, %v1471
      %v1519 = vpack.c.b16 %v1474, %v1473
      %v1520 = vpack.c.b16 %v1476, %v1475
      %v1521 = vpack.c.b16 %v1478, %v1477
      %v1522 = vpack.c.b16 %v1480, %v1479
      %v1523 = vpack.c.b16 %v1482, %v1481
      %v1524 = vpack.c.b16 %v1484, %v1483
      %v1525 = vpack.c.b16 %v1486, %v1485
      %v1526 = vpack.c.b16 %v1488, %v1487
      %v1527 = vpack.c.b16 %v1490, %v1489
      %v1528 = vpack.c.b16 %v1492, %v1491
      %v1529 = vpack.c.b16 %v1494, %v1493
      %v1530 = vpack.c.b16 %v1496, %v1495
      %v1531 = vpack.c.b16 %v1498, %v1497
      %v1532 = vpack.c.b16 %v1500, %v1499
      %v1533 = vpack.c.b16 %v1502, %v1501
      %v1534 = vpack.c.b16 %v1504, %v1503
      %v1535 = vpack.c.b16 %v1506, %v1505
      %v1536 = vpack.c.b16 %v1508, %v1507
      %v1537 = vpack.c.b16 %v1510, %v1509
      %v1538 = vpack.c.b16 %v1512, %v1511
      %v1539 = vpack.c.b16 %v1514, %v1513
      %v1540 = vpack.c.b16 %v1516, %v1515
      %v1581 = vunpack.c.l.b16 %v1405
      %v1582 = vunpack.c.l.b16 %v1406
      %v1583 = vunpack.c.l.b16 %v1407
      %v1584 = vunpack.c.l.b16 %v1408
      %v1585 = vunpack.c.l.b16 %v1409
      %v1586 = vunpack.c.l.b16 %v1410
      %v1587 = vunpack.c.l.b16 %v1411
      %v1588 = vunpack.c.l.b16 %v1412
      %v1589 = vunpack.c.l.b16 %v1413
      %v1590 = vunpack.c.l.b16 %v1414
      %v1591 = vunpack.c.l.b16 %v1415
      %v1592 = vunpack.c.l.b16 %v1416
      %v1593 = vunpack.c.l.b16 %v1417
      %v1594 = vunpack.c.l.b16 %v1418
      %v1595 = vunpack.c.l.b16 %v1419
      %v1596 = vunpack.c.l.b16 %v1420
      %v1597 = vpack.c.b16 %v1582, %v1581
      %v1598 = vpack.c.b16 %v1584, %v1583
      %v1599 = vpack.c.b16 %v1586, %v1585
      %v1600 = vpack.c.b16 %v1588, %v1587
      %v1601 = vpack.c.b16 %v1590, %v1589
      %v1602 = vpack.c.b16 %v1592, %v1591
      %v1603 = vpack.c.b16 %v1594, %v1593
      %v1604 = vpack.c.b16 %v1596, %v1595
      %1613 = vmatprep.subr.bf16.mxu0 0
      %1614 = vmatpush1.bf16.msra.mxu0 %v1597
      %1615 = vmatprep.subr.bf16.mxu0 0
      %1616 = vmatpush1.bf16.msra.mxu0 %v1598
      %1617 = vmatprep.subr.bf16.mxu0 0
      %1618 = vmatpush1.bf16.msra.mxu0 %v1599
      %1619 = vmatprep.subr.bf16.mxu0 0
      %1620 = vmatpush1.bf16.msra.mxu0 %v1600
      %1621 = vmatprep.subr.bf16.mxu0 0
      %1622 = vmatpush1.bf16.msra.mxu0 %v1601
      %1623 = vmatprep.subr.bf16.mxu0 0
      %1624 = vmatpush1.bf16.msra.mxu0 %v1602
      %1625 = vmatprep.subr.bf16.mxu0 0
      %1626 = vmatpush1.bf16.msra.mxu0 %v1603
      %1627 = vmatprep.subr.bf16.mxu0 0
      %1628 = vmatpush1.bf16.msra.mxu0 %v1604
      %1629 = vmatprep.subr.bf16.mxu0 0
      %1630 = vmatpush1.bf16.msra.mxu0 0
      %1631 = vmatprep.subr.bf16.mxu0 0
      %1632 = vmatpush1.bf16.msra.mxu0 0
      %1633 = vmatprep.subr.bf16.mxu0 0
      %1634 = vmatpush1.bf16.msra.mxu0 0
      %1635 = vmatprep.subr.bf16.mxu0 0
      %1636 = vmatpush1.bf16.msra.mxu0 0
      %1637 = vmatprep.subr.bf16.mxu0 0
      %1638 = vmatpush1.bf16.msra.mxu0 0
      %1639 = vmatprep.subr.bf16.mxu0 0
      %1640 = vmatpush1.bf16.msra.mxu0 0
      %1641 = vmatprep.subr.bf16.mxu0 0
      %1642 = vmatpush1.bf16.msra.mxu0 0
      %1643 = vmatprep.subr.bf16.mxu0 0
      %1644 = vmatpush1.bf16.msra.mxu0 0
      %1645 = vmatprep.mubr.bf16.mxu0 0
      %1646 = vmatmul.mubr.bf16.gmra.mrb[0].mxu0 %v1517
      %v1647 = vpop.f32.mrb[0].mxu0
      %v1648 = vadd.f32 0.0, %v1647
      %v1649 = vpop.f32.mrb[0].mxu0
      %v1650 = vpop.f32.mrb[0].mxu0
      %v1651 = vadd.f32 0.0, %v1650
      %v1652 = vpop.f32.mrb[0].mxu0
      %1653 = vmatprep.mubr.bf16.mxu0 0
      %1654 = vmatmul.mubr.bf16.gmra.mrb[0].mxu0 %v1518
      %v1655 = vpop.f32.mrb[0].mxu0
      %v1656 = vpop.f32.mrb[0].mxu0
      %v1657 = vpop.f32.mrb[0].mxu0
      %v1658 = vadd.f32 0.0, %v1657
      %v1659 = vpop.f32.mrb[0].mxu0
      %1660 = vmatprep.mubr.bf16.mxu0 0
      %1661 = vmatmul.mubr.bf16.gmra.mrb[0].mxu0 %v1519
      %v1662 = vpop.f32.mrb[0].mxu0
      %v1663 = vadd.f32 0.0, %v1662
      %v1664 = vpop.f32.mrb[0].mxu0
      %v1665 = vpop.f32.mrb[0].mxu0
      %v1666 = vpop.f32.mrb[0].mxu0
      %1667 = vmatprep.mubr.bf16.mxu0 0
      %1668 = vmatmul.mubr.bf16.gmra.mrb[0].mxu0 %v1520
      %v1669 = vpop.f32.mrb[0].mxu0
      %v1670 = vadd.f32 0.0, %v1669
      %v1671 = vpop.f32.mrb[0].mxu0
      %v1672 = vpop.f32.mrb[0].mxu0
      %v1673 = vadd.f32 0.0, %v1672
      %v1674 = vpop.f32.mrb[0].mxu0
      %1675 = vmatprep.mubr.bf16.mxu0 0
      %1676 = vmatmul.mubr.bf16.gmra.mrb[0].mxu0 %v1521
      %v1677 = vpop.f32.mrb[0].mxu0
      %v1678 = vpop.f32.mrb[0].mxu0
      %v1679 = vpop.f32.mrb[0].mxu0
      %v1680 = vadd.f32 0.0, %v1679
      %v1681 = vpop.f32.mrb[0].mxu0
      %1682 = vmatprep.mubr.bf16.mxu0 0
      %1683 = vmatmul.mubr.bf16.gmra.mrb[0].mxu0 %v1522
      %v1684 = vpop.f32.mrb[0].mxu0
      %v1685 = vadd.f32 0.0, %v1684
      %v1686 = vpop.f32.mrb[0].mxu0
      %v1687 = vpop.f32.mrb[0].mxu0
      %v1688 = vpop.f32.mrb[0].mxu0
      %1689 = vmatprep.mubr.bf16.mxu0 0
      %1690 = vmatmul.mubr.bf16.gmra.mrb[0].mxu0 %v1523
      %v1691 = vpop.f32.mrb[0].mxu0
      %v1692 = vadd.f32 0.0, %v1691
      %v1693 = vpop.f32.mrb[0].mxu0
      %v1694 = vpop.f32.mrb[0].mxu0
      %v1695 = vadd.f32 0.0, %v1694
      %v1696 = vpop.f32.mrb[0].mxu0
      %1697 = vmatprep.mubr.bf16.mxu0 0
      %1698 = vmatmul.mubr.bf16.gmra.mrb[0].mxu0 %v1524
      %v1699 = vpop.f32.mrb[0].mxu0
      %v1700 = vpop.f32.mrb[0].mxu0
      %v1701 = vpop.f32.mrb[0].mxu0
      %v1702 = vadd.f32 0.0, %v1701
      %v1703 = vpop.f32.mrb[0].mxu0
      %1704 = vmatprep.mubr.bf16.mxu0 0
      %1705 = vmatmul.mubr.bf16.gmra.mrb[0].mxu0 %v1525
      %v1706 = vpop.f32.mrb[0].mxu0
      %v1707 = vadd.f32 0.0, %v1706
      %v1708 = vpop.f32.mrb[0].mxu0
      %v1709 = vpop.f32.mrb[0].mxu0
      %v1710 = vpop.f32.mrb[0].mxu0
      %1711 = vmatprep.mubr.bf16.mxu0 0
      %1712 = vmatmul.mubr.bf16.gmra.mrb[0].mxu0 %v1526
      %v1713 = vpop.f32.mrb[0].mxu0
      %v1714 = vadd.f32 0.0, %v1713
      %v1715 = vpop.f32.mrb[0].mxu0
      %v1716 = vpop.f32.mrb[0].mxu0
      %v1717 = vadd.f32 0.0, %v1716
      %v1718 = vpop.f32.mrb[0].mxu0
      %1719 = vmatprep.mubr.bf16.mxu0 0
      %1720 = vmatmul.mubr.bf16.gmra.mrb[0].mxu0 %v1527
      %v1721 = vpop.f32.mrb[0].mxu0
      %v1722 = vpop.f32.mrb[0].mxu0
      %v1723 = vpop.f32.mrb[0].mxu0
      %v1724 = vadd.f32 0.0, %v1723
      %v1725 = vpop.f32.mrb[0].mxu0
      %1726 = vmatprep.mubr.bf16.mxu0 0
      %1727 = vmatmul.mubr.bf16.gmra.mrb[0].mxu0 %v1528
      %v1728 = vpop.f32.mrb[0].mxu0
      %v1729 = vadd.f32 0.0, %v1728
      %v1730 = vpop.f32.mrb[0].mxu0
      %v1731 = vpop.f32.mrb[0].mxu0
      %v1732 = vpop.f32.mrb[0].mxu0
      %1733 = vmatprep.mubr.bf16.mxu0 0
      %1734 = vmatmul.mubr.bf16.gmra.mrb[0].mxu0 %v1529
      %v1735 = vpop.f32.mrb[0].mxu0
      %v1736 = vadd.f32 0.0, %v1735
      %v1737 = vpop.f32.mrb[0].mxu0
      %v1738 = vpop.f32.mrb[0].mxu0
      %v1739 = vadd.f32 0.0, %v1738
      %v1740 = vpop.f32.mrb[0].mxu0
      %1741 = vmatprep.mubr.bf16.mxu0 0
      %1742 = vmatmul.mubr.bf16.gmra.mrb[0].mxu0 %v1530
      %v1743 = vpop.f32.mrb[0].mxu0
      %v1744 = vpop.f32.mrb[0].mxu0
      %v1745 = vpop.f32.mrb[0].mxu0
      %v1746 = vadd.f32 0.0, %v1745
      %v1747 = vpop.f32.mrb[0].mxu0
      %1748 = vmatprep.mubr.bf16.mxu0 0
      %1749 = vmatmul.mubr.bf16.gmra.mrb[0].mxu0 %v1531
      %v1750 = vpop.f32.mrb[0].mxu0
      %v1751 = vadd.f32 0.0, %v1750
      %v1752 = vpop.f32.mrb[0].mxu0
      %v1753 = vpop.f32.mrb[0].mxu0
      %v1754 = vpop.f32.mrb[0].mxu0
      %1755 = vmatprep.mubr.bf16.mxu0 0
      %1756 = vmatmul.mubr.bf16.gmra.mrb[0].mxu0 %v1532
      %v1757 = vpop.f32.mrb[0].mxu0
      %v1758 = vadd.f32 0.0, %v1757
      %v1759 = vpop.f32.mrb[0].mxu0
      %v1760 = vpop.f32.mrb[0].mxu0
      %v1761 = vadd.f32 0.0, %v1760
      %v1762 = vpop.f32.mrb[0].mxu0
      %1763 = vmatprep.mubr.bf16.mxu0 0
      %1764 = vmatmul.mubr.bf16.gmra.mrb[0].mxu0 %v1533
      %v1765 = vpop.f32.mrb[0].mxu0
      %v1766 = vpop.f32.mrb[0].mxu0
      %v1767 = vpop.f32.mrb[0].mxu0
      %v1768 = vadd.f32 0.0, %v1767
      %v1769 = vpop.f32.mrb[0].mxu0
      %1770 = vmatprep.mubr.bf16.mxu0 0
      %1771 = vmatmul.mubr.bf16.gmra.mrb[0].mxu0 %v1534
      %v1772 = vpop.f32.mrb[0].mxu0
      %v1773 = vadd.f32 0.0, %v1772
      %v1774 = vpop.f32.mrb[0].mxu0
      %v1775 = vpop.f32.mrb[0].mxu0
      %v1776 = vpop.f32.mrb[0].mxu0
      %1777 = vmatprep.mubr.bf16.mxu0 0
      %1778 = vmatmul.mubr.bf16.gmra.mrb[0].mxu0 %v1535
      %v1779 = vpop.f32.mrb[0].mxu0
      %v1780 = vadd.f32 0.0, %v1779
      %v1781 = vpop.f32.mrb[0].mxu0
      %v1782 = vpop.f32.mrb[0].mxu0
      %v1783 = vadd.f32 0.0, %v1782
      %v1784 = vpop.f32.mrb[0].mxu0
      %1785 = vmatprep.mubr.bf16.mxu0 0
      %1786 = vmatmul.mubr.bf16.gmra.mrb[0].mxu0 %v1536
      %v1787 = vpop.f32.mrb[0].mxu0
      %v1788 = vpop.f32.mrb[0].mxu0
      %v1789 = vpop.f32.mrb[0].mxu0
      %v1790 = vadd.f32 0.0, %v1789
      %v1791 = vpop.f32.mrb[0].mxu0
      %1792 = vmatprep.mubr.bf16.mxu0 0
      %1793 = vmatmul.mubr.bf16.gmra.mrb[0].mxu0 %v1537
      %v1794 = vpop.f32.mrb[0].mxu0
      %v1795 = vadd.f32 0.0, %v1794
      %v1796 = vpop.f32.mrb[0].mxu0
      %v1797 = vpop.f32.mrb[0].mxu0
      %v1798 = vpop.f32.mrb[0].mxu0
      %1799 = vmatprep.mubr.bf16.mxu0 0
      %1800 = vmatmul.mubr.bf16.gmra.mrb[0].mxu0 %v1538
      %v1801 = vpop.f32.mrb[0].mxu0
      %v1802 = vadd.f32 0.0, %v1801
      %v1803 = vpop.f32.mrb[0].mxu0
      %v1804 = vpop.f32.mrb[0].mxu0
      %v1805 = vadd.f32 0.0, %v1804
      %v1806 = vpop.f32.mrb[0].mxu0
      %1807 = vmatprep.mubr.bf16.mxu0 0
      %1808 = vmatmul.mubr.bf16.gmra.mrb[0].mxu0 %v1539
      %v1809 = vpop.f32.mrb[0].mxu0
      %v1810 = vpop.f32.mrb[0].mxu0
      %v1811 = vpop.f32.mrb[0].mxu0
      %v1812 = vadd.f32 0.0, %v1811
      %v1813 = vpop.f32.mrb[0].mxu0
      %1814 = vmatprep.mubr.bf16.mxu0 0
      %1815 = vmatmul.mubr.bf16.gmra.mrb[0].mxu0 %v1540
      %v1816 = vpop.f32.mrb[0].mxu0
      %v1817 = vadd.f32 0.0, %v1816
      %v1818 = vpop.f32.mrb[0].mxu0
      %v1819 = vpop.f32.mrb[0].mxu0
      %v1820 = vpop.f32.mrb[0].mxu0
      %1821 = vdwg.mxu0
      %v1822 = vadd.f32 %v1181, %v1648
      %v1823 = vadd.f32 %v1184, %v1651
      %v1824 = vadd.f32 %v1191, %v1658
      %v1825 = vadd.f32 %v1196, %v1663
      %v1826 = vadd.f32 %v1203, %v1670
      %v1827 = vadd.f32 %v1206, %v1673
      %v1828 = vadd.f32 %v1213, %v1680
      %v1829 = vadd.f32 %v1218, %v1685
      %v1830 = vadd.f32 %v1225, %v1692
      %v1831 = vadd.f32 %v1228, %v1695
      %v1832 = vadd.f32 %v1235, %v1702
      %v1833 = vadd.f32 %v1240, %v1707
      %v1834 = vadd.f32 %v1247, %v1714
      %v1835 = vadd.f32 %v1250, %v1717
      %v1836 = vadd.f32 %v1257, %v1724
      %v1837 = vadd.f32 %v1262, %v1729
      %v1838 = vadd.f32 %v1269, %v1736
      %v1839 = vadd.f32 %v1272, %v1739
      %v1840 = vadd.f32 %v1279, %v1746
      %v1841 = vadd.f32 %v1284, %v1751
      %v1842 = vadd.f32 %v1291, %v1758
      %v1843 = vadd.f32 %v1294, %v1761
      %v1844 = vadd.f32 %v1301, %v1768
      %v1845 = vadd.f32 %v1306, %v1773
      %v1846 = vadd.f32 %v1313, %v1780
      %v1847 = vadd.f32 %v1316, %v1783
      %v1848 = vadd.f32 %v1323, %v1790
      %v1849 = vadd.f32 %v1328, %v1795
      %v1850 = vadd.f32 %v1335, %v1802
      %v1851 = vadd.f32 %v1338, %v1805
      %v1852 = vadd.f32 %v1345, %v1812
      %v1853 = vadd.f32 %v1350, %v1817
      %v1854 = vld [vmem:[%s416] sm:$0xf]
      %v1855 = vld [vmem:[%s416 + $0x4] sm:$0xf]
      %v1856 = vld [vmem:[%s416 + $0x8] sm:$0xf]
      %v1857 = vld [vmem:[%s416 + $0xc] sm:$0xf]
      %v1858 = vld [vmem:[%s416 + $0x10] sm:$0xf]
      %v1859 = vld [vmem:[%s416 + $0x14] sm:$0xf]
      %v1860 = vld [vmem:[%s416 + $0x18] sm:$0xf]
      %v1861 = vld [vmem:[%s416 + $0x1c] sm:$0xf]
      %v1862 = vld [vmem:[%s416 + $0x20] sm:$0xf]
      %v1863 = vld [vmem:[%s416 + $0x24] sm:$0xf]
      %v1864 = vld [vmem:[%s416 + $0x28] sm:$0xf]
      %v1865 = vld [vmem:[%s416 + $0x2c] sm:$0xf]
      %v1866 = vld [vmem:[%s416 + $0x30] sm:$0xf]
      %v1867 = vld [vmem:[%s416 + $0x34] sm:$0xf]
      %v1868 = vld [vmem:[%s416 + $0x38] sm:$0xf]
      %v1869 = vld [vmem:[%s416 + $0x3c] sm:$0xf]
      %v1870 = vld [vmem:[%s416 + $0x40] sm:$0xf]
      %v1871 = vld [vmem:[%s416 + $0x44] sm:$0xf]
      %v1872 = vld [vmem:[%s416 + $0x48] sm:$0xf]
      %v1873 = vld [vmem:[%s416 + $0x4c] sm:$0xf]
      %v1874 = vld [vmem:[%s416 + $0x50] sm:$0xf]
      %v1875 = vld [vmem:[%s416 + $0x54] sm:$0xf]
      %v1876 = vld [vmem:[%s416 + $0x58] sm:$0xf]
      %v1877 = vld [vmem:[%s416 + $0x5c] sm:$0xf]
      %v1878 = vld [vmem:[%s416 + $0x60] sm:$0xf]
      %v1879 = vld [vmem:[%s416 + $0x64] sm:$0xf]
      %v1880 = vld [vmem:[%s416 + $0x68] sm:$0xf]
      %v1881 = vld [vmem:[%s416 + $0x6c] sm:$0xf]
      %v1882 = vld [vmem:[%s416 + $0x70] sm:$0xf]
      %v1883 = vld [vmem:[%s416 + $0x74] sm:$0xf]
      %v1884 = vld [vmem:[%s416 + $0x78] sm:$0xf]
      %v1885 = vld [vmem:[%s416 + $0x7c] sm:$0xf]
      %v1886 = vld [vmem:[%s416 + $0x80] sm:$0xf]
      %v1887 = vld [vmem:[%s416 + $0x84] sm:$0xf]
      %v1888 = vld [vmem:[%s416 + $0x88] sm:$0xf]
      %v1889 = vld [vmem:[%s416 + $0x8c] sm:$0xf]
      %v1890 = vld [vmem:[%s416 + $0x90] sm:$0xf]
      %v1891 = vld [vmem:[%s416 + $0x94] sm:$0xf]
      %v1892 = vld [vmem:[%s416 + $0x98] sm:$0xf]
      %v1893 = vld [vmem:[%s416 + $0x9c] sm:$0xf]
      %v1894 = vld [vmem:[%s416 + $0xa0] sm:$0xf]
      %v1895 = vld [vmem:[%s416 + $0xa4] sm:$0xf]
      %v1896 = vld [vmem:[%s416 + $0xa8] sm:$0xf]
      %v1897 = vld [vmem:[%s416 + $0xac] sm:$0xf]
      %v1898 = vld [vmem:[%s416 + $0xb0] sm:$0xf]
      %v1899 = vld [vmem:[%s416 + $0xb4] sm:$0xf]
      %v1900 = vld [vmem:[%s416 + $0xb8] sm:$0xf]
      %v1901 = vld [vmem:[%s416 + $0xbc] sm:$0xf]
      %s1902 = scalar_lea.vmem %s1, 64
      %v1903 = vld [vmem:[%s1902] sm:$0xf]
      %v1904 = vld [vmem:[%s1902 + $0x4] sm:$0xf]
      %v1905 = vld [vmem:[%s1902 + $0x8] sm:$0xf]
      %v1906 = vld [vmem:[%s1902 + $0xc] sm:$0xf]
      %v1907 = vld [vmem:[%s1902 + $0x10] sm:$0xf]
      %v1908 = vld [vmem:[%s1902 + $0x14] sm:$0xf]
      %v1909 = vld [vmem:[%s1902 + $0x18] sm:$0xf]
      %v1910 = vld [vmem:[%s1902 + $0x1c] sm:$0xf]
      %v1911 = vld [vmem:[%s1902 + $0x20] sm:$0xf]
      %v1912 = vld [vmem:[%s1902 + $0x24] sm:$0xf]
      %v1913 = vld [vmem:[%s1902 + $0x28] sm:$0xf]
      %v1914 = vld [vmem:[%s1902 + $0x2c] sm:$0xf]
      %v1915 = vld [vmem:[%s1902 + $0x30] sm:$0xf]
      %v1916 = vld [vmem:[%s1902 + $0x34] sm:$0xf]
      %v1917 = vld [vmem:[%s1902 + $0x38] sm:$0xf]
      %v1918 = vld [vmem:[%s1902 + $0x3c] sm:$0xf]
      %v1919 = vld [vmem:[%s487] sm:$0xf]
      %v1920 = vld [vmem:[%s487 + $0x4] sm:$0xf]
      %v1921 = vld [vmem:[%s487 + $0x8] sm:$0xf]
      %v1922 = vld [vmem:[%s487 + $0xc] sm:$0xf]
      %v1923 = vld [vmem:[%s487 + $0x10] sm:$0xf]
      %v1924 = vld [vmem:[%s487 + $0x14] sm:$0xf]
      %v1925 = vld [vmem:[%s487 + $0x18] sm:$0xf]
      %v1926 = vld [vmem:[%s487 + $0x1c] sm:$0xf]
      %v1927 = vld [vmem:[%s487 + $0x20] sm:$0xf]
      %v1928 = vld [vmem:[%s487 + $0x24] sm:$0xf]
      %v1929 = vld [vmem:[%s487 + $0x28] sm:$0xf]
      %v1930 = vld [vmem:[%s487 + $0x2c] sm:$0xf]
      %v1931 = vld [vmem:[%s487 + $0x30] sm:$0xf]
      %v1932 = vld [vmem:[%s487 + $0x34] sm:$0xf]
      %v1933 = vld [vmem:[%s487 + $0x38] sm:$0xf]
      %v1934 = vld [vmem:[%s487 + $0x3c] sm:$0xf]
      %v1935 = vld [vmem:[%s487 + $0x40] sm:$0xf]
      %v1936 = vld [vmem:[%s487 + $0x44] sm:$0xf]
      %v1937 = vld [vmem:[%s487 + $0x48] sm:$0xf]
      %v1938 = vld [vmem:[%s487 + $0x4c] sm:$0xf]
      %v1939 = vld [vmem:[%s487 + $0x50] sm:$0xf]
      %v1940 = vld [vmem:[%s487 + $0x54] sm:$0xf]
      %v1941 = vld [vmem:[%s487 + $0x58] sm:$0xf]
      %v1942 = vld [vmem:[%s487 + $0x5c] sm:$0xf]
      %v1943 = vld [vmem:[%s487 + $0x60] sm:$0xf]
      %v1944 = vld [vmem:[%s487 + $0x64] sm:$0xf]
      %v1945 = vld [vmem:[%s487 + $0x68] sm:$0xf]
      %v1946 = vld [vmem:[%s487 + $0x6c] sm:$0xf]
      %v1947 = vld [vmem:[%s487 + $0x70] sm:$0xf]
      %v1948 = vld [vmem:[%s487 + $0x74] sm:$0xf]
      %v1949 = vld [vmem:[%s487 + $0x78] sm:$0xf]
      %v1950 = vld [vmem:[%s487 + $0x7c] sm:$0xf]
      %v1951 = vld [vmem:[%s487 + $0x80] sm:$0xf]
      %v1952 = vld [vmem:[%s487 + $0x84] sm:$0xf]
      %v1953 = vld [vmem:[%s487 + $0x88] sm:$0xf]
      %v1954 = vld [vmem:[%s487 + $0x8c] sm:$0xf]
      %v1955 = vld [vmem:[%s487 + $0x90] sm:$0xf]
      %v1956 = vld [vmem:[%s487 + $0x94] sm:$0xf]
      %v1957 = vld [vmem:[%s487 + $0x98] sm:$0xf]
      %v1958 = vld [vmem:[%s487 + $0x9c] sm:$0xf]
      %v1959 = vld [vmem:[%s487 + $0xa0] sm:$0xf]
      %v1960 = vld [vmem:[%s487 + $0xa4] sm:$0xf]
      %v1961 = vld [vmem:[%s487 + $0xa8] sm:$0xf]
      %v1962 = vld [vmem:[%s487 + $0xac] sm:$0xf]
      %v1963 = vld [vmem:[%s487 + $0xb0] sm:$0xf]
      %v1964 = vld [vmem:[%s487 + $0xb4] sm:$0xf]
      %v1965 = vld [vmem:[%s487 + $0xb8] sm:$0xf]
      %v1966 = vld [vmem:[%s487 + $0xbc] sm:$0xf]
      %s1967 = scalar_lea.vmem %s1, 256
      %v1968 = vld [vmem:[%s1967] sm:$0xf]
      %v1969 = vld [vmem:[%s1967 + $0x4] sm:$0xf]
      %v1970 = vld [vmem:[%s1967 + $0x8] sm:$0xf]
      %v1971 = vld [vmem:[%s1967 + $0xc] sm:$0xf]
      %v1972 = vld [vmem:[%s1967 + $0x10] sm:$0xf]
      %v1973 = vld [vmem:[%s1967 + $0x14] sm:$0xf]
      %v1974 = vld [vmem:[%s1967 + $0x18] sm:$0xf]
      %v1975 = vld [vmem:[%s1967 + $0x1c] sm:$0xf]
      %v1976 = vld [vmem:[%s1967 + $0x20] sm:$0xf]
      %v1977 = vld [vmem:[%s1967 + $0x24] sm:$0xf]
      %v1978 = vld [vmem:[%s1967 + $0x28] sm:$0xf]
      %v1979 = vld [vmem:[%s1967 + $0x2c] sm:$0xf]
      %v1980 = vld [vmem:[%s1967 + $0x30] sm:$0xf]
      %v1981 = vld [vmem:[%s1967 + $0x34] sm:$0xf]
      %v1982 = vld [vmem:[%s1967 + $0x38] sm:$0xf]
      %v1983 = vld [vmem:[%s1967 + $0x3c] sm:$0xf]
      %v2032 = vunpack.c.l.b16 %v1919
      %v2033 = vunpack.c.l.b16 %v1920
      %v2034 = vunpack.c.l.b16 %v1921
      %v2035 = vunpack.c.l.b16 %v1922
      %v2036 = vunpack.c.l.b16 %v1923
      %v2037 = vunpack.c.l.b16 %v1924
      %v2038 = vunpack.c.l.b16 %v1925
      %v2039 = vunpack.c.l.b16 %v1926
      %v2040 = vunpack.c.l.b16 %v1927
      %v2041 = vunpack.c.l.b16 %v1928
      %v2042 = vunpack.c.l.b16 %v1929
      %v2043 = vunpack.c.l.b16 %v1930
      %v2044 = vunpack.c.l.b16 %v1931
      %v2045 = vunpack.c.l.b16 %v1932
      %v2046 = vunpack.c.l.b16 %v1933
      %v2047 = vunpack.c.l.b16 %v1934
      %v2048 = vunpack.c.l.b16 %v1935
      %v2049 = vunpack.c.l.b16 %v1936
      %v2050 = vunpack.c.l.b16 %v1937
      %v2051 = vunpack.c.l.b16 %v1938
      %v2052 = vunpack.c.l.b16 %v1939
      %v2053 = vunpack.c.l.b16 %v1940
      %v2054 = vunpack.c.l.b16 %v1941
      %v2055 = vunpack.c.l.b16 %v1942
      %v2056 = vunpack.c.l.b16 %v1943
      %v2057 = vunpack.c.l.b16 %v1944
      %v2058 = vunpack.c.l.b16 %v1945
      %v2059 = vunpack.c.l.b16 %v1946
      %v2060 = vunpack.c.l.b16 %v1947
      %v2061 = vunpack.c.l.b16 %v1948
      %v2062 = vunpack.c.l.b16 %v1949
      %v2063 = vunpack.c.l.b16 %v1950
      %v2064 = vunpack.c.l.b16 %v1951
      %v2065 = vunpack.c.l.b16 %v1952
      %v2066 = vunpack.c.l.b16 %v1953
      %v2067 = vunpack.c.l.b16 %v1954
      %v2068 = vunpack.c.l.b16 %v1955
      %v2069 = vunpack.c.l.b16 %v1956
      %v2070 = vunpack.c.l.b16 %v1957
      %v2071 = vunpack.c.l.b16 %v1958
      %v2072 = vunpack.c.l.b16 %v1959
      %v2073 = vunpack.c.l.b16 %v1960
      %v2074 = vunpack.c.l.b16 %v1961
      %v2075 = vunpack.c.l.b16 %v1962
      %v2076 = vunpack.c.l.b16 %v1963
      %v2077 = vunpack.c.l.b16 %v1964
      %v2078 = vunpack.c.l.b16 %v1965
      %v2079 = vunpack.c.l.b16 %v1966
      %v2080 = vpack.c.b16 %v2033, %v2032
      %v2081 = vpack.c.b16 %v2035, %v2034
      %v2082 = vpack.c.b16 %v2037, %v2036
      %v2083 = vpack.c.b16 %v2039, %v2038
      %v2084 = vpack.c.b16 %v2041, %v2040
      %v2085 = vpack.c.b16 %v2043, %v2042
      %v2086 = vpack.c.b16 %v2045, %v2044
      %v2087 = vpack.c.b16 %v2047, %v2046
      %v2088 = vpack.c.b16 %v2049, %v2048
      %v2089 = vpack.c.b16 %v2051, %v2050
      %v2090 = vpack.c.b16 %v2053, %v2052
      %v2091 = vpack.c.b16 %v2055, %v2054
      %v2092 = vpack.c.b16 %v2057, %v2056
      %v2093 = vpack.c.b16 %v2059, %v2058
      %v2094 = vpack.c.b16 %v2061, %v2060
      %v2095 = vpack.c.b16 %v2063, %v2062
      %v2096 = vpack.c.b16 %v2065, %v2064
      %v2097 = vpack.c.b16 %v2067, %v2066
      %v2098 = vpack.c.b16 %v2069, %v2068
      %v2099 = vpack.c.b16 %v2071, %v2070
      %v2100 = vpack.c.b16 %v2073, %v2072
      %v2101 = vpack.c.b16 %v2075, %v2074
      %v2102 = vpack.c.b16 %v2077, %v2076
      %v2103 = vpack.c.b16 %v2079, %v2078
      %v2144 = vunpack.c.l.b16 %v1968
      %v2145 = vunpack.c.l.b16 %v1969
      %v2146 = vunpack.c.l.b16 %v1970
      %v2147 = vunpack.c.l.b16 %v1971
      %v2148 = vunpack.c.l.b16 %v1972
      %v2149 = vunpack.c.l.b16 %v1973
      %v2150 = vunpack.c.l.b16 %v1974
      %v2151 = vunpack.c.l.b16 %v1975
      %v2152 = vunpack.c.l.b16 %v1976
      %v2153 = vunpack.c.l.b16 %v1977
      %v2154 = vunpack.c.l.b16 %v1978
      %v2155 = vunpack.c.l.b16 %v1979
      %v2156 = vunpack.c.l.b16 %v1980
      %v2157 = vunpack.c.l.b16 %v1981
      %v2158 = vunpack.c.l.b16 %v1982
      %v2159 = vunpack.c.l.b16 %v1983
      %v2160 = vpack.c.b16 %v2145, %v2144
      %v2161 = vpack.c.b16 %v2147, %v2146
      %v2162 = vpack.c.b16 %v2149, %v2148
      %v2163 = vpack.c.b16 %v2151, %v2150
      %v2164 = vpack.c.b16 %v2153, %v2152
      %v2165 = vpack.c.b16 %v2155, %v2154
      %v2166 = vpack.c.b16 %v2157, %v2156
      %v2167 = vpack.c.b16 %v2159, %v2158
      %2176 = vmatprep.subr.bf16.mxu0 0
      %2177 = vmatpush1.bf16.msra.mxu0 %v2160
      %2178 = vmatprep.subr.bf16.mxu0 0
      %2179 = vmatpush1.bf16.msra.mxu0 %v2161
      %2180 = vmatprep.subr.bf16.mxu0 0
      %2181 = vmatpush1.bf16.msra.mxu0 %v2162
      %2182 = vmatprep.subr.bf16.mxu0 0
      %2183 = vmatpush1.bf16.msra.mxu0 %v2163
      %2184 = vmatprep.subr.bf16.mxu0 0
      %2185 = vmatpush1.bf16.msra.mxu0 %v2164
      %2186 = vmatprep.subr.bf16.mxu0 0
      %2187 = vmatpush1.bf16.msra.mxu0 %v2165
      %2188 = vmatprep.subr.bf16.mxu0 0
      %2189 = vmatpush1.bf16.msra.mxu0 %v2166
      %2190 = vmatprep.subr.bf16.mxu0 0
      %2191 = vmatpush1.bf16.msra.mxu0 %v2167
      %2192 = vmatprep.subr.bf16.mxu0 0
      %2193 = vmatpush1.bf16.msra.mxu0 0
      %2194 = vmatprep.subr.bf16.mxu0 0
      %2195 = vmatpush1.bf16.msra.mxu0 0
      %2196 = vmatprep.subr.bf16.mxu0 0
      %2197 = vmatpush1.bf16.msra.mxu0 0
      %2198 = vmatprep.subr.bf16.mxu0 0
      %2199 = vmatpush1.bf16.msra.mxu0 0
      %2200 = vmatprep.subr.bf16.mxu0 0
      %2201 = vmatpush1.bf16.msra.mxu0 0
      %2202 = vmatprep.subr.bf16.mxu0 0
      %2203 = vmatpush1.bf16.msra.mxu0 0
      %2204 = vmatprep.subr.bf16.mxu0 0
      %2205 = vmatpush1.bf16.msra.mxu0 0
      %2206 = vmatprep.subr.bf16.mxu0 0
      %2207 = vmatpush1.bf16.msra.mxu0 0
      %2208 = vmatprep.mubr.bf16.mxu0 0
      %2209 = vmatmul.mubr.bf16.gmra.mrb[0].mxu0 %v2080
      %v2210 = vpop.f32.mrb[0].mxu0
      %v2211 = vadd.f32 0.0, %v2210
      %v2212 = vpop.f32.mrb[0].mxu0
      %v2213 = vpop.f32.mrb[0].mxu0
      %v2214 = vadd.f32 0.0, %v2213
      %v2215 = vpop.f32.mrb[0].mxu0
      %2216 = vmatprep.mubr.bf16.mxu0 0
      %2217 = vmatmul.mubr.bf16.gmra.mrb[0].mxu0 %v2081
      %v2218 = vpop.f32.mrb[0].mxu0
      %v2219 = vadd.f32 0.0, %v2218
      %v2220 = vpop.f32.mrb[0].mxu0
      %v2221 = vpop.f32.mrb[0].mxu0
      %v2222 = vadd.f32 0.0, %v2221
      %v2223 = vpop.f32.mrb[0].mxu0
      %2224 = vmatprep.mubr.bf16.mxu0 0
      %2225 = vmatmul.mubr.bf16.gmra.mrb[0].mxu0 %v2082
      %v2226 = vpop.f32.mrb[0].mxu0
      %v2227 = vadd.f32 0.0, %v2226
      %v2228 = vpop.f32.mrb[0].mxu0
      %v2229 = vpop.f32.mrb[0].mxu0
      %v2230 = vadd.f32 0.0, %v2229
      %v2231 = vpop.f32.mrb[0].mxu0
      %2232 = vmatprep.mubr.bf16.mxu0 0
      %2233 = vmatmul.mubr.bf16.gmra.mrb[0].mxu0 %v2083
      %v2234 = vpop.f32.mrb[0].mxu0
      %v2235 = vadd.f32 0.0, %v2234
      %v2236 = vpop.f32.mrb[0].mxu0
      %v2237 = vpop.f32.mrb[0].mxu0
      %v2238 = vadd.f32 0.0, %v2237
      %v2239 = vpop.f32.mrb[0].mxu0
      %2240 = vmatprep.mubr.bf16.mxu0 0
      %2241 = vmatmul.mubr.bf16.gmra.mrb[0].mxu0 %v2084
      %v2242 = vpop.f32.mrb[0].mxu0
      %v2243 = vadd.f32 0.0, %v2242
      %v2244 = vpop.f32.mrb[0].mxu0
      %v2245 = vpop.f32.mrb[0].mxu0
      %v2246 = vadd.f32 0.0, %v2245
      %v2247 = vpop.f32.mrb[0].mxu0
      %2248 = vmatprep.mubr.bf16.mxu0 0
      %2249 = vmatmul.mubr.bf16.gmra.mrb[0].mxu0 %v2085
      %v2250 = vpop.f32.mrb[0].mxu0
      %v2251 = vadd.f32 0.0, %v2250
      %v2252 = vpop.f32.mrb[0].mxu0
      %v2253 = vpop.f32.mrb[0].mxu0
      %v2254 = vadd.f32 0.0, %v2253
      %v2255 = vpop.f32.mrb[0].mxu0
      %2256 = vmatprep.mubr.bf16.mxu0 0
      %2257 = vmatmul.mubr.bf16.gmra.mrb[0].mxu0 %v2086
      %v2258 = vpop.f32.mrb[0].mxu0
      %v2259 = vadd.f32 0.0, %v2258
      %v2260 = vpop.f32.mrb[0].mxu0
      %v2261 = vpop.f32.mrb[0].mxu0
      %v2262 = vadd.f32 0.0, %v2261
      %v2263 = vpop.f32.mrb[0].mxu0
      %2264 = vmatprep.mubr.bf16.mxu0 0
      %2265 = vmatmul.mubr.bf16.gmra.mrb[0].mxu0 %v2087
      %v2266 = vpop.f32.mrb[0].mxu0
      %v2267 = vadd.f32 0.0, %v2266
      %v2268 = vpop.f32.mrb[0].mxu0
      %v2269 = vpop.f32.mrb[0].mxu0
      %v2270 = vadd.f32 0.0, %v2269
      %v2271 = vpop.f32.mrb[0].mxu0
      %2272 = vmatprep.mubr.bf16.mxu0 0
      %2273 = vmatmul.mubr.bf16.gmra.mrb[0].mxu0 %v2088
      %v2274 = vpop.f32.mrb[0].mxu0
      %v2275 = vadd.f32 0.0, %v2274
      %v2276 = vpop.f32.mrb[0].mxu0
      %v2277 = vpop.f32.mrb[0].mxu0
      %v2278 = vadd.f32 0.0, %v2277
      %v2279 = vpop.f32.mrb[0].mxu0
      %2280 = vmatprep.mubr.bf16.mxu0 0
      %2281 = vmatmul.mubr.bf16.gmra.mrb[0].mxu0 %v2089
      %v2282 = vpop.f32.mrb[0].mxu0
      %v2283 = vadd.f32 0.0, %v2282
      %v2284 = vpop.f32.mrb[0].mxu0
      %v2285 = vpop.f32.mrb[0].mxu0
      %v2286 = vadd.f32 0.0, %v2285
      %v2287 = vpop.f32.mrb[0].mxu0
      %2288 = vmatprep.mubr.bf16.mxu0 0
      %2289 = vmatmul.mubr.bf16.gmra.mrb[0].mxu0 %v2090
      %v2290 = vpop.f32.mrb[0].mxu0
      %v2291 = vadd.f32 0.0, %v2290
      %v2292 = vpop.f32.mrb[0].mxu0
      %v2293 = vpop.f32.mrb[0].mxu0
      %v2294 = vadd.f32 0.0, %v2293
      %v2295 = vpop.f32.mrb[0].mxu0
      %2296 = vmatprep.mubr.bf16.mxu0 0
      %2297 = vmatmul.mubr.bf16.gmra.mrb[0].mxu0 %v2091
      %v2298 = vpop.f32.mrb[0].mxu0
      %v2299 = vadd.f32 0.0, %v2298
      %v2300 = vpop.f32.mrb[0].mxu0
      %v2301 = vpop.f32.mrb[0].mxu0
      %v2302 = vadd.f32 0.0, %v2301
      %v2303 = vpop.f32.mrb[0].mxu0
      %2304 = vmatprep.mubr.bf16.mxu0 0
      %2305 = vmatmul.mubr.bf16.gmra.mrb[0].mxu0 %v2092
      %v2306 = vpop.f32.mrb[0].mxu0
      %v2307 = vadd.f32 0.0, %v2306
      %v2308 = vpop.f32.mrb[0].mxu0
      %v2309 = vpop.f32.mrb[0].mxu0
      %v2310 = vadd.f32 0.0, %v2309
      %v2311 = vpop.f32.mrb[0].mxu0
      %2312 = vmatprep.mubr.bf16.mxu0 0
      %2313 = vmatmul.mubr.bf16.gmra.mrb[0].mxu0 %v2093
      %v2314 = vpop.f32.mrb[0].mxu0
      %v2315 = vadd.f32 0.0, %v2314
      %v2316 = vpop.f32.mrb[0].mxu0
      %v2317 = vpop.f32.mrb[0].mxu0
      %v2318 = vadd.f32 0.0, %v2317
      %v2319 = vpop.f32.mrb[0].mxu0
      %2320 = vmatprep.mubr.bf16.mxu0 0
      %2321 = vmatmul.mubr.bf16.gmra.mrb[0].mxu0 %v2094
      %v2322 = vpop.f32.mrb[0].mxu0
      %v2323 = vadd.f32 0.0, %v2322
      %v2324 = vpop.f32.mrb[0].mxu0
      %v2325 = vpop.f32.mrb[0].mxu0
      %v2326 = vadd.f32 0.0, %v2325
      %v2327 = vpop.f32.mrb[0].mxu0
      %2328 = vmatprep.mubr.bf16.mxu0 0
      %2329 = vmatmul.mubr.bf16.gmra.mrb[0].mxu0 %v2095
      %v2330 = vpop.f32.mrb[0].mxu0
      %v2331 = vadd.f32 0.0, %v2330
      %v2332 = vpop.f32.mrb[0].mxu0
      %v2333 = vpop.f32.mrb[0].mxu0
      %v2334 = vadd.f32 0.0, %v2333
      %v2335 = vpop.f32.mrb[0].mxu0
      %2336 = vmatprep.mubr.bf16.mxu0 0
      %2337 = vmatmul.mubr.bf16.gmra.mrb[0].mxu0 %v2096
      %v2338 = vpop.f32.mrb[0].mxu0
      %v2339 = vadd.f32 0.0, %v2338
      %v2340 = vpop.f32.mrb[0].mxu0
      %v2341 = vpop.f32.mrb[0].mxu0
      %v2342 = vadd.f32 0.0, %v2341
      %v2343 = vpop.f32.mrb[0].mxu0
      %2344 = vmatprep.mubr.bf16.mxu0 0
      %2345 = vmatmul.mubr.bf16.gmra.mrb[0].mxu0 %v2097
      %v2346 = vpop.f32.mrb[0].mxu0
      %v2347 = vadd.f32 0.0, %v2346
      %v2348 = vpop.f32.mrb[0].mxu0
      %v2349 = vpop.f32.mrb[0].mxu0
      %v2350 = vadd.f32 0.0, %v2349
      %v2351 = vpop.f32.mrb[0].mxu0
      %2352 = vmatprep.mubr.bf16.mxu0 0
      %2353 = vmatmul.mubr.bf16.gmra.mrb[0].mxu0 %v2098
      %v2354 = vpop.f32.mrb[0].mxu0
      %v2355 = vadd.f32 0.0, %v2354
      %v2356 = vpop.f32.mrb[0].mxu0
      %v2357 = vpop.f32.mrb[0].mxu0
      %v2358 = vadd.f32 0.0, %v2357
      %v2359 = vpop.f32.mrb[0].mxu0
      %2360 = vmatprep.mubr.bf16.mxu0 0
      %2361 = vmatmul.mubr.bf16.gmra.mrb[0].mxu0 %v2099
      %v2362 = vpop.f32.mrb[0].mxu0
      %v2363 = vadd.f32 0.0, %v2362
      %v2364 = vpop.f32.mrb[0].mxu0
      %v2365 = vpop.f32.mrb[0].mxu0
      %v2366 = vadd.f32 0.0, %v2365
      %v2367 = vpop.f32.mrb[0].mxu0
      %2368 = vmatprep.mubr.bf16.mxu0 0
      %2369 = vmatmul.mubr.bf16.gmra.mrb[0].mxu0 %v2100
      %v2370 = vpop.f32.mrb[0].mxu0
      %v2371 = vadd.f32 0.0, %v2370
      %v2372 = vpop.f32.mrb[0].mxu0
      %v2373 = vpop.f32.mrb[0].mxu0
      %v2374 = vadd.f32 0.0, %v2373
      %v2375 = vpop.f32.mrb[0].mxu0
      %2376 = vmatprep.mubr.bf16.mxu0 0
      %2377 = vmatmul.mubr.bf16.gmra.mrb[0].mxu0 %v2101
      %v2378 = vpop.f32.mrb[0].mxu0
      %v2379 = vadd.f32 0.0, %v2378
      %v2380 = vpop.f32.mrb[0].mxu0
      %v2381 = vpop.f32.mrb[0].mxu0
      %v2382 = vadd.f32 0.0, %v2381
      %v2383 = vpop.f32.mrb[0].mxu0
      %2384 = vmatprep.mubr.bf16.mxu0 0
      %2385 = vmatmul.mubr.bf16.gmra.mrb[0].mxu0 %v2102
      %v2386 = vpop.f32.mrb[0].mxu0
      %v2387 = vadd.f32 0.0, %v2386
      %v2388 = vpop.f32.mrb[0].mxu0
      %v2389 = vpop.f32.mrb[0].mxu0
      %v2390 = vadd.f32 0.0, %v2389
      %v2391 = vpop.f32.mrb[0].mxu0
      %2392 = vmatprep.mubr.bf16.mxu0 0
      %2393 = vmatmul.mubr.bf16.gmra.mrb[0].mxu0 %v2103
      %v2394 = vpop.f32.mrb[0].mxu0
      %v2395 = vadd.f32 0.0, %v2394
      %v2396 = vpop.f32.mrb[0].mxu0
      %v2397 = vpop.f32.mrb[0].mxu0
      %v2398 = vadd.f32 0.0, %v2397
      %v2399 = vpop.f32.mrb[0].mxu0
      %2400 = vdwg.mxu0
      %v2449 = vunpack.c.l.b16 %v1854
      %v2450 = vunpack.c.l.b16 %v1855
      %v2451 = vunpack.c.l.b16 %v1856
      %v2452 = vunpack.c.l.b16 %v1857
      %v2453 = vunpack.c.l.b16 %v1858
      %v2454 = vunpack.c.l.b16 %v1859
      %v2455 = vunpack.c.l.b16 %v1860
      %v2456 = vunpack.c.l.b16 %v1861
      %v2457 = vunpack.c.l.b16 %v1862
      %v2458 = vunpack.c.l.b16 %v1863
      %v2459 = vunpack.c.l.b16 %v1864
      %v2460 = vunpack.c.l.b16 %v1865
      %v2461 = vunpack.c.l.b16 %v1866
      %v2462 = vunpack.c.l.b16 %v1867
      %v2463 = vunpack.c.l.b16 %v1868
      %v2464 = vunpack.c.l.b16 %v1869
      %v2465 = vunpack.c.l.b16 %v1870
      %v2466 = vunpack.c.l.b16 %v1871
      %v2467 = vunpack.c.l.b16 %v1872
      %v2468 = vunpack.c.l.b16 %v1873
      %v2469 = vunpack.c.l.b16 %v1874
      %v2470 = vunpack.c.l.b16 %v1875
      %v2471 = vunpack.c.l.b16 %v1876
      %v2472 = vunpack.c.l.b16 %v1877
      %v2473 = vunpack.c.l.b16 %v1878
      %v2474 = vunpack.c.l.b16 %v1879
      %v2475 = vunpack.c.l.b16 %v1880
      %v2476 = vunpack.c.l.b16 %v1881
      %v2477 = vunpack.c.l.b16 %v1882
      %v2478 = vunpack.c.l.b16 %v1883
      %v2479 = vunpack.c.l.b16 %v1884
      %v2480 = vunpack.c.l.b16 %v1885
      %v2481 = vunpack.c.l.b16 %v1886
      %v2482 = vunpack.c.l.b16 %v1887
      %v2483 = vunpack.c.l.b16 %v1888
      %v2484 = vunpack.c.l.b16 %v1889
      %v2485 = vunpack.c.l.b16 %v1890
      %v2486 = vunpack.c.l.b16 %v1891
      %v2487 = vunpack.c.l.b16 %v1892
      %v2488 = vunpack.c.l.b16 %v1893
      %v2489 = vunpack.c.l.b16 %v1894
      %v2490 = vunpack.c.l.b16 %v1895
      %v2491 = vunpack.c.l.b16 %v1896
      %v2492 = vunpack.c.l.b16 %v1897
      %v2493 = vunpack.c.l.b16 %v1898
      %v2494 = vunpack.c.l.b16 %v1899
      %v2495 = vunpack.c.l.b16 %v1900
      %v2496 = vunpack.c.l.b16 %v1901
      %v2497 = vpack.c.b16 %v2450, %v2449
      %v2498 = vpack.c.b16 %v2452, %v2451
      %v2499 = vpack.c.b16 %v2454, %v2453
      %v2500 = vpack.c.b16 %v2456, %v2455
      %v2501 = vpack.c.b16 %v2458, %v2457
      %v2502 = vpack.c.b16 %v2460, %v2459
      %v2503 = vpack.c.b16 %v2462, %v2461
      %v2504 = vpack.c.b16 %v2464, %v2463
      %v2505 = vpack.c.b16 %v2466, %v2465
      %v2506 = vpack.c.b16 %v2468, %v2467
      %v2507 = vpack.c.b16 %v2470, %v2469
      %v2508 = vpack.c.b16 %v2472, %v2471
      %v2509 = vpack.c.b16 %v2474, %v2473
      %v2510 = vpack.c.b16 %v2476, %v2475
      %v2511 = vpack.c.b16 %v2478, %v2477
      %v2512 = vpack.c.b16 %v2480, %v2479
      %v2513 = vpack.c.b16 %v2482, %v2481
      %v2514 = vpack.c.b16 %v2484, %v2483
      %v2515 = vpack.c.b16 %v2486, %v2485
      %v2516 = vpack.c.b16 %v2488, %v2487
      %v2517 = vpack.c.b16 %v2490, %v2489
      %v2518 = vpack.c.b16 %v2492, %v2491
      %v2519 = vpack.c.b16 %v2494, %v2493
      %v2520 = vpack.c.b16 %v2496, %v2495
      %v2561 = vunpack.c.l.b16 %v1903
      %v2562 = vunpack.c.l.b16 %v1904
      %v2563 = vunpack.c.l.b16 %v1905
      %v2564 = vunpack.c.l.b16 %v1906
      %v2565 = vunpack.c.l.b16 %v1907
      %v2566 = vunpack.c.l.b16 %v1908
      %v2567 = vunpack.c.l.b16 %v1909
      %v2568 = vunpack.c.l.b16 %v1910
      %v2569 = vunpack.c.l.b16 %v1911
      %v2570 = vunpack.c.l.b16 %v1912
      %v2571 = vunpack.c.l.b16 %v1913
      %v2572 = vunpack.c.l.b16 %v1914
      %v2573 = vunpack.c.l.b16 %v1915
      %v2574 = vunpack.c.l.b16 %v1916
      %v2575 = vunpack.c.l.b16 %v1917
      %v2576 = vunpack.c.l.b16 %v1918
      %v2577 = vpack.c.b16 %v2562, %v2561
      %v2578 = vpack.c.b16 %v2564, %v2563
      %v2579 = vpack.c.b16 %v2566, %v2565
      %v2580 = vpack.c.b16 %v2568, %v2567
      %v2581 = vpack.c.b16 %v2570, %v2569
      %v2582 = vpack.c.b16 %v2572, %v2571
      %v2583 = vpack.c.b16 %v2574, %v2573
      %v2584 = vpack.c.b16 %v2576, %v2575
      %2593 = vmatprep.subr.bf16.mxu0 0
      %2594 = vmatpush1.bf16.msra.mxu0 %v2577
      %2595 = vmatprep.subr.bf16.mxu0 0
      %2596 = vmatpush1.bf16.msra.mxu0 %v2578
      %2597 = vmatprep.subr.bf16.mxu0 0
      %2598 = vmatpush1.bf16.msra.mxu0 %v2579
      %2599 = vmatprep.subr.bf16.mxu0 0
      %2600 = vmatpush1.bf16.msra.mxu0 %v2580
      %2601 = vmatprep.subr.bf16.mxu0 0
      %2602 = vmatpush1.bf16.msra.mxu0 %v2581
      %2603 = vmatprep.subr.bf16.mxu0 0
      %2604 = vmatpush1.bf16.msra.mxu0 %v2582
      %2605 = vmatprep.subr.bf16.mxu0 0
      %2606 = vmatpush1.bf16.msra.mxu0 %v2583
      %2607 = vmatprep.subr.bf16.mxu0 0
      %2608 = vmatpush1.bf16.msra.mxu0 %v2584
      %2609 = vmatprep.subr.bf16.mxu0 0
      %2610 = vmatpush1.bf16.msra.mxu0 0
      %2611 = vmatprep.subr.bf16.mxu0 0
      %2612 = vmatpush1.bf16.msra.mxu0 0
      %2613 = vmatprep.subr.bf16.mxu0 0
      %2614 = vmatpush1.bf16.msra.mxu0 0
      %2615 = vmatprep.subr.bf16.mxu0 0
      %2616 = vmatpush1.bf16.msra.mxu0 0
      %2617 = vmatprep.subr.bf16.mxu0 0
      %2618 = vmatpush1.bf16.msra.mxu0 0
      %2619 = vmatprep.subr.bf16.mxu0 0
      %2620 = vmatpush1.bf16.msra.mxu0 0
      %2621 = vmatprep.subr.bf16.mxu0 0
      %2622 = vmatpush1.bf16.msra.mxu0 0
      %2623 = vmatprep.subr.bf16.mxu0 0
      %2624 = vmatpush1.bf16.msra.mxu0 0
      %2625 = vmatprep.mubr.bf16.mxu0 0
      %2626 = vmatmul.mubr.bf16.gmra.mrb[0].mxu0 %v2497
      %v2627 = vpop.f32.mrb[0].mxu0
      %v2628 = vadd.f32 %v2211, %v2627
      %v2629 = vpop.f32.mrb[0].mxu0
      %v2630 = vpop.f32.mrb[0].mxu0
      %v2631 = vadd.f32 %v2214, %v2630
      %v2632 = vpop.f32.mrb[0].mxu0
      %2633 = vmatprep.mubr.bf16.mxu0 0
      %2634 = vmatmul.mubr.bf16.gmra.mrb[0].mxu0 %v2498
      %v2635 = vpop.f32.mrb[0].mxu0
      %v2636 = vadd.f32 %v2219, %v2635
      %v2637 = vpop.f32.mrb[0].mxu0
      %v2638 = vpop.f32.mrb[0].mxu0
      %v2639 = vadd.f32 %v2222, %v2638
      %v2640 = vpop.f32.mrb[0].mxu0
      %2641 = vmatprep.mubr.bf16.mxu0 0
      %2642 = vmatmul.mubr.bf16.gmra.mrb[0].mxu0 %v2499
      %v2643 = vpop.f32.mrb[0].mxu0
      %v2644 = vadd.f32 %v2227, %v2643
      %v2645 = vpop.f32.mrb[0].mxu0
      %v2646 = vpop.f32.mrb[0].mxu0
      %v2647 = vadd.f32 %v2230, %v2646
      %v2648 = vpop.f32.mrb[0].mxu0
      %2649 = vmatprep.mubr.bf16.mxu0 0
      %2650 = vmatmul.mubr.bf16.gmra.mrb[0].mxu0 %v2500
      %v2651 = vpop.f32.mrb[0].mxu0
      %v2652 = vadd.f32 %v2235, %v2651
      %v2653 = vpop.f32.mrb[0].mxu0
      %v2654 = vpop.f32.mrb[0].mxu0
      %v2655 = vadd.f32 %v2238, %v2654
      %v2656 = vpop.f32.mrb[0].mxu0
      %2657 = vmatprep.mubr.bf16.mxu0 0
      %2658 = vmatmul.mubr.bf16.gmra.mrb[0].mxu0 %v2501
      %v2659 = vpop.f32.mrb[0].mxu0
      %v2660 = vadd.f32 %v2243, %v2659
      %v2661 = vpop.f32.mrb[0].mxu0
      %v2662 = vpop.f32.mrb[0].mxu0
      %v2663 = vadd.f32 %v2246, %v2662
      %v2664 = vpop.f32.mrb[0].mxu0
      %2665 = vmatprep.mubr.bf16.mxu0 0
      %2666 = vmatmul.mubr.bf16.gmra.mrb[0].mxu0 %v2502
      %v2667 = vpop.f32.mrb[0].mxu0
      %v2668 = vadd.f32 %v2251, %v2667
      %v2669 = vpop.f32.mrb[0].mxu0
      %v2670 = vpop.f32.mrb[0].mxu0
      %v2671 = vadd.f32 %v2254, %v2670
      %v2672 = vpop.f32.mrb[0].mxu0
      %2673 = vmatprep.mubr.bf16.mxu0 0
      %2674 = vmatmul.mubr.bf16.gmra.mrb[0].mxu0 %v2503
      %v2675 = vpop.f32.mrb[0].mxu0
      %v2676 = vadd.f32 %v2259, %v2675
      %v2677 = vpop.f32.mrb[0].mxu0
      %v2678 = vpop.f32.mrb[0].mxu0
      %v2679 = vadd.f32 %v2262, %v2678
      %v2680 = vpop.f32.mrb[0].mxu0
      %2681 = vmatprep.mubr.bf16.mxu0 0
      %2682 = vmatmul.mubr.bf16.gmra.mrb[0].mxu0 %v2504
      %v2683 = vpop.f32.mrb[0].mxu0
      %v2684 = vadd.f32 %v2267, %v2683
      %v2685 = vpop.f32.mrb[0].mxu0
      %v2686 = vpop.f32.mrb[0].mxu0
      %v2687 = vadd.f32 %v2270, %v2686
      %v2688 = vpop.f32.mrb[0].mxu0
      %2689 = vmatprep.mubr.bf16.mxu0 0
      %2690 = vmatmul.mubr.bf16.gmra.mrb[0].mxu0 %v2505
      %v2691 = vpop.f32.mrb[0].mxu0
      %v2692 = vadd.f32 %v2275, %v2691
      %v2693 = vpop.f32.mrb[0].mxu0
      %v2694 = vpop.f32.mrb[0].mxu0
      %v2695 = vadd.f32 %v2278, %v2694
      %v2696 = vpop.f32.mrb[0].mxu0
      %2697 = vmatprep.mubr.bf16.mxu0 0
      %2698 = vmatmul.mubr.bf16.gmra.mrb[0].mxu0 %v2506
      %v2699 = vpop.f32.mrb[0].mxu0
      %v2700 = vadd.f32 %v2283, %v2699
      %v2701 = vpop.f32.mrb[0].mxu0
      %v2702 = vpop.f32.mrb[0].mxu0
      %v2703 = vadd.f32 %v2286, %v2702
      %v2704 = vpop.f32.mrb[0].mxu0
      %2705 = vmatprep.mubr.bf16.mxu0 0
      %2706 = vmatmul.mubr.bf16.gmra.mrb[0].mxu0 %v2507
      %v2707 = vpop.f32.mrb[0].mxu0
      %v2708 = vadd.f32 %v2291, %v2707
      %v2709 = vpop.f32.mrb[0].mxu0
      %v2710 = vpop.f32.mrb[0].mxu0
      %v2711 = vadd.f32 %v2294, %v2710
      %v2712 = vpop.f32.mrb[0].mxu0
      %2713 = vmatprep.mubr.bf16.mxu0 0
      %2714 = vmatmul.mubr.bf16.gmra.mrb[0].mxu0 %v2508
      %v2715 = vpop.f32.mrb[0].mxu0
      %v2716 = vadd.f32 %v2299, %v2715
      %v2717 = vpop.f32.mrb[0].mxu0
      %v2718 = vpop.f32.mrb[0].mxu0
      %v2719 = vadd.f32 %v2302, %v2718
      %v2720 = vpop.f32.mrb[0].mxu0
      %2721 = vmatprep.mubr.bf16.mxu0 0
      %2722 = vmatmul.mubr.bf16.gmra.mrb[0].mxu0 %v2509
      %v2723 = vpop.f32.mrb[0].mxu0
      %v2724 = vadd.f32 %v2307, %v2723
      %v2725 = vpop.f32.mrb[0].mxu0
      %v2726 = vpop.f32.mrb[0].mxu0
      %v2727 = vadd.f32 %v2310, %v2726
      %v2728 = vpop.f32.mrb[0].mxu0
      %2729 = vmatprep.mubr.bf16.mxu0 0
      %2730 = vmatmul.mubr.bf16.gmra.mrb[0].mxu0 %v2510
      %v2731 = vpop.f32.mrb[0].mxu0
      %v2732 = vadd.f32 %v2315, %v2731
      %v2733 = vpop.f32.mrb[0].mxu0
      %v2734 = vpop.f32.mrb[0].mxu0
      %v2735 = vadd.f32 %v2318, %v2734
      %v2736 = vpop.f32.mrb[0].mxu0
      %2737 = vmatprep.mubr.bf16.mxu0 0
      %2738 = vmatmul.mubr.bf16.gmra.mrb[0].mxu0 %v2511
      %v2739 = vpop.f32.mrb[0].mxu0
      %v2740 = vadd.f32 %v2323, %v2739
      %v2741 = vpop.f32.mrb[0].mxu0
      %v2742 = vpop.f32.mrb[0].mxu0
      %v2743 = vadd.f32 %v2326, %v2742
      %v2744 = vpop.f32.mrb[0].mxu0
      %2745 = vmatprep.mubr.bf16.mxu0 0
      %2746 = vmatmul.mubr.bf16.gmra.mrb[0].mxu0 %v2512
      %v2747 = vpop.f32.mrb[0].mxu0
      %v2748 = vadd.f32 %v2331, %v2747
      %v2749 = vpop.f32.mrb[0].mxu0
      %v2750 = vpop.f32.mrb[0].mxu0
      %v2751 = vadd.f32 %v2334, %v2750
      %v2752 = vpop.f32.mrb[0].mxu0
      %2753 = vmatprep.mubr.bf16.mxu0 0
      %2754 = vmatmul.mubr.bf16.gmra.mrb[0].mxu0 %v2513
      %v2755 = vpop.f32.mrb[0].mxu0
      %v2756 = vadd.f32 %v2339, %v2755
      %v2757 = vpop.f32.mrb[0].mxu0
      %v2758 = vpop.f32.mrb[0].mxu0
      %v2759 = vadd.f32 %v2342, %v2758
      %v2760 = vpop.f32.mrb[0].mxu0
      %2761 = vmatprep.mubr.bf16.mxu0 0
      %2762 = vmatmul.mubr.bf16.gmra.mrb[0].mxu0 %v2514
      %v2763 = vpop.f32.mrb[0].mxu0
      %v2764 = vadd.f32 %v2347, %v2763
      %v2765 = vpop.f32.mrb[0].mxu0
      %v2766 = vpop.f32.mrb[0].mxu0
      %v2767 = vadd.f32 %v2350, %v2766
      %v2768 = vpop.f32.mrb[0].mxu0
      %2769 = vmatprep.mubr.bf16.mxu0 0
      %2770 = vmatmul.mubr.bf16.gmra.mrb[0].mxu0 %v2515
      %v2771 = vpop.f32.mrb[0].mxu0
      %v2772 = vadd.f32 %v2355, %v2771
      %v2773 = vpop.f32.mrb[0].mxu0
      %v2774 = vpop.f32.mrb[0].mxu0
      %v2775 = vadd.f32 %v2358, %v2774
      %v2776 = vpop.f32.mrb[0].mxu0
      %2777 = vmatprep.mubr.bf16.mxu0 0
      %2778 = vmatmul.mubr.bf16.gmra.mrb[0].mxu0 %v2516
      %v2779 = vpop.f32.mrb[0].mxu0
      %v2780 = vadd.f32 %v2363, %v2779
      %v2781 = vpop.f32.mrb[0].mxu0
      %v2782 = vpop.f32.mrb[0].mxu0
      %v2783 = vadd.f32 %v2366, %v2782
      %v2784 = vpop.f32.mrb[0].mxu0
      %2785 = vmatprep.mubr.bf16.mxu0 0
      %2786 = vmatmul.mubr.bf16.gmra.mrb[0].mxu0 %v2517
      %v2787 = vpop.f32.mrb[0].mxu0
      %v2788 = vadd.f32 %v2371, %v2787
      %v2789 = vpop.f32.mrb[0].mxu0
      %v2790 = vpop.f32.mrb[0].mxu0
      %v2791 = vadd.f32 %v2374, %v2790
      %v2792 = vpop.f32.mrb[0].mxu0
      %2793 = vmatprep.mubr.bf16.mxu0 0
      %2794 = vmatmul.mubr.bf16.gmra.mrb[0].mxu0 %v2518
      %v2795 = vpop.f32.mrb[0].mxu0
      %v2796 = vadd.f32 %v2379, %v2795
      %v2797 = vpop.f32.mrb[0].mxu0
      %v2798 = vpop.f32.mrb[0].mxu0
      %v2799 = vadd.f32 %v2382, %v2798
      %v2800 = vpop.f32.mrb[0].mxu0
      %2801 = vmatprep.mubr.bf16.mxu0 0
      %2802 = vmatmul.mubr.bf16.gmra.mrb[0].mxu0 %v2519
      %v2803 = vpop.f32.mrb[0].mxu0
      %v2804 = vadd.f32 %v2387, %v2803
      %v2805 = vpop.f32.mrb[0].mxu0
      %v2806 = vpop.f32.mrb[0].mxu0
      %v2807 = vadd.f32 %v2390, %v2806
      %v2808 = vpop.f32.mrb[0].mxu0
      %2809 = vmatprep.mubr.bf16.mxu0 0
      %2810 = vmatmul.mubr.bf16.gmra.mrb[0].mxu0 %v2520
      %v2811 = vpop.f32.mrb[0].mxu0
      %v2812 = vadd.f32 %v2395, %v2811
      %v2813 = vpop.f32.mrb[0].mxu0
      %v2814 = vpop.f32.mrb[0].mxu0
      %v2815 = vadd.f32 %v2398, %v2814
      %v2816 = vpop.f32.mrb[0].mxu0
      %2817 = vdwg.mxu0
      %v2818 = vld [vmem:[%s1355] sm:$0xf]
      %v2819 = vld [vmem:[%s1355 + $0x4] sm:$0xf]
      %v2820 = vld [vmem:[%s1355 + $0x8] sm:$0xf]
      %v2821 = vld [vmem:[%s1355 + $0xc] sm:$0xf]
      %v2822 = vld [vmem:[%s1355 + $0x10] sm:$0xf]
      %v2823 = vld [vmem:[%s1355 + $0x14] sm:$0xf]
      %v2824 = vld [vmem:[%s1355 + $0x18] sm:$0xf]
      %v2825 = vld [vmem:[%s1355 + $0x1c] sm:$0xf]
      %v2826 = vld [vmem:[%s1355 + $0x20] sm:$0xf]
      %v2827 = vld [vmem:[%s1355 + $0x24] sm:$0xf]
      %v2828 = vld [vmem:[%s1355 + $0x28] sm:$0xf]
      %v2829 = vld [vmem:[%s1355 + $0x2c] sm:$0xf]
      %v2830 = vld [vmem:[%s1355 + $0x30] sm:$0xf]
      %v2831 = vld [vmem:[%s1355 + $0x34] sm:$0xf]
      %v2832 = vld [vmem:[%s1355 + $0x38] sm:$0xf]
      %v2833 = vld [vmem:[%s1355 + $0x3c] sm:$0xf]
      %v2834 = vld [vmem:[%s1355 + $0x40] sm:$0xf]
      %v2835 = vld [vmem:[%s1355 + $0x44] sm:$0xf]
      %v2836 = vld [vmem:[%s1355 + $0x48] sm:$0xf]
      %v2837 = vld [vmem:[%s1355 + $0x4c] sm:$0xf]
      %v2838 = vld [vmem:[%s1355 + $0x50] sm:$0xf]
      %v2839 = vld [vmem:[%s1355 + $0x54] sm:$0xf]
      %v2840 = vld [vmem:[%s1355 + $0x58] sm:$0xf]
      %v2841 = vld [vmem:[%s1355 + $0x5c] sm:$0xf]
      %v2842 = vld [vmem:[%s1355 + $0x60] sm:$0xf]
      %v2843 = vld [vmem:[%s1355 + $0x64] sm:$0xf]
      %v2844 = vld [vmem:[%s1355 + $0x68] sm:$0xf]
      %v2845 = vld [vmem:[%s1355 + $0x6c] sm:$0xf]
      %v2846 = vld [vmem:[%s1355 + $0x70] sm:$0xf]
      %v2847 = vld [vmem:[%s1355 + $0x74] sm:$0xf]
      %v2848 = vld [vmem:[%s1355 + $0x78] sm:$0xf]
      %v2849 = vld [vmem:[%s1355 + $0x7c] sm:$0xf]
      %v2850 = vld [vmem:[%s1355 + $0x80] sm:$0xf]
      %v2851 = vld [vmem:[%s1355 + $0x84] sm:$0xf]
      %v2852 = vld [vmem:[%s1355 + $0x88] sm:$0xf]
      %v2853 = vld [vmem:[%s1355 + $0x8c] sm:$0xf]
      %v2854 = vld [vmem:[%s1355 + $0x90] sm:$0xf]
      %v2855 = vld [vmem:[%s1355 + $0x94] sm:$0xf]
      %v2856 = vld [vmem:[%s1355 + $0x98] sm:$0xf]
      %v2857 = vld [vmem:[%s1355 + $0x9c] sm:$0xf]
      %v2858 = vld [vmem:[%s1355 + $0xa0] sm:$0xf]
      %v2859 = vld [vmem:[%s1355 + $0xa4] sm:$0xf]
      %v2860 = vld [vmem:[%s1355 + $0xa8] sm:$0xf]
      %v2861 = vld [vmem:[%s1355 + $0xac] sm:$0xf]
      %v2862 = vld [vmem:[%s1355 + $0xb0] sm:$0xf]
      %v2863 = vld [vmem:[%s1355 + $0xb4] sm:$0xf]
      %v2864 = vld [vmem:[%s1355 + $0xb8] sm:$0xf]
      %v2865 = vld [vmem:[%s1355 + $0xbc] sm:$0xf]
      %s2866 = scalar_lea.vmem %s1, 448
      %v2867 = vld [vmem:[%s2866] sm:$0xf]
      %v2868 = vld [vmem:[%s2866 + $0x4] sm:$0xf]
      %v2869 = vld [vmem:[%s2866 + $0x8] sm:$0xf]
      %v2870 = vld [vmem:[%s2866 + $0xc] sm:$0xf]
      %v2871 = vld [vmem:[%s2866 + $0x10] sm:$0xf]
      %v2872 = vld [vmem:[%s2866 + $0x14] sm:$0xf]
      %v2873 = vld [vmem:[%s2866 + $0x18] sm:$0xf]
      %v2874 = vld [vmem:[%s2866 + $0x1c] sm:$0xf]
      %v2875 = vld [vmem:[%s2866 + $0x20] sm:$0xf]
      %v2876 = vld [vmem:[%s2866 + $0x24] sm:$0xf]
      %v2877 = vld [vmem:[%s2866 + $0x28] sm:$0xf]
      %v2878 = vld [vmem:[%s2866 + $0x2c] sm:$0xf]
      %v2879 = vld [vmem:[%s2866 + $0x30] sm:$0xf]
      %v2880 = vld [vmem:[%s2866 + $0x34] sm:$0xf]
      %v2881 = vld [vmem:[%s2866 + $0x38] sm:$0xf]
      %v2882 = vld [vmem:[%s2866 + $0x3c] sm:$0xf]
      %v2931 = vunpack.c.l.b16 %v2818
      %v2932 = vunpack.c.l.b16 %v2819
      %v2933 = vunpack.c.l.b16 %v2820
      %v2934 = vunpack.c.l.b16 %v2821
      %v2935 = vunpack.c.l.b16 %v2822
      %v2936 = vunpack.c.l.b16 %v2823
      %v2937 = vunpack.c.l.b16 %v2824
      %v2938 = vunpack.c.l.b16 %v2825
      %v2939 = vunpack.c.l.b16 %v2826
      %v2940 = vunpack.c.l.b16 %v2827
      %v2941 = vunpack.c.l.b16 %v2828
      %v2942 = vunpack.c.l.b16 %v2829
      %v2943 = vunpack.c.l.b16 %v2830
      %v2944 = vunpack.c.l.b16 %v2831
      %v2945 = vunpack.c.l.b16 %v2832
      %v2946 = vunpack.c.l.b16 %v2833
      %v2947 = vunpack.c.l.b16 %v2834
      %v2948 = vunpack.c.l.b16 %v2835
      %v2949 = vunpack.c.l.b16 %v2836
      %v2950 = vunpack.c.l.b16 %v2837
      %v2951 = vunpack.c.l.b16 %v2838
      %v2952 = vunpack.c.l.b16 %v2839
      %v2953 = vunpack.c.l.b16 %v2840
      %v2954 = vunpack.c.l.b16 %v2841
      %v2955 = vunpack.c.l.b16 %v2842
      %v2956 = vunpack.c.l.b16 %v2843
      %v2957 = vunpack.c.l.b16 %v2844
      %v2958 = vunpack.c.l.b16 %v2845
      %v2959 = vunpack.c.l.b16 %v2846
      %v2960 = vunpack.c.l.b16 %v2847
      %v2961 = vunpack.c.l.b16 %v2848
      %v2962 = vunpack.c.l.b16 %v2849
      %v2963 = vunpack.c.l.b16 %v2850
      %v2964 = vunpack.c.l.b16 %v2851
      %v2965 = vunpack.c.l.b16 %v2852
      %v2966 = vunpack.c.l.b16 %v2853
      %v2967 = vunpack.c.l.b16 %v2854
      %v2968 = vunpack.c.l.b16 %v2855
      %v2969 = vunpack.c.l.b16 %v2856
      %v2970 = vunpack.c.l.b16 %v2857
      %v2971 = vunpack.c.l.b16 %v2858
      %v2972 = vunpack.c.l.b16 %v2859
      %v2973 = vunpack.c.l.b16 %v2860
      %v2974 = vunpack.c.l.b16 %v2861
      %v2975 = vunpack.c.l.b16 %v2862
      %v2976 = vunpack.c.l.b16 %v2863
      %v2977 = vunpack.c.l.b16 %v2864
      %v2978 = vunpack.c.l.b16 %v2865
      %v2979 = vpack.c.b16 %v2932, %v2931
      %v2980 = vpack.c.b16 %v2934, %v2933
      %v2981 = vpack.c.b16 %v2936, %v2935
      %v2982 = vpack.c.b16 %v2938, %v2937
      %v2983 = vpack.c.b16 %v2940, %v2939
      %v2984 = vpack.c.b16 %v2942, %v2941
      %v2985 = vpack.c.b16 %v2944, %v2943
      %v2986 = vpack.c.b16 %v2946, %v2945
      %v2987 = vpack.c.b16 %v2948, %v2947
      %v2988 = vpack.c.b16 %v2950, %v2949
      %v2989 = vpack.c.b16 %v2952, %v2951
      %v2990 = vpack.c.b16 %v2954, %v2953
      %v2991 = vpack.c.b16 %v2956, %v2955
      %v2992 = vpack.c.b16 %v2958, %v2957
      %v2993 = vpack.c.b16 %v2960, %v2959
      %v2994 = vpack.c.b16 %v2962, %v2961
      %v2995 = vpack.c.b16 %v2964, %v2963
      %v2996 = vpack.c.b16 %v2966, %v2965
      %v2997 = vpack.c.b16 %v2968, %v2967
      %v2998 = vpack.c.b16 %v2970, %v2969
      %v2999 = vpack.c.b16 %v2972, %v2971
      %v3000 = vpack.c.b16 %v2974, %v2973
      %v3001 = vpack.c.b16 %v2976, %v2975
      %v3002 = vpack.c.b16 %v2978, %v2977
      %v3043 = vunpack.c.l.b16 %v2867
      %v3044 = vunpack.c.l.b16 %v2868
      %v3045 = vunpack.c.l.b16 %v2869
      %v3046 = vunpack.c.l.b16 %v2870
      %v3047 = vunpack.c.l.b16 %v2871
      %v3048 = vunpack.c.l.b16 %v2872
      %v3049 = vunpack.c.l.b16 %v2873
      %v3050 = vunpack.c.l.b16 %v2874
      %v3051 = vunpack.c.l.b16 %v2875
      %v3052 = vunpack.c.l.b16 %v2876
      %v3053 = vunpack.c.l.b16 %v2877
      %v3054 = vunpack.c.l.b16 %v2878
      %v3055 = vunpack.c.l.b16 %v2879
      %v3056 = vunpack.c.l.b16 %v2880
      %v3057 = vunpack.c.l.b16 %v2881
      %v3058 = vunpack.c.l.b16 %v2882
      %v3059 = vpack.c.b16 %v3044, %v3043
      %v3060 = vpack.c.b16 %v3046, %v3045
      %v3061 = vpack.c.b16 %v3048, %v3047
      %v3062 = vpack.c.b16 %v3050, %v3049
      %v3063 = vpack.c.b16 %v3052, %v3051
      %v3064 = vpack.c.b16 %v3054, %v3053
      %v3065 = vpack.c.b16 %v3056, %v3055
      %v3066 = vpack.c.b16 %v3058, %v3057
      %3075 = vmatprep.subr.bf16.mxu0 0
      %3076 = vmatpush1.bf16.msra.mxu0 %v3059
      %3077 = vmatprep.subr.bf16.mxu0 0
      %3078 = vmatpush1.bf16.msra.mxu0 %v3060
      %3079 = vmatprep.subr.bf16.mxu0 0
      %3080 = vmatpush1.bf16.msra.mxu0 %v3061
      %3081 = vmatprep.subr.bf16.mxu0 0
      %3082 = vmatpush1.bf16.msra.mxu0 %v3062
      %3083 = vmatprep.subr.bf16.mxu0 0
      %3084 = vmatpush1.bf16.msra.mxu0 %v3063
      %3085 = vmatprep.subr.bf16.mxu0 0
      %3086 = vmatpush1.bf16.msra.mxu0 %v3064
      %3087 = vmatprep.subr.bf16.mxu0 0
      %3088 = vmatpush1.bf16.msra.mxu0 %v3065
      %3089 = vmatprep.subr.bf16.mxu0 0
      %3090 = vmatpush1.bf16.msra.mxu0 %v3066
      %3091 = vmatprep.subr.bf16.mxu0 0
      %3092 = vmatpush1.bf16.msra.mxu0 0
      %3093 = vmatprep.subr.bf16.mxu0 0
      %3094 = vmatpush1.bf16.msra.mxu0 0
      %3095 = vmatprep.subr.bf16.mxu0 0
      %3096 = vmatpush1.bf16.msra.mxu0 0
      %3097 = vmatprep.subr.bf16.mxu0 0
      %3098 = vmatpush1.bf16.msra.mxu0 0
      %3099 = vmatprep.subr.bf16.mxu0 0
      %3100 = vmatpush1.bf16.msra.mxu0 0
      %3101 = vmatprep.subr.bf16.mxu0 0
      %3102 = vmatpush1.bf16.msra.mxu0 0
      %3103 = vmatprep.subr.bf16.mxu0 0
      %3104 = vmatpush1.bf16.msra.mxu0 0
      %3105 = vmatprep.subr.bf16.mxu0 0
      %3106 = vmatpush1.bf16.msra.mxu0 0
      %3107 = vmatprep.mubr.bf16.mxu0 0
      %3108 = vmatmul.mubr.bf16.gmra.mrb[0].mxu0 %v2979
      %v3109 = vpop.f32.mrb[0].mxu0
      %v3110 = vadd.f32 0.0, %v3109
      %v3111 = vpop.f32.mrb[0].mxu0
      %v3112 = vpop.f32.mrb[0].mxu0
      %v3113 = vadd.f32 0.0, %v3112
      %v3114 = vpop.f32.mrb[0].mxu0
      %3115 = vmatprep.mubr.bf16.mxu0 0
      %3116 = vmatmul.mubr.bf16.gmra.mrb[0].mxu0 %v2980
      %v3117 = vpop.f32.mrb[0].mxu0
      %v3118 = vadd.f32 0.0, %v3117
      %v3119 = vpop.f32.mrb[0].mxu0
      %v3120 = vpop.f32.mrb[0].mxu0
      %v3121 = vadd.f32 0.0, %v3120
      %v3122 = vpop.f32.mrb[0].mxu0
      %3123 = vmatprep.mubr.bf16.mxu0 0
      %3124 = vmatmul.mubr.bf16.gmra.mrb[0].mxu0 %v2981
      %v3125 = vpop.f32.mrb[0].mxu0
      %v3126 = vadd.f32 0.0, %v3125
      %v3127 = vpop.f32.mrb[0].mxu0
      %v3128 = vpop.f32.mrb[0].mxu0
      %v3129 = vadd.f32 0.0, %v3128
      %v3130 = vpop.f32.mrb[0].mxu0
      %3131 = vmatprep.mubr.bf16.mxu0 0
      %3132 = vmatmul.mubr.bf16.gmra.mrb[0].mxu0 %v2982
      %v3133 = vpop.f32.mrb[0].mxu0
      %v3134 = vadd.f32 0.0, %v3133
      %v3135 = vpop.f32.mrb[0].mxu0
      %v3136 = vpop.f32.mrb[0].mxu0
      %v3137 = vadd.f32 0.0, %v3136
      %v3138 = vpop.f32.mrb[0].mxu0
      %3139 = vmatprep.mubr.bf16.mxu0 0
      %3140 = vmatmul.mubr.bf16.gmra.mrb[0].mxu0 %v2983
      %v3141 = vpop.f32.mrb[0].mxu0
      %v3142 = vadd.f32 0.0, %v3141
      %v3143 = vpop.f32.mrb[0].mxu0
      %v3144 = vpop.f32.mrb[0].mxu0
      %v3145 = vadd.f32 0.0, %v3144
      %v3146 = vpop.f32.mrb[0].mxu0
      %3147 = vmatprep.mubr.bf16.mxu0 0
      %3148 = vmatmul.mubr.bf16.gmra.mrb[0].mxu0 %v2984
      %v3149 = vpop.f32.mrb[0].mxu0
      %v3150 = vadd.f32 0.0, %v3149
      %v3151 = vpop.f32.mrb[0].mxu0
      %v3152 = vpop.f32.mrb[0].mxu0
      %v3153 = vadd.f32 0.0, %v3152
      %v3154 = vpop.f32.mrb[0].mxu0
      %3155 = vmatprep.mubr.bf16.mxu0 0
      %3156 = vmatmul.mubr.bf16.gmra.mrb[0].mxu0 %v2985
      %v3157 = vpop.f32.mrb[0].mxu0
      %v3158 = vadd.f32 0.0, %v3157
      %v3159 = vpop.f32.mrb[0].mxu0
      %v3160 = vpop.f32.mrb[0].mxu0
      %v3161 = vadd.f32 0.0, %v3160
      %v3162 = vpop.f32.mrb[0].mxu0
      %3163 = vmatprep.mubr.bf16.mxu0 0
      %3164 = vmatmul.mubr.bf16.gmra.mrb[0].mxu0 %v2986
      %v3165 = vpop.f32.mrb[0].mxu0
      %v3166 = vadd.f32 0.0, %v3165
      %v3167 = vpop.f32.mrb[0].mxu0
      %v3168 = vpop.f32.mrb[0].mxu0
      %v3169 = vadd.f32 0.0, %v3168
      %v3170 = vpop.f32.mrb[0].mxu0
      %3171 = vmatprep.mubr.bf16.mxu0 0
      %3172 = vmatmul.mubr.bf16.gmra.mrb[0].mxu0 %v2987
      %v3173 = vpop.f32.mrb[0].mxu0
      %v3174 = vadd.f32 0.0, %v3173
      %v3175 = vpop.f32.mrb[0].mxu0
      %v3176 = vpop.f32.mrb[0].mxu0
      %v3177 = vadd.f32 0.0, %v3176
      %v3178 = vpop.f32.mrb[0].mxu0
      %3179 = vmatprep.mubr.bf16.mxu0 0
      %3180 = vmatmul.mubr.bf16.gmra.mrb[0].mxu0 %v2988
      %v3181 = vpop.f32.mrb[0].mxu0
      %v3182 = vadd.f32 0.0, %v3181
      %v3183 = vpop.f32.mrb[0].mxu0
      %v3184 = vpop.f32.mrb[0].mxu0
      %v3185 = vadd.f32 0.0, %v3184
      %v3186 = vpop.f32.mrb[0].mxu0
      %3187 = vmatprep.mubr.bf16.mxu0 0
      %3188 = vmatmul.mubr.bf16.gmra.mrb[0].mxu0 %v2989
      %v3189 = vpop.f32.mrb[0].mxu0
      %v3190 = vadd.f32 0.0, %v3189
      %v3191 = vpop.f32.mrb[0].mxu0
      %v3192 = vpop.f32.mrb[0].mxu0
      %v3193 = vadd.f32 0.0, %v3192
      %v3194 = vpop.f32.mrb[0].mxu0
      %3195 = vmatprep.mubr.bf16.mxu0 0
      %3196 = vmatmul.mubr.bf16.gmra.mrb[0].mxu0 %v2990
      %v3197 = vpop.f32.mrb[0].mxu0
      %v3198 = vadd.f32 0.0, %v3197
      %v3199 = vpop.f32.mrb[0].mxu0
      %v3200 = vpop.f32.mrb[0].mxu0
      %v3201 = vadd.f32 0.0, %v3200
      %v3202 = vpop.f32.mrb[0].mxu0
      %3203 = vmatprep.mubr.bf16.mxu0 0
      %3204 = vmatmul.mubr.bf16.gmra.mrb[0].mxu0 %v2991
      %v3205 = vpop.f32.mrb[0].mxu0
      %v3206 = vadd.f32 0.0, %v3205
      %v3207 = vpop.f32.mrb[0].mxu0
      %v3208 = vpop.f32.mrb[0].mxu0
      %v3209 = vadd.f32 0.0, %v3208
      %v3210 = vpop.f32.mrb[0].mxu0
      %3211 = vmatprep.mubr.bf16.mxu0 0
      %3212 = vmatmul.mubr.bf16.gmra.mrb[0].mxu0 %v2992
      %v3213 = vpop.f32.mrb[0].mxu0
      %v3214 = vadd.f32 0.0, %v3213
      %v3215 = vpop.f32.mrb[0].mxu0
      %v3216 = vpop.f32.mrb[0].mxu0
      %v3217 = vadd.f32 0.0, %v3216
      %v3218 = vpop.f32.mrb[0].mxu0
      %3219 = vmatprep.mubr.bf16.mxu0 0
      %3220 = vmatmul.mubr.bf16.gmra.mrb[0].mxu0 %v2993
      %v3221 = vpop.f32.mrb[0].mxu0
      %v3222 = vadd.f32 0.0, %v3221
      %v3223 = vpop.f32.mrb[0].mxu0
      %v3224 = vpop.f32.mrb[0].mxu0
      %v3225 = vadd.f32 0.0, %v3224
      %v3226 = vpop.f32.mrb[0].mxu0
      %3227 = vmatprep.mubr.bf16.mxu0 0
      %3228 = vmatmul.mubr.bf16.gmra.mrb[0].mxu0 %v2994
      %v3229 = vpop.f32.mrb[0].mxu0
      %v3230 = vadd.f32 0.0, %v3229
      %v3231 = vpop.f32.mrb[0].mxu0
      %v3232 = vpop.f32.mrb[0].mxu0
      %v3233 = vadd.f32 0.0, %v3232
      %v3234 = vpop.f32.mrb[0].mxu0
      %3235 = vmatprep.mubr.bf16.mxu0 0
      %3236 = vmatmul.mubr.bf16.gmra.mrb[0].mxu0 %v2995
      %v3237 = vpop.f32.mrb[0].mxu0
      %v3238 = vadd.f32 0.0, %v3237
      %v3239 = vpop.f32.mrb[0].mxu0
      %v3240 = vpop.f32.mrb[0].mxu0
      %v3241 = vadd.f32 0.0, %v3240
      %v3242 = vpop.f32.mrb[0].mxu0
      %3243 = vmatprep.mubr.bf16.mxu0 0
      %3244 = vmatmul.mubr.bf16.gmra.mrb[0].mxu0 %v2996
      %v3245 = vpop.f32.mrb[0].mxu0
      %v3246 = vadd.f32 0.0, %v3245
      %v3247 = vpop.f32.mrb[0].mxu0
      %v3248 = vpop.f32.mrb[0].mxu0
      %v3249 = vadd.f32 0.0, %v3248
      %v3250 = vpop.f32.mrb[0].mxu0
      %3251 = vmatprep.mubr.bf16.mxu0 0
      %3252 = vmatmul.mubr.bf16.gmra.mrb[0].mxu0 %v2997
      %v3253 = vpop.f32.mrb[0].mxu0
      %v3254 = vadd.f32 0.0, %v3253
      %v3255 = vpop.f32.mrb[0].mxu0
      %v3256 = vpop.f32.mrb[0].mxu0
      %v3257 = vadd.f32 0.0, %v3256
      %v3258 = vpop.f32.mrb[0].mxu0
      %3259 = vmatprep.mubr.bf16.mxu0 0
      %3260 = vmatmul.mubr.bf16.gmra.mrb[0].mxu0 %v2998
      %v3261 = vpop.f32.mrb[0].mxu0
      %v3262 = vadd.f32 0.0, %v3261
      %v3263 = vpop.f32.mrb[0].mxu0
      %v3264 = vpop.f32.mrb[0].mxu0
      %v3265 = vadd.f32 0.0, %v3264
      %v3266 = vpop.f32.mrb[0].mxu0
      %3267 = vmatprep.mubr.bf16.mxu0 0
      %3268 = vmatmul.mubr.bf16.gmra.mrb[0].mxu0 %v2999
      %v3269 = vpop.f32.mrb[0].mxu0
      %v3270 = vadd.f32 0.0, %v3269
      %v3271 = vpop.f32.mrb[0].mxu0
      %v3272 = vpop.f32.mrb[0].mxu0
      %v3273 = vadd.f32 0.0, %v3272
      %v3274 = vpop.f32.mrb[0].mxu0
      %3275 = vmatprep.mubr.bf16.mxu0 0
      %3276 = vmatmul.mubr.bf16.gmra.mrb[0].mxu0 %v3000
      %v3277 = vpop.f32.mrb[0].mxu0
      %v3278 = vadd.f32 0.0, %v3277
      %v3279 = vpop.f32.mrb[0].mxu0
      %v3280 = vpop.f32.mrb[0].mxu0
      %v3281 = vadd.f32 0.0, %v3280
      %v3282 = vpop.f32.mrb[0].mxu0
      %3283 = vmatprep.mubr.bf16.mxu0 0
      %3284 = vmatmul.mubr.bf16.gmra.mrb[0].mxu0 %v3001
      %v3285 = vpop.f32.mrb[0].mxu0
      %v3286 = vadd.f32 0.0, %v3285
      %v3287 = vpop.f32.mrb[0].mxu0
      %v3288 = vpop.f32.mrb[0].mxu0
      %v3289 = vadd.f32 0.0, %v3288
      %v3290 = vpop.f32.mrb[0].mxu0
      %3291 = vmatprep.mubr.bf16.mxu0 0
      %3292 = vmatmul.mubr.bf16.gmra.mrb[0].mxu0 %v3002
      %v3293 = vpop.f32.mrb[0].mxu0
      %v3294 = vadd.f32 0.0, %v3293
      %v3295 = vpop.f32.mrb[0].mxu0
      %v3296 = vpop.f32.mrb[0].mxu0
      %v3297 = vadd.f32 0.0, %v3296
      %v3298 = vpop.f32.mrb[0].mxu0
      %3299 = vdwg.mxu0
      %v3300 = vadd.f32 %v2628, %v3110
      %v3301 = vadd.f32 %v2631, %v3113
      %v3302 = vadd.f32 %v2636, %v3118
      %v3303 = vadd.f32 %v2639, %v3121
      %v3304 = vadd.f32 %v2644, %v3126
      %v3305 = vadd.f32 %v2647, %v3129
      %v3306 = vadd.f32 %v2652, %v3134
      %v3307 = vadd.f32 %v2655, %v3137
      %v3308 = vadd.f32 %v2660, %v3142
      %v3309 = vadd.f32 %v2663, %v3145
      %v3310 = vadd.f32 %v2668, %v3150
      %v3311 = vadd.f32 %v2671, %v3153
      %v3312 = vadd.f32 %v2676, %v3158
      %v3313 = vadd.f32 %v2679, %v3161
      %v3314 = vadd.f32 %v2684, %v3166
      %v3315 = vadd.f32 %v2687, %v3169
      %v3316 = vadd.f32 %v2692, %v3174
      %v3317 = vadd.f32 %v2695, %v3177
      %v3318 = vadd.f32 %v2700, %v3182
      %v3319 = vadd.f32 %v2703, %v3185
      %v3320 = vadd.f32 %v2708, %v3190
      %v3321 = vadd.f32 %v2711, %v3193
      %v3322 = vadd.f32 %v2716, %v3198
      %v3323 = vadd.f32 %v2719, %v3201
      %v3324 = vadd.f32 %v2724, %v3206
      %v3325 = vadd.f32 %v2727, %v3209
      %v3326 = vadd.f32 %v2732, %v3214
      %v3327 = vadd.f32 %v2735, %v3217
      %v3328 = vadd.f32 %v2740, %v3222
      %v3329 = vadd.f32 %v2743, %v3225
      %v3330 = vadd.f32 %v2748, %v3230
      %v3331 = vadd.f32 %v2751, %v3233
      %v3332 = vadd.f32 %v2756, %v3238
      %v3333 = vadd.f32 %v2759, %v3241
      %v3334 = vadd.f32 %v2764, %v3246
      %v3335 = vadd.f32 %v2767, %v3249
      %v3336 = vadd.f32 %v2772, %v3254
      %v3337 = vadd.f32 %v2775, %v3257
      %v3338 = vadd.f32 %v2780, %v3262
      %v3339 = vadd.f32 %v2783, %v3265
      %v3340 = vadd.f32 %v2788, %v3270
      %v3341 = vadd.f32 %v2791, %v3273
      %v3342 = vadd.f32 %v2796, %v3278
      %v3343 = vadd.f32 %v2799, %v3281
      %v3344 = vadd.f32 %v2804, %v3286
      %v3345 = vadd.f32 %v2807, %v3289
      %v3346 = vadd.f32 %v2812, %v3294
      %v3347 = vadd.f32 %v2815, %v3297
      %vm3396 = vcmask 1046528
      %v3397 = vrot.slane %v3300, 1
      %v3398 = vrot.slane %v3301, 1
      %v3399 = vsel %vm3396, %v3397, %v3398
      %v3400 = vrot.slane %v3302, 1
      %v3401 = vsel %vm3396, %v3398, %v3400
      %v3402 = vrot.slane %v3303, 1
      %v3403 = vrot.slane %v3304, 1
      %v3404 = vsel %vm3396, %v3402, %v3403
      %v3405 = vrot.slane %v3305, 1
      %v3406 = vsel %vm3396, %v3403, %v3405
      %v3407 = vrot.slane %v3306, 1
      %v3408 = vrot.slane %v3307, 1
      %v3409 = vsel %vm3396, %v3407, %v3408
      %v3410 = vrot.slane %v3308, 1
      %v3411 = vsel %vm3396, %v3408, %v3410
      %v3412 = vrot.slane %v3309, 1
      %v3413 = vrot.slane %v3310, 1
      %v3414 = vsel %vm3396, %v3412, %v3413
      %v3415 = vrot.slane %v3311, 1
      %v3416 = vsel %vm3396, %v3413, %v3415
      %v3417 = vrot.slane %v3312, 1
      %v3418 = vrot.slane %v3313, 1
      %v3419 = vsel %vm3396, %v3417, %v3418
      %v3420 = vrot.slane %v3314, 1
      %v3421 = vsel %vm3396, %v3418, %v3420
      %v3422 = vrot.slane %v3315, 1
      %v3423 = vrot.slane %v3316, 1
      %v3424 = vsel %vm3396, %v3422, %v3423
      %v3425 = vrot.slane %v3317, 1
      %v3426 = vsel %vm3396, %v3423, %v3425
      %v3427 = vrot.slane %v3318, 1
      %v3428 = vrot.slane %v3319, 1
      %v3429 = vsel %vm3396, %v3427, %v3428
      %v3430 = vrot.slane %v3320, 1
      %v3431 = vsel %vm3396, %v3428, %v3430
      %v3432 = vrot.slane %v3321, 1
      %v3433 = vrot.slane %v3322, 1
      %v3434 = vsel %vm3396, %v3432, %v3433
      %v3435 = vrot.slane %v3323, 1
      %v3436 = vsel %vm3396, %v3433, %v3435
      %v3437 = vrot.slane %v3324, 1
      %v3438 = vrot.slane %v3325, 1
      %v3439 = vsel %vm3396, %v3437, %v3438
      %v3440 = vrot.slane %v3326, 1
      %v3441 = vsel %vm3396, %v3438, %v3440
      %v3442 = vrot.slane %v3327, 1
      %v3443 = vrot.slane %v3328, 1
      %v3444 = vsel %vm3396, %v3442, %v3443
      %v3445 = vrot.slane %v3329, 1
      %v3446 = vsel %vm3396, %v3443, %v3445
      %v3447 = vrot.slane %v3330, 1
      %v3448 = vrot.slane %v3331, 1
      %v3449 = vsel %vm3396, %v3447, %v3448
      %v3450 = vrot.slane %v3332, 1
      %v3451 = vsel %vm3396, %v3448, %v3450
      %v3452 = vrot.slane %v3333, 1
      %v3453 = vrot.slane %v3334, 1
      %v3454 = vsel %vm3396, %v3452, %v3453
      %v3455 = vrot.slane %v3335, 1
      %v3456 = vsel %vm3396, %v3453, %v3455
      %v3457 = vrot.slane %v3336, 1
      %v3458 = vrot.slane %v3337, 1
      %v3459 = vsel %vm3396, %v3457, %v3458
      %v3460 = vrot.slane %v3338, 1
      %v3461 = vsel %vm3396, %v3458, %v3460
      %v3462 = vrot.slane %v3339, 1
      %v3463 = vrot.slane %v3340, 1
      %v3464 = vsel %vm3396, %v3462, %v3463
      %v3465 = vrot.slane %v3341, 1
      %v3466 = vsel %vm3396, %v3463, %v3465
      %v3467 = vrot.slane %v3342, 1
      %v3468 = vrot.slane %v3343, 1
      %v3469 = vsel %vm3396, %v3467, %v3468
      %v3470 = vrot.slane %v3344, 1
      %v3471 = vsel %vm3396, %v3468, %v3470
      %v3472 = vrot.slane %v3345, 1
      %v3473 = vrot.slane %v3346, 1
      %v3474 = vsel %vm3396, %v3472, %v3473
      %v3475 = vrot.slane %v3347, 1
      %v3476 = vsel %vm3396, %v3473, %v3475
      %v3509 = vadd.f32 %v1822, %v3399
      %v3510 = vadd.f32 %v1823, %v3401
      %v3511 = vadd.f32 %v1824, %v3404
      %v3512 = vadd.f32 %v1825, %v3406
      %v3513 = vadd.f32 %v1826, %v3409
      %v3514 = vadd.f32 %v1827, %v3411
      %v3515 = vadd.f32 %v1828, %v3414
      %v3516 = vadd.f32 %v1829, %v3416
      %v3517 = vadd.f32 %v1830, %v3419
      %v3518 = vadd.f32 %v1831, %v3421
      %v3519 = vadd.f32 %v1832, %v3424
      %v3520 = vadd.f32 %v1833, %v3426
      %v3521 = vadd.f32 %v1834, %v3429
      %v3522 = vadd.f32 %v1835, %v3431
      %v3523 = vadd.f32 %v1836, %v3434
      %v3524 = vadd.f32 %v1837, %v3436
      %v3525 = vadd.f32 %v1838, %v3439
      %v3526 = vadd.f32 %v1839, %v3441
      %v3527 = vadd.f32 %v1840, %v3444
      %v3528 = vadd.f32 %v1841, %v3446
      %v3529 = vadd.f32 %v1842, %v3449
      %v3530 = vadd.f32 %v1843, %v3451
      %v3531 = vadd.f32 %v1844, %v3454
      %v3532 = vadd.f32 %v1845, %v3456
      %v3533 = vadd.f32 %v1846, %v3459
      %v3534 = vadd.f32 %v1847, %v3461
      %v3535 = vadd.f32 %v1848, %v3464
      %v3536 = vadd.f32 %v1849, %v3466
      %v3537 = vadd.f32 %v1850, %v3469
      %v3538 = vadd.f32 %v1851, %v3471
      %v3539 = vadd.f32 %v1852, %v3474
      %v3540 = vadd.f32 %v1853, %v3476
      %v3541 = vld [vmem:[%s416] sm:$0xf]
      %v3542 = vld [vmem:[%s416 + $0x4] sm:$0xf]
      %v3543 = vld [vmem:[%s416 + $0x8] sm:$0xf]
      %v3544 = vld [vmem:[%s416 + $0xc] sm:$0xf]
      %v3545 = vld [vmem:[%s416 + $0x10] sm:$0xf]
      %v3546 = vld [vmem:[%s416 + $0x14] sm:$0xf]
      %v3547 = vld [vmem:[%s416 + $0x18] sm:$0xf]
      %v3548 = vld [vmem:[%s416 + $0x1c] sm:$0xf]
      %v3549 = vld [vmem:[%s416 + $0x20] sm:$0xf]
      %v3550 = vld [vmem:[%s416 + $0x24] sm:$0xf]
      %v3551 = vld [vmem:[%s416 + $0x28] sm:$0xf]
      %v3552 = vld [vmem:[%s416 + $0x2c] sm:$0xf]
      %v3553 = vld [vmem:[%s416 + $0x30] sm:$0xf]
      %v3554 = vld [vmem:[%s416 + $0x34] sm:$0xf]
      %v3555 = vld [vmem:[%s416 + $0x38] sm:$0xf]
      %v3556 = vld [vmem:[%s416 + $0x3c] sm:$0xf]
      %v3557 = vld [vmem:[%s416 + $0x40] sm:$0xf]
      %v3558 = vld [vmem:[%s416 + $0x44] sm:$0xf]
      %v3559 = vld [vmem:[%s416 + $0x48] sm:$0xf]
      %v3560 = vld [vmem:[%s416 + $0x4c] sm:$0xf]
      %v3561 = vld [vmem:[%s416 + $0x50] sm:$0xf]
      %v3562 = vld [vmem:[%s416 + $0x54] sm:$0xf]
      %v3563 = vld [vmem:[%s416 + $0x58] sm:$0xf]
      %v3564 = vld [vmem:[%s416 + $0x5c] sm:$0xf]
      %v3565 = vld [vmem:[%s416 + $0x60] sm:$0xf]
      %v3566 = vld [vmem:[%s416 + $0x64] sm:$0xf]
      %v3567 = vld [vmem:[%s416 + $0x68] sm:$0xf]
      %v3568 = vld [vmem:[%s416 + $0x6c] sm:$0xf]
      %v3569 = vld [vmem:[%s416 + $0x70] sm:$0xf]
      %v3570 = vld [vmem:[%s416 + $0x74] sm:$0xf]
      %v3571 = vld [vmem:[%s416 + $0x78] sm:$0xf]
      %v3572 = vld [vmem:[%s416 + $0x7c] sm:$0xf]
      %v3573 = vld [vmem:[%s416 + $0x80] sm:$0xf]
      %v3574 = vld [vmem:[%s416 + $0x84] sm:$0xf]
      %v3575 = vld [vmem:[%s416 + $0x88] sm:$0xf]
      %v3576 = vld [vmem:[%s416 + $0x8c] sm:$0xf]
      %v3577 = vld [vmem:[%s416 + $0x90] sm:$0xf]
      %v3578 = vld [vmem:[%s416 + $0x94] sm:$0xf]
      %v3579 = vld [vmem:[%s416 + $0x98] sm:$0xf]
      %v3580 = vld [vmem:[%s416 + $0x9c] sm:$0xf]
      %v3581 = vld [vmem:[%s416 + $0xa0] sm:$0xf]
      %v3582 = vld [vmem:[%s416 + $0xa4] sm:$0xf]
      %v3583 = vld [vmem:[%s416 + $0xa8] sm:$0xf]
      %v3584 = vld [vmem:[%s416 + $0xac] sm:$0xf]
      %v3585 = vld [vmem:[%s416 + $0xb0] sm:$0xf]
      %v3586 = vld [vmem:[%s416 + $0xb4] sm:$0xf]
      %v3587 = vld [vmem:[%s416 + $0xb8] sm:$0xf]
      %v3588 = vld [vmem:[%s416 + $0xbc] sm:$0xf]
      %s3589 = scalar_lea.vmem %s1, 128
      %v3590 = vld [vmem:[%s3589] sm:$0xf]
      %v3591 = vld [vmem:[%s3589 + $0x4] sm:$0xf]
      %v3592 = vld [vmem:[%s3589 + $0x8] sm:$0xf]
      %v3593 = vld [vmem:[%s3589 + $0xc] sm:$0xf]
      %v3594 = vld [vmem:[%s3589 + $0x10] sm:$0xf]
      %v3595 = vld [vmem:[%s3589 + $0x14] sm:$0xf]
      %v3596 = vld [vmem:[%s3589 + $0x18] sm:$0xf]
      %v3597 = vld [vmem:[%s3589 + $0x1c] sm:$0xf]
      %v3598 = vld [vmem:[%s3589 + $0x20] sm:$0xf]
      %v3599 = vld [vmem:[%s3589 + $0x24] sm:$0xf]
      %v3600 = vld [vmem:[%s3589 + $0x28] sm:$0xf]
      %v3601 = vld [vmem:[%s3589 + $0x2c] sm:$0xf]
      %v3602 = vld [vmem:[%s3589 + $0x30] sm:$0xf]
      %v3603 = vld [vmem:[%s3589 + $0x34] sm:$0xf]
      %v3604 = vld [vmem:[%s3589 + $0x38] sm:$0xf]
      %v3605 = vld [vmem:[%s3589 + $0x3c] sm:$0xf]
      %v3606 = vld [vmem:[%s487] sm:$0xf]
      %v3607 = vld [vmem:[%s487 + $0x4] sm:$0xf]
      %v3608 = vld [vmem:[%s487 + $0x8] sm:$0xf]
      %v3609 = vld [vmem:[%s487 + $0xc] sm:$0xf]
      %v3610 = vld [vmem:[%s487 + $0x10] sm:$0xf]
      %v3611 = vld [vmem:[%s487 + $0x14] sm:$0xf]
      %v3612 = vld [vmem:[%s487 + $0x18] sm:$0xf]
      %v3613 = vld [vmem:[%s487 + $0x1c] sm:$0xf]
      %v3614 = vld [vmem:[%s487 + $0x20] sm:$0xf]
      %v3615 = vld [vmem:[%s487 + $0x24] sm:$0xf]
      %v3616 = vld [vmem:[%s487 + $0x28] sm:$0xf]
      %v3617 = vld [vmem:[%s487 + $0x2c] sm:$0xf]
      %v3618 = vld [vmem:[%s487 + $0x30] sm:$0xf]
      %v3619 = vld [vmem:[%s487 + $0x34] sm:$0xf]
      %v3620 = vld [vmem:[%s487 + $0x38] sm:$0xf]
      %v3621 = vld [vmem:[%s487 + $0x3c] sm:$0xf]
      %v3622 = vld [vmem:[%s487 + $0x40] sm:$0xf]
      %v3623 = vld [vmem:[%s487 + $0x44] sm:$0xf]
      %v3624 = vld [vmem:[%s487 + $0x48] sm:$0xf]
      %v3625 = vld [vmem:[%s487 + $0x4c] sm:$0xf]
      %v3626 = vld [vmem:[%s487 + $0x50] sm:$0xf]
      %v3627 = vld [vmem:[%s487 + $0x54] sm:$0xf]
      %v3628 = vld [vmem:[%s487 + $0x58] sm:$0xf]
      %v3629 = vld [vmem:[%s487 + $0x5c] sm:$0xf]
      %v3630 = vld [vmem:[%s487 + $0x60] sm:$0xf]
      %v3631 = vld [vmem:[%s487 + $0x64] sm:$0xf]
      %v3632 = vld [vmem:[%s487 + $0x68] sm:$0xf]
      %v3633 = vld [vmem:[%s487 + $0x6c] sm:$0xf]
      %v3634 = vld [vmem:[%s487 + $0x70] sm:$0xf]
      %v3635 = vld [vmem:[%s487 + $0x74] sm:$0xf]
      %v3636 = vld [vmem:[%s487 + $0x78] sm:$0xf]
      %v3637 = vld [vmem:[%s487 + $0x7c] sm:$0xf]
      %v3638 = vld [vmem:[%s487 + $0x80] sm:$0xf]
      %v3639 = vld [vmem:[%s487 + $0x84] sm:$0xf]
      %v3640 = vld [vmem:[%s487 + $0x88] sm:$0xf]
      %v3641 = vld [vmem:[%s487 + $0x8c] sm:$0xf]
      %v3642 = vld [vmem:[%s487 + $0x90] sm:$0xf]
      %v3643 = vld [vmem:[%s487 + $0x94] sm:$0xf]
      %v3644 = vld [vmem:[%s487 + $0x98] sm:$0xf]
      %v3645 = vld [vmem:[%s487 + $0x9c] sm:$0xf]
      %v3646 = vld [vmem:[%s487 + $0xa0] sm:$0xf]
      %v3647 = vld [vmem:[%s487 + $0xa4] sm:$0xf]
      %v3648 = vld [vmem:[%s487 + $0xa8] sm:$0xf]
      %v3649 = vld [vmem:[%s487 + $0xac] sm:$0xf]
      %v3650 = vld [vmem:[%s487 + $0xb0] sm:$0xf]
      %v3651 = vld [vmem:[%s487 + $0xb4] sm:$0xf]
      %v3652 = vld [vmem:[%s487 + $0xb8] sm:$0xf]
      %v3653 = vld [vmem:[%s487 + $0xbc] sm:$0xf]
      %s3654 = scalar_lea.vmem %s1, 320
      %v3655 = vld [vmem:[%s3654] sm:$0xf]
      %v3656 = vld [vmem:[%s3654 + $0x4] sm:$0xf]
      %v3657 = vld [vmem:[%s3654 + $0x8] sm:$0xf]
      %v3658 = vld [vmem:[%s3654 + $0xc] sm:$0xf]
      %v3659 = vld [vmem:[%s3654 + $0x10] sm:$0xf]
      %v3660 = vld [vmem:[%s3654 + $0x14] sm:$0xf]
      %v3661 = vld [vmem:[%s3654 + $0x18] sm:$0xf]
      %v3662 = vld [vmem:[%s3654 + $0x1c] sm:$0xf]
      %v3663 = vld [vmem:[%s3654 + $0x20] sm:$0xf]
      %v3664 = vld [vmem:[%s3654 + $0x24] sm:$0xf]
      %v3665 = vld [vmem:[%s3654 + $0x28] sm:$0xf]
      %v3666 = vld [vmem:[%s3654 + $0x2c] sm:$0xf]
      %v3667 = vld [vmem:[%s3654 + $0x30] sm:$0xf]
      %v3668 = vld [vmem:[%s3654 + $0x34] sm:$0xf]
      %v3669 = vld [vmem:[%s3654 + $0x38] sm:$0xf]
      %v3670 = vld [vmem:[%s3654 + $0x3c] sm:$0xf]
      %v3719 = vunpack.c.l.b16 %v3606
      %v3720 = vunpack.c.l.b16 %v3607
      %v3721 = vunpack.c.l.b16 %v3608
      %v3722 = vunpack.c.l.b16 %v3609
      %v3723 = vunpack.c.l.b16 %v3610
      %v3724 = vunpack.c.l.b16 %v3611
      %v3725 = vunpack.c.l.b16 %v3612
      %v3726 = vunpack.c.l.b16 %v3613
      %v3727 = vunpack.c.l.b16 %v3614
      %v3728 = vunpack.c.l.b16 %v3615
      %v3729 = vunpack.c.l.b16 %v3616
      %v3730 = vunpack.c.l.b16 %v3617
      %v3731 = vunpack.c.l.b16 %v3618
      %v3732 = vunpack.c.l.b16 %v3619
      %v3733 = vunpack.c.l.b16 %v3620
      %v3734 = vunpack.c.l.b16 %v3621
      %v3735 = vunpack.c.l.b16 %v3622
      %v3736 = vunpack.c.l.b16 %v3623
      %v3737 = vunpack.c.l.b16 %v3624
      %v3738 = vunpack.c.l.b16 %v3625
      %v3739 = vunpack.c.l.b16 %v3626
      %v3740 = vunpack.c.l.b16 %v3627
      %v3741 = vunpack.c.l.b16 %v3628
      %v3742 = vunpack.c.l.b16 %v3629
      %v3743 = vunpack.c.l.b16 %v3630
      %v3744 = vunpack.c.l.b16 %v3631
      %v3745 = vunpack.c.l.b16 %v3632
      %v3746 = vunpack.c.l.b16 %v3633
      %v3747 = vunpack.c.l.b16 %v3634
      %v3748 = vunpack.c.l.b16 %v3635
      %v3749 = vunpack.c.l.b16 %v3636
      %v3750 = vunpack.c.l.b16 %v3637
      %v3751 = vunpack.c.l.b16 %v3638
      %v3752 = vunpack.c.l.b16 %v3639
      %v3753 = vunpack.c.l.b16 %v3640
      %v3754 = vunpack.c.l.b16 %v3641
      %v3755 = vunpack.c.l.b16 %v3642
      %v3756 = vunpack.c.l.b16 %v3643
      %v3757 = vunpack.c.l.b16 %v3644
      %v3758 = vunpack.c.l.b16 %v3645
      %v3759 = vunpack.c.l.b16 %v3646
      %v3760 = vunpack.c.l.b16 %v3647
      %v3761 = vunpack.c.l.b16 %v3648
      %v3762 = vunpack.c.l.b16 %v3649
      %v3763 = vunpack.c.l.b16 %v3650
      %v3764 = vunpack.c.l.b16 %v3651
      %v3765 = vunpack.c.l.b16 %v3652
      %v3766 = vunpack.c.l.b16 %v3653
      %v3767 = vpack.c.b16 %v3720, %v3719
      %v3768 = vpack.c.b16 %v3722, %v3721
      %v3769 = vpack.c.b16 %v3724, %v3723
      %v3770 = vpack.c.b16 %v3726, %v3725
      %v3771 = vpack.c.b16 %v3728, %v3727
      %v3772 = vpack.c.b16 %v3730, %v3729
      %v3773 = vpack.c.b16 %v3732, %v3731
      %v3774 = vpack.c.b16 %v3734, %v3733
      %v3775 = vpack.c.b16 %v3736, %v3735
      %v3776 = vpack.c.b16 %v3738, %v3737
      %v3777 = vpack.c.b16 %v3740, %v3739
      %v3778 = vpack.c.b16 %v3742, %v3741
      %v3779 = vpack.c.b16 %v3744, %v3743
      %v3780 = vpack.c.b16 %v3746, %v3745
      %v3781 = vpack.c.b16 %v3748, %v3747
      %v3782 = vpack.c.b16 %v3750, %v3749
      %v3783 = vpack.c.b16 %v3752, %v3751
      %v3784 = vpack.c.b16 %v3754, %v3753
      %v3785 = vpack.c.b16 %v3756, %v3755
      %v3786 = vpack.c.b16 %v3758, %v3757
      %v3787 = vpack.c.b16 %v3760, %v3759
      %v3788 = vpack.c.b16 %v3762, %v3761
      %v3789 = vpack.c.b16 %v3764, %v3763
      %v3790 = vpack.c.b16 %v3766, %v3765
      %v3831 = vunpack.c.l.b16 %v3655
      %v3832 = vunpack.c.l.b16 %v3656
      %v3833 = vunpack.c.l.b16 %v3657
      %v3834 = vunpack.c.l.b16 %v3658
      %v3835 = vunpack.c.l.b16 %v3659
      %v3836 = vunpack.c.l.b16 %v3660
      %v3837 = vunpack.c.l.b16 %v3661
      %v3838 = vunpack.c.l.b16 %v3662
      %v3839 = vunpack.c.l.b16 %v3663
      %v3840 = vunpack.c.l.b16 %v3664
      %v3841 = vunpack.c.l.b16 %v3665
      %v3842 = vunpack.c.l.b16 %v3666
      %v3843 = vunpack.c.l.b16 %v3667
      %v3844 = vunpack.c.l.b16 %v3668
      %v3845 = vunpack.c.l.b16 %v3669
      %v3846 = vunpack.c.l.b16 %v3670
      %v3847 = vpack.c.b16 %v3832, %v3831
      %v3848 = vpack.c.b16 %v3834, %v3833
      %v3849 = vpack.c.b16 %v3836, %v3835
      %v3850 = vpack.c.b16 %v3838, %v3837
      %v3851 = vpack.c.b16 %v3840, %v3839
      %v3852 = vpack.c.b16 %v3842, %v3841
      %v3853 = vpack.c.b16 %v3844, %v3843
      %v3854 = vpack.c.b16 %v3846, %v3845
      %3863 = vmatprep.subr.bf16.mxu0 0
      %3864 = vmatpush1.bf16.msra.mxu0 %v3847
      %3865 = vmatprep.subr.bf16.mxu0 0
      %3866 = vmatpush1.bf16.msra.mxu0 %v3848
      %3867 = vmatprep.subr.bf16.mxu0 0
      %3868 = vmatpush1.bf16.msra.mxu0 %v3849
      %3869 = vmatprep.subr.bf16.mxu0 0
      %3870 = vmatpush1.bf16.msra.mxu0 %v3850
      %3871 = vmatprep.subr.bf16.mxu0 0
      %3872 = vmatpush1.bf16.msra.mxu0 %v3851
      %3873 = vmatprep.subr.bf16.mxu0 0
      %3874 = vmatpush1.bf16.msra.mxu0 %v3852
      %3875 = vmatprep.subr.bf16.mxu0 0
      %3876 = vmatpush1.bf16.msra.mxu0 %v3853
      %3877 = vmatprep.subr.bf16.mxu0 0
      %3878 = vmatpush1.bf16.msra.mxu0 %v3854
      %3879 = vmatprep.subr.bf16.mxu0 0
      %3880 = vmatpush1.bf16.msra.mxu0 0
      %3881 = vmatprep.subr.bf16.mxu0 0
      %3882 = vmatpush1.bf16.msra.mxu0 0
      %3883 = vmatprep.subr.bf16.mxu0 0
      %3884 = vmatpush1.bf16.msra.mxu0 0
      %3885 = vmatprep.subr.bf16.mxu0 0
      %3886 = vmatpush1.bf16.msra.mxu0 0
      %3887 = vmatprep.subr.bf16.mxu0 0
      %3888 = vmatpush1.bf16.msra.mxu0 0
      %3889 = vmatprep.subr.bf16.mxu0 0
      %3890 = vmatpush1.bf16.msra.mxu0 0
      %3891 = vmatprep.subr.bf16.mxu0 0
      %3892 = vmatpush1.bf16.msra.mxu0 0
      %3893 = vmatprep.subr.bf16.mxu0 0
      %3894 = vmatpush1.bf16.msra.mxu0 0
      %3895 = vmatprep.mubr.bf16.mxu0 0
      %3896 = vmatmul.mubr.bf16.gmra.mrb[0].mxu0 %v3767
      %v3897 = vpop.f32.mrb[0].mxu0
      %v3898 = vadd.f32 0.0, %v3897
      %v3899 = vpop.f32.mrb[0].mxu0
      %v3900 = vpop.f32.mrb[0].mxu0
      %v3901 = vadd.f32 0.0, %v3900
      %v3902 = vpop.f32.mrb[0].mxu0
      %3903 = vmatprep.mubr.bf16.mxu0 0
      %3904 = vmatmul.mubr.bf16.gmra.mrb[0].mxu0 %v3768
      %v3905 = vpop.f32.mrb[0].mxu0
      %v3906 = vadd.f32 0.0, %v3905
      %v3907 = vpop.f32.mrb[0].mxu0
      %v3908 = vpop.f32.mrb[0].mxu0
      %v3909 = vadd.f32 0.0, %v3908
      %v3910 = vpop.f32.mrb[0].mxu0
      %3911 = vmatprep.mubr.bf16.mxu0 0
      %3912 = vmatmul.mubr.bf16.gmra.mrb[0].mxu0 %v3769
      %v3913 = vpop.f32.mrb[0].mxu0
      %v3914 = vadd.f32 0.0, %v3913
      %v3915 = vpop.f32.mrb[0].mxu0
      %v3916 = vpop.f32.mrb[0].mxu0
      %v3917 = vadd.f32 0.0, %v3916
      %v3918 = vpop.f32.mrb[0].mxu0
      %3919 = vmatprep.mubr.bf16.mxu0 0
      %3920 = vmatmul.mubr.bf16.gmra.mrb[0].mxu0 %v3770
      %v3921 = vpop.f32.mrb[0].mxu0
      %v3922 = vadd.f32 0.0, %v3921
      %v3923 = vpop.f32.mrb[0].mxu0
      %v3924 = vpop.f32.mrb[0].mxu0
      %v3925 = vadd.f32 0.0, %v3924
      %v3926 = vpop.f32.mrb[0].mxu0
      %3927 = vmatprep.mubr.bf16.mxu0 0
      %3928 = vmatmul.mubr.bf16.gmra.mrb[0].mxu0 %v3771
      %v3929 = vpop.f32.mrb[0].mxu0
      %v3930 = vadd.f32 0.0, %v3929
      %v3931 = vpop.f32.mrb[0].mxu0
      %v3932 = vpop.f32.mrb[0].mxu0
      %v3933 = vadd.f32 0.0, %v3932
      %v3934 = vpop.f32.mrb[0].mxu0
      %3935 = vmatprep.mubr.bf16.mxu0 0
      %3936 = vmatmul.mubr.bf16.gmra.mrb[0].mxu0 %v3772
      %v3937 = vpop.f32.mrb[0].mxu0
      %v3938 = vadd.f32 0.0, %v3937
      %v3939 = vpop.f32.mrb[0].mxu0
      %v3940 = vpop.f32.mrb[0].mxu0
      %v3941 = vadd.f32 0.0, %v3940
      %v3942 = vpop.f32.mrb[0].mxu0
      %3943 = vmatprep.mubr.bf16.mxu0 0
      %3944 = vmatmul.mubr.bf16.gmra.mrb[0].mxu0 %v3773
      %v3945 = vpop.f32.mrb[0].mxu0
      %v3946 = vadd.f32 0.0, %v3945
      %v3947 = vpop.f32.mrb[0].mxu0
      %v3948 = vpop.f32.mrb[0].mxu0
      %v3949 = vadd.f32 0.0, %v3948
      %v3950 = vpop.f32.mrb[0].mxu0
      %3951 = vmatprep.mubr.bf16.mxu0 0
      %3952 = vmatmul.mubr.bf16.gmra.mrb[0].mxu0 %v3774
      %v3953 = vpop.f32.mrb[0].mxu0
      %v3954 = vadd.f32 0.0, %v3953
      %v3955 = vpop.f32.mrb[0].mxu0
      %v3956 = vpop.f32.mrb[0].mxu0
      %v3957 = vadd.f32 0.0, %v3956
      %v3958 = vpop.f32.mrb[0].mxu0
      %3959 = vmatprep.mubr.bf16.mxu0 0
      %3960 = vmatmul.mubr.bf16.gmra.mrb[0].mxu0 %v3775
      %v3961 = vpop.f32.mrb[0].mxu0
      %v3962 = vadd.f32 0.0, %v3961
      %v3963 = vpop.f32.mrb[0].mxu0
      %v3964 = vpop.f32.mrb[0].mxu0
      %v3965 = vadd.f32 0.0, %v3964
      %v3966 = vpop.f32.mrb[0].mxu0
      %3967 = vmatprep.mubr.bf16.mxu0 0
      %3968 = vmatmul.mubr.bf16.gmra.mrb[0].mxu0 %v3776
      %v3969 = vpop.f32.mrb[0].mxu0
      %v3970 = vadd.f32 0.0, %v3969
      %v3971 = vpop.f32.mrb[0].mxu0
      %v3972 = vpop.f32.mrb[0].mxu0
      %v3973 = vadd.f32 0.0, %v3972
      %v3974 = vpop.f32.mrb[0].mxu0
      %3975 = vmatprep.mubr.bf16.mxu0 0
      %3976 = vmatmul.mubr.bf16.gmra.mrb[0].mxu0 %v3777
      %v3977 = vpop.f32.mrb[0].mxu0
      %v3978 = vadd.f32 0.0, %v3977
      %v3979 = vpop.f32.mrb[0].mxu0
      %v3980 = vpop.f32.mrb[0].mxu0
      %v3981 = vadd.f32 0.0, %v3980
      %v3982 = vpop.f32.mrb[0].mxu0
      %3983 = vmatprep.mubr.bf16.mxu0 0
      %3984 = vmatmul.mubr.bf16.gmra.mrb[0].mxu0 %v3778
      %v3985 = vpop.f32.mrb[0].mxu0
      %v3986 = vadd.f32 0.0, %v3985
      %v3987 = vpop.f32.mrb[0].mxu0
      %v3988 = vpop.f32.mrb[0].mxu0
      %v3989 = vadd.f32 0.0, %v3988
      %v3990 = vpop.f32.mrb[0].mxu0
      %3991 = vmatprep.mubr.bf16.mxu0 0
      %3992 = vmatmul.mubr.bf16.gmra.mrb[0].mxu0 %v3779
      %v3993 = vpop.f32.mrb[0].mxu0
      %v3994 = vadd.f32 0.0, %v3993
      %v3995 = vpop.f32.mrb[0].mxu0
      %v3996 = vpop.f32.mrb[0].mxu0
      %v3997 = vadd.f32 0.0, %v3996
      %v3998 = vpop.f32.mrb[0].mxu0
      %3999 = vmatprep.mubr.bf16.mxu0 0
      %4000 = vmatmul.mubr.bf16.gmra.mrb[0].mxu0 %v3780
      %v4001 = vpop.f32.mrb[0].mxu0
      %v4002 = vadd.f32 0.0, %v4001
      %v4003 = vpop.f32.mrb[0].mxu0
      %v4004 = vpop.f32.mrb[0].mxu0
      %v4005 = vadd.f32 0.0, %v4004
      %v4006 = vpop.f32.mrb[0].mxu0
      %4007 = vmatprep.mubr.bf16.mxu0 0
      %4008 = vmatmul.mubr.bf16.gmra.mrb[0].mxu0 %v3781
      %v4009 = vpop.f32.mrb[0].mxu0
      %v4010 = vadd.f32 0.0, %v4009
      %v4011 = vpop.f32.mrb[0].mxu0
      %v4012 = vpop.f32.mrb[0].mxu0
      %v4013 = vadd.f32 0.0, %v4012
      %v4014 = vpop.f32.mrb[0].mxu0
      %4015 = vmatprep.mubr.bf16.mxu0 0
      %4016 = vmatmul.mubr.bf16.gmra.mrb[0].mxu0 %v3782
      %v4017 = vpop.f32.mrb[0].mxu0
      %v4018 = vadd.f32 0.0, %v4017
      %v4019 = vpop.f32.mrb[0].mxu0
      %v4020 = vpop.f32.mrb[0].mxu0
      %v4021 = vadd.f32 0.0, %v4020
      %v4022 = vpop.f32.mrb[0].mxu0
      %4023 = vmatprep.mubr.bf16.mxu0 0
      %4024 = vmatmul.mubr.bf16.gmra.mrb[0].mxu0 %v3783
      %v4025 = vpop.f32.mrb[0].mxu0
      %v4026 = vadd.f32 0.0, %v4025
      %v4027 = vpop.f32.mrb[0].mxu0
      %v4028 = vpop.f32.mrb[0].mxu0
      %v4029 = vadd.f32 0.0, %v4028
      %v4030 = vpop.f32.mrb[0].mxu0
      %4031 = vmatprep.mubr.bf16.mxu0 0
      %4032 = vmatmul.mubr.bf16.gmra.mrb[0].mxu0 %v3784
      %v4033 = vpop.f32.mrb[0].mxu0
      %v4034 = vadd.f32 0.0, %v4033
      %v4035 = vpop.f32.mrb[0].mxu0
      %v4036 = vpop.f32.mrb[0].mxu0
      %v4037 = vadd.f32 0.0, %v4036
      %v4038 = vpop.f32.mrb[0].mxu0
      %4039 = vmatprep.mubr.bf16.mxu0 0
      %4040 = vmatmul.mubr.bf16.gmra.mrb[0].mxu0 %v3785
      %v4041 = vpop.f32.mrb[0].mxu0
      %v4042 = vadd.f32 0.0, %v4041
      %v4043 = vpop.f32.mrb[0].mxu0
      %v4044 = vpop.f32.mrb[0].mxu0
      %v4045 = vadd.f32 0.0, %v4044
      %v4046 = vpop.f32.mrb[0].mxu0
      %4047 = vmatprep.mubr.bf16.mxu0 0
      %4048 = vmatmul.mubr.bf16.gmra.mrb[0].mxu0 %v3786
      %v4049 = vpop.f32.mrb[0].mxu0
      %v4050 = vadd.f32 0.0, %v4049
      %v4051 = vpop.f32.mrb[0].mxu0
      %v4052 = vpop.f32.mrb[0].mxu0
      %v4053 = vadd.f32 0.0, %v4052
      %v4054 = vpop.f32.mrb[0].mxu0
      %4055 = vmatprep.mubr.bf16.mxu0 0
      %4056 = vmatmul.mubr.bf16.gmra.mrb[0].mxu0 %v3787
      %v4057 = vpop.f32.mrb[0].mxu0
      %v4058 = vadd.f32 0.0, %v4057
      %v4059 = vpop.f32.mrb[0].mxu0
      %v4060 = vpop.f32.mrb[0].mxu0
      %v4061 = vadd.f32 0.0, %v4060
      %v4062 = vpop.f32.mrb[0].mxu0
      %4063 = vmatprep.mubr.bf16.mxu0 0
      %4064 = vmatmul.mubr.bf16.gmra.mrb[0].mxu0 %v3788
      %v4065 = vpop.f32.mrb[0].mxu0
      %v4066 = vadd.f32 0.0, %v4065
      %v4067 = vpop.f32.mrb[0].mxu0
      %v4068 = vpop.f32.mrb[0].mxu0
      %v4069 = vadd.f32 0.0, %v4068
      %v4070 = vpop.f32.mrb[0].mxu0
      %4071 = vmatprep.mubr.bf16.mxu0 0
      %4072 = vmatmul.mubr.bf16.gmra.mrb[0].mxu0 %v3789
      %v4073 = vpop.f32.mrb[0].mxu0
      %v4074 = vadd.f32 0.0, %v4073
      %v4075 = vpop.f32.mrb[0].mxu0
      %v4076 = vpop.f32.mrb[0].mxu0
      %v4077 = vadd.f32 0.0, %v4076
      %v4078 = vpop.f32.mrb[0].mxu0
      %4079 = vmatprep.mubr.bf16.mxu0 0
      %4080 = vmatmul.mubr.bf16.gmra.mrb[0].mxu0 %v3790
      %v4081 = vpop.f32.mrb[0].mxu0
      %v4082 = vadd.f32 0.0, %v4081
      %v4083 = vpop.f32.mrb[0].mxu0
      %v4084 = vpop.f32.mrb[0].mxu0
      %v4085 = vadd.f32 0.0, %v4084
      %v4086 = vpop.f32.mrb[0].mxu0
      %4087 = vdwg.mxu0
      %v4136 = vunpack.c.l.b16 %v3541
      %v4137 = vunpack.c.l.b16 %v3542
      %v4138 = vunpack.c.l.b16 %v3543
      %v4139 = vunpack.c.l.b16 %v3544
      %v4140 = vunpack.c.l.b16 %v3545
      %v4141 = vunpack.c.l.b16 %v3546
      %v4142 = vunpack.c.l.b16 %v3547
      %v4143 = vunpack.c.l.b16 %v3548
      %v4144 = vunpack.c.l.b16 %v3549
      %v4145 = vunpack.c.l.b16 %v3550
      %v4146 = vunpack.c.l.b16 %v3551
      %v4147 = vunpack.c.l.b16 %v3552
      %v4148 = vunpack.c.l.b16 %v3553
      %v4149 = vunpack.c.l.b16 %v3554
      %v4150 = vunpack.c.l.b16 %v3555
      %v4151 = vunpack.c.l.b16 %v3556
      %v4152 = vunpack.c.l.b16 %v3557
      %v4153 = vunpack.c.l.b16 %v3558
      %v4154 = vunpack.c.l.b16 %v3559
      %v4155 = vunpack.c.l.b16 %v3560
      %v4156 = vunpack.c.l.b16 %v3561
      %v4157 = vunpack.c.l.b16 %v3562
      %v4158 = vunpack.c.l.b16 %v3563
      %v4159 = vunpack.c.l.b16 %v3564
      %v4160 = vunpack.c.l.b16 %v3565
      %v4161 = vunpack.c.l.b16 %v3566
      %v4162 = vunpack.c.l.b16 %v3567
      %v4163 = vunpack.c.l.b16 %v3568
      %v4164 = vunpack.c.l.b16 %v3569
      %v4165 = vunpack.c.l.b16 %v3570
      %v4166 = vunpack.c.l.b16 %v3571
      %v4167 = vunpack.c.l.b16 %v3572
      %v4168 = vunpack.c.l.b16 %v3573
      %v4169 = vunpack.c.l.b16 %v3574
      %v4170 = vunpack.c.l.b16 %v3575
      %v4171 = vunpack.c.l.b16 %v3576
      %v4172 = vunpack.c.l.b16 %v3577
      %v4173 = vunpack.c.l.b16 %v3578
      %v4174 = vunpack.c.l.b16 %v3579
      %v4175 = vunpack.c.l.b16 %v3580
      %v4176 = vunpack.c.l.b16 %v3581
      %v4177 = vunpack.c.l.b16 %v3582
      %v4178 = vunpack.c.l.b16 %v3583
      %v4179 = vunpack.c.l.b16 %v3584
      %v4180 = vunpack.c.l.b16 %v3585
      %v4181 = vunpack.c.l.b16 %v3586
      %v4182 = vunpack.c.l.b16 %v3587
      %v4183 = vunpack.c.l.b16 %v3588
      %v4184 = vpack.c.b16 %v4137, %v4136
      %v4185 = vpack.c.b16 %v4139, %v4138
      %v4186 = vpack.c.b16 %v4141, %v4140
      %v4187 = vpack.c.b16 %v4143, %v4142
      %v4188 = vpack.c.b16 %v4145, %v4144
      %v4189 = vpack.c.b16 %v4147, %v4146
      %v4190 = vpack.c.b16 %v4149, %v4148
      %v4191 = vpack.c.b16 %v4151, %v4150
      %v4192 = vpack.c.b16 %v4153, %v4152
      %v4193 = vpack.c.b16 %v4155, %v4154
      %v4194 = vpack.c.b16 %v4157, %v4156
      %v4195 = vpack.c.b16 %v4159, %v4158
      %v4196 = vpack.c.b16 %v4161, %v4160
      %v4197 = vpack.c.b16 %v4163, %v4162
      %v4198 = vpack.c.b16 %v4165, %v4164
      %v4199 = vpack.c.b16 %v4167, %v4166
      %v4200 = vpack.c.b16 %v4169, %v4168
      %v4201 = vpack.c.b16 %v4171, %v4170
      %v4202 = vpack.c.b16 %v4173, %v4172
      %v4203 = vpack.c.b16 %v4175, %v4174
      %v4204 = vpack.c.b16 %v4177, %v4176
      %v4205 = vpack.c.b16 %v4179, %v4178
      %v4206 = vpack.c.b16 %v4181, %v4180
      %v4207 = vpack.c.b16 %v4183, %v4182
      %v4248 = vunpack.c.l.b16 %v3590
      %v4249 = vunpack.c.l.b16 %v3591
      %v4250 = vunpack.c.l.b16 %v3592
      %v4251 = vunpack.c.l.b16 %v3593
      %v4252 = vunpack.c.l.b16 %v3594
      %v4253 = vunpack.c.l.b16 %v3595
      %v4254 = vunpack.c.l.b16 %v3596
      %v4255 = vunpack.c.l.b16 %v3597
      %v4256 = vunpack.c.l.b16 %v3598
      %v4257 = vunpack.c.l.b16 %v3599
      %v4258 = vunpack.c.l.b16 %v3600
      %v4259 = vunpack.c.l.b16 %v3601
      %v4260 = vunpack.c.l.b16 %v3602
      %v4261 = vunpack.c.l.b16 %v3603
      %v4262 = vunpack.c.l.b16 %v3604
      %v4263 = vunpack.c.l.b16 %v3605
      %v4264 = vpack.c.b16 %v4249, %v4248
      %v4265 = vpack.c.b16 %v4251, %v4250
      %v4266 = vpack.c.b16 %v4253, %v4252
      %v4267 = vpack.c.b16 %v4255, %v4254
      %v4268 = vpack.c.b16 %v4257, %v4256
      %v4269 = vpack.c.b16 %v4259, %v4258
      %v4270 = vpack.c.b16 %v4261, %v4260
      %v4271 = vpack.c.b16 %v4263, %v4262
      %4280 = vmatprep.subr.bf16.mxu0 0
      %4281 = vmatpush1.bf16.msra.mxu0 %v4264
      %4282 = vmatprep.subr.bf16.mxu0 0
      %4283 = vmatpush1.bf16.msra.mxu0 %v4265
      %4284 = vmatprep.subr.bf16.mxu0 0
      %4285 = vmatpush1.bf16.msra.mxu0 %v4266
      %4286 = vmatprep.subr.bf16.mxu0 0
      %4287 = vmatpush1.bf16.msra.mxu0 %v4267
      %4288 = vmatprep.subr.bf16.mxu0 0
      %4289 = vmatpush1.bf16.msra.mxu0 %v4268
      %4290 = vmatprep.subr.bf16.mxu0 0
      %4291 = vmatpush1.bf16.msra.mxu0 %v4269
      %4292 = vmatprep.subr.bf16.mxu0 0
      %4293 = vmatpush1.bf16.msra.mxu0 %v4270
      %4294 = vmatprep.subr.bf16.mxu0 0
      %4295 = vmatpush1.bf16.msra.mxu0 %v4271
      %4296 = vmatprep.subr.bf16.mxu0 0
      %4297 = vmatpush1.bf16.msra.mxu0 0
      %4298 = vmatprep.subr.bf16.mxu0 0
      %4299 = vmatpush1.bf16.msra.mxu0 0
      %4300 = vmatprep.subr.bf16.mxu0 0
      %4301 = vmatpush1.bf16.msra.mxu0 0
      %4302 = vmatprep.subr.bf16.mxu0 0
      %4303 = vmatpush1.bf16.msra.mxu0 0
      %4304 = vmatprep.subr.bf16.mxu0 0
      %4305 = vmatpush1.bf16.msra.mxu0 0
      %4306 = vmatprep.subr.bf16.mxu0 0
      %4307 = vmatpush1.bf16.msra.mxu0 0
      %4308 = vmatprep.subr.bf16.mxu0 0
      %4309 = vmatpush1.bf16.msra.mxu0 0
      %4310 = vmatprep.subr.bf16.mxu0 0
      %4311 = vmatpush1.bf16.msra.mxu0 0
      %4312 = vmatprep.mubr.bf16.mxu0 0
      %4313 = vmatmul.mubr.bf16.gmra.mrb[0].mxu0 %v4184
      %v4314 = vpop.f32.mrb[0].mxu0
      %v4315 = vadd.f32 %v3898, %v4314
      %v4316 = vpop.f32.mrb[0].mxu0
      %v4317 = vpop.f32.mrb[0].mxu0
      %v4318 = vadd.f32 %v3901, %v4317
      %v4319 = vpop.f32.mrb[0].mxu0
      %4320 = vmatprep.mubr.bf16.mxu0 0
      %4321 = vmatmul.mubr.bf16.gmra.mrb[0].mxu0 %v4185
      %v4322 = vpop.f32.mrb[0].mxu0
      %v4323 = vadd.f32 %v3906, %v4322
      %v4324 = vpop.f32.mrb[0].mxu0
      %v4325 = vpop.f32.mrb[0].mxu0
      %v4326 = vadd.f32 %v3909, %v4325
      %v4327 = vpop.f32.mrb[0].mxu0
      %4328 = vmatprep.mubr.bf16.mxu0 0
      %4329 = vmatmul.mubr.bf16.gmra.mrb[0].mxu0 %v4186
      %v4330 = vpop.f32.mrb[0].mxu0
      %v4331 = vadd.f32 %v3914, %v4330
      %v4332 = vpop.f32.mrb[0].mxu0
      %v4333 = vpop.f32.mrb[0].mxu0
      %v4334 = vadd.f32 %v3917, %v4333
      %v4335 = vpop.f32.mrb[0].mxu0
      %4336 = vmatprep.mubr.bf16.mxu0 0
      %4337 = vmatmul.mubr.bf16.gmra.mrb[0].mxu0 %v4187
      %v4338 = vpop.f32.mrb[0].mxu0
      %v4339 = vadd.f32 %v3922, %v4338
      %v4340 = vpop.f32.mrb[0].mxu0
      %v4341 = vpop.f32.mrb[0].mxu0
      %v4342 = vadd.f32 %v3925, %v4341
      %v4343 = vpop.f32.mrb[0].mxu0
      %4344 = vmatprep.mubr.bf16.mxu0 0
      %4345 = vmatmul.mubr.bf16.gmra.mrb[0].mxu0 %v4188
      %v4346 = vpop.f32.mrb[0].mxu0
      %v4347 = vadd.f32 %v3930, %v4346
      %v4348 = vpop.f32.mrb[0].mxu0
      %v4349 = vpop.f32.mrb[0].mxu0
      %v4350 = vadd.f32 %v3933, %v4349
      %v4351 = vpop.f32.mrb[0].mxu0
      %4352 = vmatprep.mubr.bf16.mxu0 0
      %4353 = vmatmul.mubr.bf16.gmra.mrb[0].mxu0 %v4189
      %v4354 = vpop.f32.mrb[0].mxu0
      %v4355 = vadd.f32 %v3938, %v4354
      %v4356 = vpop.f32.mrb[0].mxu0
      %v4357 = vpop.f32.mrb[0].mxu0
      %v4358 = vadd.f32 %v3941, %v4357
      %v4359 = vpop.f32.mrb[0].mxu0
      %4360 = vmatprep.mubr.bf16.mxu0 0
      %4361 = vmatmul.mubr.bf16.gmra.mrb[0].mxu0 %v4190
      %v4362 = vpop.f32.mrb[0].mxu0
      %v4363 = vadd.f32 %v3946, %v4362
      %v4364 = vpop.f32.mrb[0].mxu0
      %v4365 = vpop.f32.mrb[0].mxu0
      %v4366 = vadd.f32 %v3949, %v4365
      %v4367 = vpop.f32.mrb[0].mxu0
      %4368 = vmatprep.mubr.bf16.mxu0 0
      %4369 = vmatmul.mubr.bf16.gmra.mrb[0].mxu0 %v4191
      %v4370 = vpop.f32.mrb[0].mxu0
      %v4371 = vadd.f32 %v3954, %v4370
      %v4372 = vpop.f32.mrb[0].mxu0
      %v4373 = vpop.f32.mrb[0].mxu0
      %v4374 = vadd.f32 %v3957, %v4373
      %v4375 = vpop.f32.mrb[0].mxu0
      %4376 = vmatprep.mubr.bf16.mxu0 0
      %4377 = vmatmul.mubr.bf16.gmra.mrb[0].mxu0 %v4192
      %v4378 = vpop.f32.mrb[0].mxu0
      %v4379 = vadd.f32 %v3962, %v4378
      %v4380 = vpop.f32.mrb[0].mxu0
      %v4381 = vpop.f32.mrb[0].mxu0
      %v4382 = vadd.f32 %v3965, %v4381
      %v4383 = vpop.f32.mrb[0].mxu0
      %4384 = vmatprep.mubr.bf16.mxu0 0
      %4385 = vmatmul.mubr.bf16.gmra.mrb[0].mxu0 %v4193
      %v4386 = vpop.f32.mrb[0].mxu0
      %v4387 = vadd.f32 %v3970, %v4386
      %v4388 = vpop.f32.mrb[0].mxu0
      %v4389 = vpop.f32.mrb[0].mxu0
      %v4390 = vadd.f32 %v3973, %v4389
      %v4391 = vpop.f32.mrb[0].mxu0
      %4392 = vmatprep.mubr.bf16.mxu0 0
      %4393 = vmatmul.mubr.bf16.gmra.mrb[0].mxu0 %v4194
      %v4394 = vpop.f32.mrb[0].mxu0
      %v4395 = vadd.f32 %v3978, %v4394
      %v4396 = vpop.f32.mrb[0].mxu0
      %v4397 = vpop.f32.mrb[0].mxu0
      %v4398 = vadd.f32 %v3981, %v4397
      %v4399 = vpop.f32.mrb[0].mxu0
      %4400 = vmatprep.mubr.bf16.mxu0 0
      %4401 = vmatmul.mubr.bf16.gmra.mrb[0].mxu0 %v4195
      %v4402 = vpop.f32.mrb[0].mxu0
      %v4403 = vadd.f32 %v3986, %v4402
      %v4404 = vpop.f32.mrb[0].mxu0
      %v4405 = vpop.f32.mrb[0].mxu0
      %v4406 = vadd.f32 %v3989, %v4405
      %v4407 = vpop.f32.mrb[0].mxu0
      %4408 = vmatprep.mubr.bf16.mxu0 0
      %4409 = vmatmul.mubr.bf16.gmra.mrb[0].mxu0 %v4196
      %v4410 = vpop.f32.mrb[0].mxu0
      %v4411 = vadd.f32 %v3994, %v4410
      %v4412 = vpop.f32.mrb[0].mxu0
      %v4413 = vpop.f32.mrb[0].mxu0
      %v4414 = vadd.f32 %v3997, %v4413
      %v4415 = vpop.f32.mrb[0].mxu0
      %4416 = vmatprep.mubr.bf16.mxu0 0
      %4417 = vmatmul.mubr.bf16.gmra.mrb[0].mxu0 %v4197
      %v4418 = vpop.f32.mrb[0].mxu0
      %v4419 = vadd.f32 %v4002, %v4418
      %v4420 = vpop.f32.mrb[0].mxu0
      %v4421 = vpop.f32.mrb[0].mxu0
      %v4422 = vadd.f32 %v4005, %v4421
      %v4423 = vpop.f32.mrb[0].mxu0
      %4424 = vmatprep.mubr.bf16.mxu0 0
      %4425 = vmatmul.mubr.bf16.gmra.mrb[0].mxu0 %v4198
      %v4426 = vpop.f32.mrb[0].mxu0
      %v4427 = vadd.f32 %v4010, %v4426
      %v4428 = vpop.f32.mrb[0].mxu0
      %v4429 = vpop.f32.mrb[0].mxu0
      %v4430 = vadd.f32 %v4013, %v4429
      %v4431 = vpop.f32.mrb[0].mxu0
      %4432 = vmatprep.mubr.bf16.mxu0 0
      %4433 = vmatmul.mubr.bf16.gmra.mrb[0].mxu0 %v4199
      %v4434 = vpop.f32.mrb[0].mxu0
      %v4435 = vadd.f32 %v4018, %v4434
      %v4436 = vpop.f32.mrb[0].mxu0
      %v4437 = vpop.f32.mrb[0].mxu0
      %v4438 = vadd.f32 %v4021, %v4437
      %v4439 = vpop.f32.mrb[0].mxu0
      %4440 = vmatprep.mubr.bf16.mxu0 0
      %4441 = vmatmul.mubr.bf16.gmra.mrb[0].mxu0 %v4200
      %v4442 = vpop.f32.mrb[0].mxu0
      %v4443 = vadd.f32 %v4026, %v4442
      %v4444 = vpop.f32.mrb[0].mxu0
      %v4445 = vpop.f32.mrb[0].mxu0
      %v4446 = vadd.f32 %v4029, %v4445
      %v4447 = vpop.f32.mrb[0].mxu0
      %4448 = vmatprep.mubr.bf16.mxu0 0
      %4449 = vmatmul.mubr.bf16.gmra.mrb[0].mxu0 %v4201
      %v4450 = vpop.f32.mrb[0].mxu0
      %v4451 = vadd.f32 %v4034, %v4450
      %v4452 = vpop.f32.mrb[0].mxu0
      %v4453 = vpop.f32.mrb[0].mxu0
      %v4454 = vadd.f32 %v4037, %v4453
      %v4455 = vpop.f32.mrb[0].mxu0
      %4456 = vmatprep.mubr.bf16.mxu0 0
      %4457 = vmatmul.mubr.bf16.gmra.mrb[0].mxu0 %v4202
      %v4458 = vpop.f32.mrb[0].mxu0
      %v4459 = vadd.f32 %v4042, %v4458
      %v4460 = vpop.f32.mrb[0].mxu0
      %v4461 = vpop.f32.mrb[0].mxu0
      %v4462 = vadd.f32 %v4045, %v4461
      %v4463 = vpop.f32.mrb[0].mxu0
      %4464 = vmatprep.mubr.bf16.mxu0 0
      %4465 = vmatmul.mubr.bf16.gmra.mrb[0].mxu0 %v4203
      %v4466 = vpop.f32.mrb[0].mxu0
      %v4467 = vadd.f32 %v4050, %v4466
      %v4468 = vpop.f32.mrb[0].mxu0
      %v4469 = vpop.f32.mrb[0].mxu0
      %v4470 = vadd.f32 %v4053, %v4469
      %v4471 = vpop.f32.mrb[0].mxu0
      %4472 = vmatprep.mubr.bf16.mxu0 0
      %4473 = vmatmul.mubr.bf16.gmra.mrb[0].mxu0 %v4204
      %v4474 = vpop.f32.mrb[0].mxu0
      %v4475 = vadd.f32 %v4058, %v4474
      %v4476 = vpop.f32.mrb[0].mxu0
      %v4477 = vpop.f32.mrb[0].mxu0
      %v4478 = vadd.f32 %v4061, %v4477
      %v4479 = vpop.f32.mrb[0].mxu0
      %4480 = vmatprep.mubr.bf16.mxu0 0
      %4481 = vmatmul.mubr.bf16.gmra.mrb[0].mxu0 %v4205
      %v4482 = vpop.f32.mrb[0].mxu0
      %v4483 = vadd.f32 %v4066, %v4482
      %v4484 = vpop.f32.mrb[0].mxu0
      %v4485 = vpop.f32.mrb[0].mxu0
      %v4486 = vadd.f32 %v4069, %v4485
      %v4487 = vpop.f32.mrb[0].mxu0
      %4488 = vmatprep.mubr.bf16.mxu0 0
      %4489 = vmatmul.mubr.bf16.gmra.mrb[0].mxu0 %v4206
      %v4490 = vpop.f32.mrb[0].mxu0
      %v4491 = vadd.f32 %v4074, %v4490
      %v4492 = vpop.f32.mrb[0].mxu0
      %v4493 = vpop.f32.mrb[0].mxu0
      %v4494 = vadd.f32 %v4077, %v4493
      %v4495 = vpop.f32.mrb[0].mxu0
      %4496 = vmatprep.mubr.bf16.mxu0 0
      %4497 = vmatmul.mubr.bf16.gmra.mrb[0].mxu0 %v4207
      %v4498 = vpop.f32.mrb[0].mxu0
      %v4499 = vadd.f32 %v4082, %v4498
      %v4500 = vpop.f32.mrb[0].mxu0
      %v4501 = vpop.f32.mrb[0].mxu0
      %v4502 = vadd.f32 %v4085, %v4501
      %v4503 = vpop.f32.mrb[0].mxu0
      %4504 = vdwg.mxu0
      %v4505 = vld [vmem:[%s1355] sm:$0xf]
      %v4506 = vld [vmem:[%s1355 + $0x4] sm:$0xf]
      %v4507 = vld [vmem:[%s1355 + $0x8] sm:$0xf]
      %v4508 = vld [vmem:[%s1355 + $0xc] sm:$0xf]
      %v4509 = vld [vmem:[%s1355 + $0x10] sm:$0xf]
      %v4510 = vld [vmem:[%s1355 + $0x14] sm:$0xf]
      %v4511 = vld [vmem:[%s1355 + $0x18] sm:$0xf]
      %v4512 = vld [vmem:[%s1355 + $0x1c] sm:$0xf]
      %v4513 = vld [vmem:[%s1355 + $0x20] sm:$0xf]
      %v4514 = vld [vmem:[%s1355 + $0x24] sm:$0xf]
      %v4515 = vld [vmem:[%s1355 + $0x28] sm:$0xf]
      %v4516 = vld [vmem:[%s1355 + $0x2c] sm:$0xf]
      %v4517 = vld [vmem:[%s1355 + $0x30] sm:$0xf]
      %v4518 = vld [vmem:[%s1355 + $0x34] sm:$0xf]
      %v4519 = vld [vmem:[%s1355 + $0x38] sm:$0xf]
      %v4520 = vld [vmem:[%s1355 + $0x3c] sm:$0xf]
      %v4521 = vld [vmem:[%s1355 + $0x40] sm:$0xf]
      %v4522 = vld [vmem:[%s1355 + $0x44] sm:$0xf]
      %v4523 = vld [vmem:[%s1355 + $0x48] sm:$0xf]
      %v4524 = vld [vmem:[%s1355 + $0x4c] sm:$0xf]
      %v4525 = vld [vmem:[%s1355 + $0x50] sm:$0xf]
      %v4526 = vld [vmem:[%s1355 + $0x54] sm:$0xf]
      %v4527 = vld [vmem:[%s1355 + $0x58] sm:$0xf]
      %v4528 = vld [vmem:[%s1355 + $0x5c] sm:$0xf]
      %v4529 = vld [vmem:[%s1355 + $0x60] sm:$0xf]
      %v4530 = vld [vmem:[%s1355 + $0x64] sm:$0xf]
      %v4531 = vld [vmem:[%s1355 + $0x68] sm:$0xf]
      %v4532 = vld [vmem:[%s1355 + $0x6c] sm:$0xf]
      %v4533 = vld [vmem:[%s1355 + $0x70] sm:$0xf]
      %v4534 = vld [vmem:[%s1355 + $0x74] sm:$0xf]
      %v4535 = vld [vmem:[%s1355 + $0x78] sm:$0xf]
      %v4536 = vld [vmem:[%s1355 + $0x7c] sm:$0xf]
      %v4537 = vld [vmem:[%s1355 + $0x80] sm:$0xf]
      %v4538 = vld [vmem:[%s1355 + $0x84] sm:$0xf]
      %v4539 = vld [vmem:[%s1355 + $0x88] sm:$0xf]
      %v4540 = vld [vmem:[%s1355 + $0x8c] sm:$0xf]
      %v4541 = vld [vmem:[%s1355 + $0x90] sm:$0xf]
      %v4542 = vld [vmem:[%s1355 + $0x94] sm:$0xf]
      %v4543 = vld [vmem:[%s1355 + $0x98] sm:$0xf]
      %v4544 = vld [vmem:[%s1355 + $0x9c] sm:$0xf]
      %v4545 = vld [vmem:[%s1355 + $0xa0] sm:$0xf]
      %v4546 = vld [vmem:[%s1355 + $0xa4] sm:$0xf]
      %v4547 = vld [vmem:[%s1355 + $0xa8] sm:$0xf]
      %v4548 = vld [vmem:[%s1355 + $0xac] sm:$0xf]
      %v4549 = vld [vmem:[%s1355 + $0xb0] sm:$0xf]
      %v4550 = vld [vmem:[%s1355 + $0xb4] sm:$0xf]
      %v4551 = vld [vmem:[%s1355 + $0xb8] sm:$0xf]
      %v4552 = vld [vmem:[%s1355 + $0xbc] sm:$0xf]
      %s4553 = scalar_lea.vmem %s1, 512
      %v4554 = vld [vmem:[%s4553] sm:$0xf]
      %v4555 = vld [vmem:[%s4553 + $0x4] sm:$0xf]
      %v4556 = vld [vmem:[%s4553 + $0x8] sm:$0xf]
      %v4557 = vld [vmem:[%s4553 + $0xc] sm:$0xf]
      %v4558 = vld [vmem:[%s4553 + $0x10] sm:$0xf]
      %v4559 = vld [vmem:[%s4553 + $0x14] sm:$0xf]
      %v4560 = vld [vmem:[%s4553 + $0x18] sm:$0xf]
      %v4561 = vld [vmem:[%s4553 + $0x1c] sm:$0xf]
      %v4562 = vld [vmem:[%s4553 + $0x20] sm:$0xf]
      %v4563 = vld [vmem:[%s4553 + $0x24] sm:$0xf]
      %v4564 = vld [vmem:[%s4553 + $0x28] sm:$0xf]
      %v4565 = vld [vmem:[%s4553 + $0x2c] sm:$0xf]
      %v4566 = vld [vmem:[%s4553 + $0x30] sm:$0xf]
      %v4567 = vld [vmem:[%s4553 + $0x34] sm:$0xf]
      %v4568 = vld [vmem:[%s4553 + $0x38] sm:$0xf]
      %v4569 = vld [vmem:[%s4553 + $0x3c] sm:$0xf]
      %v4618 = vunpack.c.l.b16 %v4505
      %v4619 = vunpack.c.l.b16 %v4506
      %v4620 = vunpack.c.l.b16 %v4507
      %v4621 = vunpack.c.l.b16 %v4508
      %v4622 = vunpack.c.l.b16 %v4509
      %v4623 = vunpack.c.l.b16 %v4510
      %v4624 = vunpack.c.l.b16 %v4511
      %v4625 = vunpack.c.l.b16 %v4512
      %v4626 = vunpack.c.l.b16 %v4513
      %v4627 = vunpack.c.l.b16 %v4514
      %v4628 = vunpack.c.l.b16 %v4515
      %v4629 = vunpack.c.l.b16 %v4516
      %v4630 = vunpack.c.l.b16 %v4517
      %v4631 = vunpack.c.l.b16 %v4518
      %v4632 = vunpack.c.l.b16 %v4519
      %v4633 = vunpack.c.l.b16 %v4520
      %v4634 = vunpack.c.l.b16 %v4521
      %v4635 = vunpack.c.l.b16 %v4522
      %v4636 = vunpack.c.l.b16 %v4523
      %v4637 = vunpack.c.l.b16 %v4524
      %v4638 = vunpack.c.l.b16 %v4525
      %v4639 = vunpack.c.l.b16 %v4526
      %v4640 = vunpack.c.l.b16 %v4527
      %v4641 = vunpack.c.l.b16 %v4528
      %v4642 = vunpack.c.l.b16 %v4529
      %v4643 = vunpack.c.l.b16 %v4530
      %v4644 = vunpack.c.l.b16 %v4531
      %v4645 = vunpack.c.l.b16 %v4532
      %v4646 = vunpack.c.l.b16 %v4533
      %v4647 = vunpack.c.l.b16 %v4534
      %v4648 = vunpack.c.l.b16 %v4535
      %v4649 = vunpack.c.l.b16 %v4536
      %v4650 = vunpack.c.l.b16 %v4537
      %v4651 = vunpack.c.l.b16 %v4538
      %v4652 = vunpack.c.l.b16 %v4539
      %v4653 = vunpack.c.l.b16 %v4540
      %v4654 = vunpack.c.l.b16 %v4541
      %v4655 = vunpack.c.l.b16 %v4542
      %v4656 = vunpack.c.l.b16 %v4543
      %v4657 = vunpack.c.l.b16 %v4544
      %v4658 = vunpack.c.l.b16 %v4545
      %v4659 = vunpack.c.l.b16 %v4546
      %v4660 = vunpack.c.l.b16 %v4547
      %v4661 = vunpack.c.l.b16 %v4548
      %v4662 = vunpack.c.l.b16 %v4549
      %v4663 = vunpack.c.l.b16 %v4550
      %v4664 = vunpack.c.l.b16 %v4551
      %v4665 = vunpack.c.l.b16 %v4552
      %v4666 = vpack.c.b16 %v4619, %v4618
      %v4667 = vpack.c.b16 %v4621, %v4620
      %v4668 = vpack.c.b16 %v4623, %v4622
      %v4669 = vpack.c.b16 %v4625, %v4624
      %v4670 = vpack.c.b16 %v4627, %v4626
      %v4671 = vpack.c.b16 %v4629, %v4628
      %v4672 = vpack.c.b16 %v4631, %v4630
      %v4673 = vpack.c.b16 %v4633, %v4632
      %v4674 = vpack.c.b16 %v4635, %v4634
      %v4675 = vpack.c.b16 %v4637, %v4636
      %v4676 = vpack.c.b16 %v4639, %v4638
      %v4677 = vpack.c.b16 %v4641, %v4640
      %v4678 = vpack.c.b16 %v4643, %v4642
      %v4679 = vpack.c.b16 %v4645, %v4644
      %v4680 = vpack.c.b16 %v4647, %v4646
      %v4681 = vpack.c.b16 %v4649, %v4648
      %v4682 = vpack.c.b16 %v4651, %v4650
      %v4683 = vpack.c.b16 %v4653, %v4652
      %v4684 = vpack.c.b16 %v4655, %v4654
      %v4685 = vpack.c.b16 %v4657, %v4656
      %v4686 = vpack.c.b16 %v4659, %v4658
      %v4687 = vpack.c.b16 %v4661, %v4660
      %v4688 = vpack.c.b16 %v4663, %v4662
      %v4689 = vpack.c.b16 %v4665, %v4664
      %v4730 = vunpack.c.l.b16 %v4554
      %v4731 = vunpack.c.l.b16 %v4555
      %v4732 = vunpack.c.l.b16 %v4556
      %v4733 = vunpack.c.l.b16 %v4557
      %v4734 = vunpack.c.l.b16 %v4558
      %v4735 = vunpack.c.l.b16 %v4559
      %v4736 = vunpack.c.l.b16 %v4560
      %v4737 = vunpack.c.l.b16 %v4561
      %v4738 = vunpack.c.l.b16 %v4562
      %v4739 = vunpack.c.l.b16 %v4563
      %v4740 = vunpack.c.l.b16 %v4564
      %v4741 = vunpack.c.l.b16 %v4565
      %v4742 = vunpack.c.l.b16 %v4566
      %v4743 = vunpack.c.l.b16 %v4567
      %v4744 = vunpack.c.l.b16 %v4568
      %v4745 = vunpack.c.l.b16 %v4569
      %v4746 = vpack.c.b16 %v4731, %v4730
      %v4747 = vpack.c.b16 %v4733, %v4732
      %v4748 = vpack.c.b16 %v4735, %v4734
      %v4749 = vpack.c.b16 %v4737, %v4736
      %v4750 = vpack.c.b16 %v4739, %v4738
      %v4751 = vpack.c.b16 %v4741, %v4740
      %v4752 = vpack.c.b16 %v4743, %v4742
      %v4753 = vpack.c.b16 %v4745, %v4744
      %4762 = vmatprep.subr.bf16.mxu0 0
      %4763 = vmatpush1.bf16.msra.mxu0 %v4746
      %4764 = vmatprep.subr.bf16.mxu0 0
      %4765 = vmatpush1.bf16.msra.mxu0 %v4747
      %4766 = vmatprep.subr.bf16.mxu0 0
      %4767 = vmatpush1.bf16.msra.mxu0 %v4748
      %4768 = vmatprep.subr.bf16.mxu0 0
      %4769 = vmatpush1.bf16.msra.mxu0 %v4749
      %4770 = vmatprep.subr.bf16.mxu0 0
      %4771 = vmatpush1.bf16.msra.mxu0 %v4750
      %4772 = vmatprep.subr.bf16.mxu0 0
      %4773 = vmatpush1.bf16.msra.mxu0 %v4751
      %4774 = vmatprep.subr.bf16.mxu0 0
      %4775 = vmatpush1.bf16.msra.mxu0 %v4752
      %4776 = vmatprep.subr.bf16.mxu0 0
      %4777 = vmatpush1.bf16.msra.mxu0 %v4753
      %4778 = vmatprep.subr.bf16.mxu0 0
      %4779 = vmatpush1.bf16.msra.mxu0 0
      %4780 = vmatprep.subr.bf16.mxu0 0
      %4781 = vmatpush1.bf16.msra.mxu0 0
      %4782 = vmatprep.subr.bf16.mxu0 0
      %4783 = vmatpush1.bf16.msra.mxu0 0
      %4784 = vmatprep.subr.bf16.mxu0 0
      %4785 = vmatpush1.bf16.msra.mxu0 0
      %4786 = vmatprep.subr.bf16.mxu0 0
      %4787 = vmatpush1.bf16.msra.mxu0 0
      %4788 = vmatprep.subr.bf16.mxu0 0
      %4789 = vmatpush1.bf16.msra.mxu0 0
      %4790 = vmatprep.subr.bf16.mxu0 0
      %4791 = vmatpush1.bf16.msra.mxu0 0
      %4792 = vmatprep.subr.bf16.mxu0 0
      %4793 = vmatpush1.bf16.msra.mxu0 0
      %4794 = vmatprep.mubr.bf16.mxu0 0
      %4795 = vmatmul.mubr.bf16.gmra.mrb[0].mxu0 %v4666
      %v4796 = vpop.f32.mrb[0].mxu0
      %v4797 = vadd.f32 0.0, %v4796
      %v4798 = vpop.f32.mrb[0].mxu0
      %v4799 = vpop.f32.mrb[0].mxu0
      %v4800 = vadd.f32 0.0, %v4799
      %v4801 = vpop.f32.mrb[0].mxu0
      %4802 = vmatprep.mubr.bf16.mxu0 0
      %4803 = vmatmul.mubr.bf16.gmra.mrb[0].mxu0 %v4667
      %v4804 = vpop.f32.mrb[0].mxu0
      %v4805 = vadd.f32 0.0, %v4804
      %v4806 = vpop.f32.mrb[0].mxu0
      %v4807 = vpop.f32.mrb[0].mxu0
      %v4808 = vadd.f32 0.0, %v4807
      %v4809 = vpop.f32.mrb[0].mxu0
      %4810 = vmatprep.mubr.bf16.mxu0 0
      %4811 = vmatmul.mubr.bf16.gmra.mrb[0].mxu0 %v4668
      %v4812 = vpop.f32.mrb[0].mxu0
      %v4813 = vadd.f32 0.0, %v4812
      %v4814 = vpop.f32.mrb[0].mxu0
      %v4815 = vpop.f32.mrb[0].mxu0
      %v4816 = vadd.f32 0.0, %v4815
      %v4817 = vpop.f32.mrb[0].mxu0
      %4818 = vmatprep.mubr.bf16.mxu0 0
      %4819 = vmatmul.mubr.bf16.gmra.mrb[0].mxu0 %v4669
      %v4820 = vpop.f32.mrb[0].mxu0
      %v4821 = vadd.f32 0.0, %v4820
      %v4822 = vpop.f32.mrb[0].mxu0
      %v4823 = vpop.f32.mrb[0].mxu0
      %v4824 = vadd.f32 0.0, %v4823
      %v4825 = vpop.f32.mrb[0].mxu0
      %4826 = vmatprep.mubr.bf16.mxu0 0
      %4827 = vmatmul.mubr.bf16.gmra.mrb[0].mxu0 %v4670
      %v4828 = vpop.f32.mrb[0].mxu0
      %v4829 = vadd.f32 0.0, %v4828
      %v4830 = vpop.f32.mrb[0].mxu0
      %v4831 = vpop.f32.mrb[0].mxu0
      %v4832 = vadd.f32 0.0, %v4831
      %v4833 = vpop.f32.mrb[0].mxu0
      %4834 = vmatprep.mubr.bf16.mxu0 0
      %4835 = vmatmul.mubr.bf16.gmra.mrb[0].mxu0 %v4671
      %v4836 = vpop.f32.mrb[0].mxu0
      %v4837 = vadd.f32 0.0, %v4836
      %v4838 = vpop.f32.mrb[0].mxu0
      %v4839 = vpop.f32.mrb[0].mxu0
      %v4840 = vadd.f32 0.0, %v4839
      %v4841 = vpop.f32.mrb[0].mxu0
      %4842 = vmatprep.mubr.bf16.mxu0 0
      %4843 = vmatmul.mubr.bf16.gmra.mrb[0].mxu0 %v4672
      %v4844 = vpop.f32.mrb[0].mxu0
      %v4845 = vadd.f32 0.0, %v4844
      %v4846 = vpop.f32.mrb[0].mxu0
      %v4847 = vpop.f32.mrb[0].mxu0
      %v4848 = vadd.f32 0.0, %v4847
      %v4849 = vpop.f32.mrb[0].mxu0
      %4850 = vmatprep.mubr.bf16.mxu0 0
      %4851 = vmatmul.mubr.bf16.gmra.mrb[0].mxu0 %v4673
      %v4852 = vpop.f32.mrb[0].mxu0
      %v4853 = vadd.f32 0.0, %v4852
      %v4854 = vpop.f32.mrb[0].mxu0
      %v4855 = vpop.f32.mrb[0].mxu0
      %v4856 = vadd.f32 0.0, %v4855
      %v4857 = vpop.f32.mrb[0].mxu0
      %4858 = vmatprep.mubr.bf16.mxu0 0
      %4859 = vmatmul.mubr.bf16.gmra.mrb[0].mxu0 %v4674
      %v4860 = vpop.f32.mrb[0].mxu0
      %v4861 = vadd.f32 0.0, %v4860
      %v4862 = vpop.f32.mrb[0].mxu0
      %v4863 = vpop.f32.mrb[0].mxu0
      %v4864 = vadd.f32 0.0, %v4863
      %v4865 = vpop.f32.mrb[0].mxu0
      %4866 = vmatprep.mubr.bf16.mxu0 0
      %4867 = vmatmul.mubr.bf16.gmra.mrb[0].mxu0 %v4675
      %v4868 = vpop.f32.mrb[0].mxu0
      %v4869 = vadd.f32 0.0, %v4868
      %v4870 = vpop.f32.mrb[0].mxu0
      %v4871 = vpop.f32.mrb[0].mxu0
      %v4872 = vadd.f32 0.0, %v4871
      %v4873 = vpop.f32.mrb[0].mxu0
      %4874 = vmatprep.mubr.bf16.mxu0 0
      %4875 = vmatmul.mubr.bf16.gmra.mrb[0].mxu0 %v4676
      %v4876 = vpop.f32.mrb[0].mxu0
      %v4877 = vadd.f32 0.0, %v4876
      %v4878 = vpop.f32.mrb[0].mxu0
      %v4879 = vpop.f32.mrb[0].mxu0
      %v4880 = vadd.f32 0.0, %v4879
      %v4881 = vpop.f32.mrb[0].mxu0
      %4882 = vmatprep.mubr.bf16.mxu0 0
      %4883 = vmatmul.mubr.bf16.gmra.mrb[0].mxu0 %v4677
      %v4884 = vpop.f32.mrb[0].mxu0
      %v4885 = vadd.f32 0.0, %v4884
      %v4886 = vpop.f32.mrb[0].mxu0
      %v4887 = vpop.f32.mrb[0].mxu0
      %v4888 = vadd.f32 0.0, %v4887
      %v4889 = vpop.f32.mrb[0].mxu0
      %4890 = vmatprep.mubr.bf16.mxu0 0
      %4891 = vmatmul.mubr.bf16.gmra.mrb[0].mxu0 %v4678
      %v4892 = vpop.f32.mrb[0].mxu0
      %v4893 = vadd.f32 0.0, %v4892
      %v4894 = vpop.f32.mrb[0].mxu0
      %v4895 = vpop.f32.mrb[0].mxu0
      %v4896 = vadd.f32 0.0, %v4895
      %v4897 = vpop.f32.mrb[0].mxu0
      %4898 = vmatprep.mubr.bf16.mxu0 0
      %4899 = vmatmul.mubr.bf16.gmra.mrb[0].mxu0 %v4679
      %v4900 = vpop.f32.mrb[0].mxu0
      %v4901 = vadd.f32 0.0, %v4900
      %v4902 = vpop.f32.mrb[0].mxu0
      %v4903 = vpop.f32.mrb[0].mxu0
      %v4904 = vadd.f32 0.0, %v4903
      %v4905 = vpop.f32.mrb[0].mxu0
      %4906 = vmatprep.mubr.bf16.mxu0 0
      %4907 = vmatmul.mubr.bf16.gmra.mrb[0].mxu0 %v4680
      %v4908 = vpop.f32.mrb[0].mxu0
      %v4909 = vadd.f32 0.0, %v4908
      %v4910 = vpop.f32.mrb[0].mxu0
      %v4911 = vpop.f32.mrb[0].mxu0
      %v4912 = vadd.f32 0.0, %v4911
      %v4913 = vpop.f32.mrb[0].mxu0
      %4914 = vmatprep.mubr.bf16.mxu0 0
      %4915 = vmatmul.mubr.bf16.gmra.mrb[0].mxu0 %v4681
      %v4916 = vpop.f32.mrb[0].mxu0
      %v4917 = vadd.f32 0.0, %v4916
      %v4918 = vpop.f32.mrb[0].mxu0
      %v4919 = vpop.f32.mrb[0].mxu0
      %v4920 = vadd.f32 0.0, %v4919
      %v4921 = vpop.f32.mrb[0].mxu0
      %4922 = vmatprep.mubr.bf16.mxu0 0
      %4923 = vmatmul.mubr.bf16.gmra.mrb[0].mxu0 %v4682
      %v4924 = vpop.f32.mrb[0].mxu0
      %v4925 = vadd.f32 0.0, %v4924
      %v4926 = vpop.f32.mrb[0].mxu0
      %v4927 = vpop.f32.mrb[0].mxu0
      %v4928 = vadd.f32 0.0, %v4927
      %v4929 = vpop.f32.mrb[0].mxu0
      %4930 = vmatprep.mubr.bf16.mxu0 0
      %4931 = vmatmul.mubr.bf16.gmra.mrb[0].mxu0 %v4683
      %v4932 = vpop.f32.mrb[0].mxu0
      %v4933 = vadd.f32 0.0, %v4932
      %v4934 = vpop.f32.mrb[0].mxu0
      %v4935 = vpop.f32.mrb[0].mxu0
      %v4936 = vadd.f32 0.0, %v4935
      %v4937 = vpop.f32.mrb[0].mxu0
      %4938 = vmatprep.mubr.bf16.mxu0 0
      %4939 = vmatmul.mubr.bf16.gmra.mrb[0].mxu0 %v4684
      %v4940 = vpop.f32.mrb[0].mxu0
      %v4941 = vadd.f32 0.0, %v4940
      %v4942 = vpop.f32.mrb[0].mxu0
      %v4943 = vpop.f32.mrb[0].mxu0
      %v4944 = vadd.f32 0.0, %v4943
      %v4945 = vpop.f32.mrb[0].mxu0
      %4946 = vmatprep.mubr.bf16.mxu0 0
      %4947 = vmatmul.mubr.bf16.gmra.mrb[0].mxu0 %v4685
      %v4948 = vpop.f32.mrb[0].mxu0
      %v4949 = vadd.f32 0.0, %v4948
      %v4950 = vpop.f32.mrb[0].mxu0
      %v4951 = vpop.f32.mrb[0].mxu0
      %v4952 = vadd.f32 0.0, %v4951
      %v4953 = vpop.f32.mrb[0].mxu0
      %4954 = vmatprep.mubr.bf16.mxu0 0
      %4955 = vmatmul.mubr.bf16.gmra.mrb[0].mxu0 %v4686
      %v4956 = vpop.f32.mrb[0].mxu0
      %v4957 = vadd.f32 0.0, %v4956
      %v4958 = vpop.f32.mrb[0].mxu0
      %v4959 = vpop.f32.mrb[0].mxu0
      %v4960 = vadd.f32 0.0, %v4959
      %v4961 = vpop.f32.mrb[0].mxu0
      %4962 = vmatprep.mubr.bf16.mxu0 0
      %4963 = vmatmul.mubr.bf16.gmra.mrb[0].mxu0 %v4687
      %v4964 = vpop.f32.mrb[0].mxu0
      %v4965 = vadd.f32 0.0, %v4964
      %v4966 = vpop.f32.mrb[0].mxu0
      %v4967 = vpop.f32.mrb[0].mxu0
      %v4968 = vadd.f32 0.0, %v4967
      %v4969 = vpop.f32.mrb[0].mxu0
      %4970 = vmatprep.mubr.bf16.mxu0 0
      %4971 = vmatmul.mubr.bf16.gmra.mrb[0].mxu0 %v4688
      %v4972 = vpop.f32.mrb[0].mxu0
      %v4973 = vadd.f32 0.0, %v4972
      %v4974 = vpop.f32.mrb[0].mxu0
      %v4975 = vpop.f32.mrb[0].mxu0
      %v4976 = vadd.f32 0.0, %v4975
      %v4977 = vpop.f32.mrb[0].mxu0
      %4978 = vmatprep.mubr.bf16.mxu0 0
      %4979 = vmatmul.mubr.bf16.gmra.mrb[0].mxu0 %v4689
      %v4980 = vpop.f32.mrb[0].mxu0
      %v4981 = vadd.f32 0.0, %v4980
      %v4982 = vpop.f32.mrb[0].mxu0
      %v4983 = vpop.f32.mrb[0].mxu0
      %v4984 = vadd.f32 0.0, %v4983
      %v4985 = vpop.f32.mrb[0].mxu0
      %4986 = vdwg.mxu0
      %v4987 = vadd.f32 %v4315, %v4797
      %v4988 = vadd.f32 %v4318, %v4800
      %v4989 = vadd.f32 %v4323, %v4805
      %v4990 = vadd.f32 %v4326, %v4808
      %v4991 = vadd.f32 %v4331, %v4813
      %v4992 = vadd.f32 %v4334, %v4816
      %v4993 = vadd.f32 %v4339, %v4821
      %v4994 = vadd.f32 %v4342, %v4824
      %v4995 = vadd.f32 %v4347, %v4829
      %v4996 = vadd.f32 %v4350, %v4832
      %v4997 = vadd.f32 %v4355, %v4837
      %v4998 = vadd.f32 %v4358, %v4840
      %v4999 = vadd.f32 %v4363, %v4845
      %v5000 = vadd.f32 %v4366, %v4848
      %v5001 = vadd.f32 %v4371, %v4853
      %v5002 = vadd.f32 %v4374, %v4856
      %v5003 = vadd.f32 %v4379, %v4861
      %v5004 = vadd.f32 %v4382, %v4864
      %v5005 = vadd.f32 %v4387, %v4869
      %v5006 = vadd.f32 %v4390, %v4872
      %v5007 = vadd.f32 %v4395, %v4877
      %v5008 = vadd.f32 %v4398, %v4880
      %v5009 = vadd.f32 %v4403, %v4885
      %v5010 = vadd.f32 %v4406, %v4888
      %v5011 = vadd.f32 %v4411, %v4893
      %v5012 = vadd.f32 %v4414, %v4896
      %v5013 = vadd.f32 %v4419, %v4901
      %v5014 = vadd.f32 %v4422, %v4904
      %v5015 = vadd.f32 %v4427, %v4909
      %v5016 = vadd.f32 %v4430, %v4912
      %v5017 = vadd.f32 %v4435, %v4917
      %v5018 = vadd.f32 %v4438, %v4920
      %v5019 = vadd.f32 %v4443, %v4925
      %v5020 = vadd.f32 %v4446, %v4928
      %v5021 = vadd.f32 %v4451, %v4933
      %v5022 = vadd.f32 %v4454, %v4936
      %v5023 = vadd.f32 %v4459, %v4941
      %v5024 = vadd.f32 %v4462, %v4944
      %v5025 = vadd.f32 %v4467, %v4949
      %v5026 = vadd.f32 %v4470, %v4952
      %v5027 = vadd.f32 %v4475, %v4957
      %v5028 = vadd.f32 %v4478, %v4960
      %v5029 = vadd.f32 %v4483, %v4965
      %v5030 = vadd.f32 %v4486, %v4968
      %v5031 = vadd.f32 %v4491, %v4973
      %v5032 = vadd.f32 %v4494, %v4976
      %v5033 = vadd.f32 %v4499, %v4981
      %v5034 = vadd.f32 %v4502, %v4984
      %vm5083 = vcmask 1045504
      %v5084 = vrot.slane %v4987, 2
      %v5085 = vrot.slane %v4988, 2
      %v5086 = vsel %vm5083, %v5084, %v5085
      %v5087 = vrot.slane %v4989, 2
      %v5088 = vsel %vm5083, %v5085, %v5087
      %v5089 = vrot.slane %v4990, 2
      %v5090 = vrot.slane %v4991, 2
      %v5091 = vsel %vm5083, %v5089, %v5090
      %v5092 = vrot.slane %v4992, 2
      %v5093 = vsel %vm5083, %v5090, %v5092
      %v5094 = vrot.slane %v4993, 2
      %v5095 = vrot.slane %v4994, 2
      %v5096 = vsel %vm5083, %v5094, %v5095
      %v5097 = vrot.slane %v4995, 2
      %v5098 = vsel %vm5083, %v5095, %v5097
      %v5099 = vrot.slane %v4996, 2
      %v5100 = vrot.slane %v4997, 2
      %v5101 = vsel %vm5083, %v5099, %v5100
      %v5102 = vrot.slane %v4998, 2
      %v5103 = vsel %vm5083, %v5100, %v5102
      %v5104 = vrot.slane %v4999, 2
      %v5105 = vrot.slane %v5000, 2
      %v5106 = vsel %vm5083, %v5104, %v5105
      %v5107 = vrot.slane %v5001, 2
      %v5108 = vsel %vm5083, %v5105, %v5107
      %v5109 = vrot.slane %v5002, 2
      %v5110 = vrot.slane %v5003, 2
      %v5111 = vsel %vm5083, %v5109, %v5110
      %v5112 = vrot.slane %v5004, 2
      %v5113 = vsel %vm5083, %v5110, %v5112
      %v5114 = vrot.slane %v5005, 2
      %v5115 = vrot.slane %v5006, 2
      %v5116 = vsel %vm5083, %v5114, %v5115
      %v5117 = vrot.slane %v5007, 2
      %v5118 = vsel %vm5083, %v5115, %v5117
      %v5119 = vrot.slane %v5008, 2
      %v5120 = vrot.slane %v5009, 2
      %v5121 = vsel %vm5083, %v5119, %v5120
      %v5122 = vrot.slane %v5010, 2
      %v5123 = vsel %vm5083, %v5120, %v5122
      %v5124 = vrot.slane %v5011, 2
      %v5125 = vrot.slane %v5012, 2
      %v5126 = vsel %vm5083, %v5124, %v5125
      %v5127 = vrot.slane %v5013, 2
      %v5128 = vsel %vm5083, %v5125, %v5127
      %v5129 = vrot.slane %v5014, 2
      %v5130 = vrot.slane %v5015, 2
      %v5131 = vsel %vm5083, %v5129, %v5130
      %v5132 = vrot.slane %v5016, 2
      %v5133 = vsel %vm5083, %v5130, %v5132
      %v5134 = vrot.slane %v5017, 2
      %v5135 = vrot.slane %v5018, 2
      %v5136 = vsel %vm5083, %v5134, %v5135
      %v5137 = vrot.slane %v5019, 2
      %v5138 = vsel %vm5083, %v5135, %v5137
      %v5139 = vrot.slane %v5020, 2
      %v5140 = vrot.slane %v5021, 2
      %v5141 = vsel %vm5083, %v5139, %v5140
      %v5142 = vrot.slane %v5022, 2
      %v5143 = vsel %vm5083, %v5140, %v5142
      %v5144 = vrot.slane %v5023, 2
      %v5145 = vrot.slane %v5024, 2
      %v5146 = vsel %vm5083, %v5144, %v5145
      %v5147 = vrot.slane %v5025, 2
      %v5148 = vsel %vm5083, %v5145, %v5147
      %v5149 = vrot.slane %v5026, 2
      %v5150 = vrot.slane %v5027, 2
      %v5151 = vsel %vm5083, %v5149, %v5150
      %v5152 = vrot.slane %v5028, 2
      %v5153 = vsel %vm5083, %v5150, %v5152
      %v5154 = vrot.slane %v5029, 2
      %v5155 = vrot.slane %v5030, 2
      %v5156 = vsel %vm5083, %v5154, %v5155
      %v5157 = vrot.slane %v5031, 2
      %v5158 = vsel %vm5083, %v5155, %v5157
      %v5159 = vrot.slane %v5032, 2
      %v5160 = vrot.slane %v5033, 2
      %v5161 = vsel %vm5083, %v5159, %v5160
      %v5162 = vrot.slane %v5034, 2
      %v5163 = vsel %vm5083, %v5160, %v5162
      %v5196 = vadd.f32 %v3509, %v5086
      %v5197 = vadd.f32 %v3510, %v5088
      %v5198 = vadd.f32 %v3511, %v5091
      %v5199 = vadd.f32 %v3512, %v5093
      %v5200 = vadd.f32 %v3513, %v5096
      %v5201 = vadd.f32 %v3514, %v5098
      %v5202 = vadd.f32 %v3515, %v5101
      %v5203 = vadd.f32 %v3516, %v5103
      %v5204 = vadd.f32 %v3517, %v5106
      %v5205 = vadd.f32 %v3518, %v5108
      %v5206 = vadd.f32 %v3519, %v5111
      %v5207 = vadd.f32 %v3520, %v5113
      %v5208 = vadd.f32 %v3521, %v5116
      %v5209 = vadd.f32 %v3522, %v5118
      %v5210 = vadd.f32 %v3523, %v5121
      %v5211 = vadd.f32 %v3524, %v5123
      %v5212 = vadd.f32 %v3525, %v5126
      %v5213 = vadd.f32 %v3526, %v5128
      %v5214 = vadd.f32 %v3527, %v5131
      %v5215 = vadd.f32 %v3528, %v5133
      %v5216 = vadd.f32 %v3529, %v5136
      %v5217 = vadd.f32 %v3530, %v5138
      %v5218 = vadd.f32 %v3531, %v5141
      %v5219 = vadd.f32 %v3532, %v5143
      %v5220 = vadd.f32 %v3533, %v5146
      %v5221 = vadd.f32 %v3534, %v5148
      %v5222 = vadd.f32 %v3535, %v5151
      %v5223 = vadd.f32 %v3536, %v5153
      %v5224 = vadd.f32 %v3537, %v5156
      %v5225 = vadd.f32 %v3538, %v5158
      %v5226 = vadd.f32 %v3539, %v5161
      %v5227 = vadd.f32 %v3540, %v5163
      %v5228 = vld [vmem:[%s2] sm:$0x1]
      %v5230 = vlaneseq
      %v5231 = vshrl.u32 %v5230, 7
      %v5232 = vsub.s32 0, %v5231
      %v5233 = vrot.slane %v5228, %v5232
      %v5235 = vadd.f32 %v5196, %v5233
      %v5236 = vadd.f32 %v5197, %v5233
      %v5237 = vadd.f32 %v5198, %v5233
      %v5238 = vadd.f32 %v5199, %v5233
      %v5239 = vadd.f32 %v5200, %v5233
      %v5240 = vadd.f32 %v5201, %v5233
      %v5241 = vadd.f32 %v5202, %v5233
      %v5242 = vadd.f32 %v5203, %v5233
      %v5243 = vadd.f32 %v5204, %v5233
      %v5244 = vadd.f32 %v5205, %v5233
      %v5245 = vadd.f32 %v5206, %v5233
      %v5246 = vadd.f32 %v5207, %v5233
      %v5247 = vadd.f32 %v5208, %v5233
      %v5248 = vadd.f32 %v5209, %v5233
      %v5249 = vadd.f32 %v5210, %v5233
      %v5250 = vadd.f32 %v5211, %v5233
      %v5251 = vadd.f32 %v5212, %v5233
      %v5252 = vadd.f32 %v5213, %v5233
      %v5253 = vadd.f32 %v5214, %v5233
      %v5254 = vadd.f32 %v5215, %v5233
      %v5255 = vadd.f32 %v5216, %v5233
      %v5256 = vadd.f32 %v5217, %v5233
      %v5257 = vadd.f32 %v5218, %v5233
      %v5258 = vadd.f32 %v5219, %v5233
      %v5259 = vadd.f32 %v5220, %v5233
      %v5260 = vadd.f32 %v5221, %v5233
      %v5261 = vadd.f32 %v5222, %v5233
      %v5262 = vadd.f32 %v5223, %v5233
      %v5263 = vadd.f32 %v5224, %v5233
      %v5264 = vadd.f32 %v5225, %v5233
      %v5265 = vadd.f32 %v5226, %v5233
      %v5266 = vadd.f32 %v5227, %v5233
      %v5267 = vpack.c.bf16 %v5236, %v5235
      %v5268 = vpack.c.bf16 %v5238, %v5237
      %v5269 = vpack.c.bf16 %v5240, %v5239
      %v5270 = vpack.c.bf16 %v5242, %v5241
      %v5271 = vpack.c.bf16 %v5244, %v5243
      %v5272 = vpack.c.bf16 %v5246, %v5245
      %v5273 = vpack.c.bf16 %v5248, %v5247
      %v5274 = vpack.c.bf16 %v5250, %v5249
      %v5275 = vpack.c.bf16 %v5252, %v5251
      %v5276 = vpack.c.bf16 %v5254, %v5253
      %v5277 = vpack.c.bf16 %v5256, %v5255
      %v5278 = vpack.c.bf16 %v5258, %v5257
      %v5279 = vpack.c.bf16 %v5260, %v5259
      %v5280 = vpack.c.bf16 %v5262, %v5261
      %v5281 = vpack.c.bf16 %v5264, %v5263
      %v5282 = vpack.c.bf16 %v5266, %v5265
      %v5299 = vunpack.c.l.b16 %v5267
      %v5300 = vunpack.c.h.b16 %v5267
      %v5301 = vunpack.c.l.b16 %v5268
      %v5302 = vunpack.c.h.b16 %v5268
      %v5303 = vunpack.c.l.b16 %v5269
      %v5304 = vunpack.c.h.b16 %v5269
      %v5305 = vunpack.c.l.b16 %v5270
      %v5306 = vunpack.c.h.b16 %v5270
      %v5307 = vunpack.c.l.b16 %v5271
      %v5308 = vunpack.c.h.b16 %v5271
      %v5309 = vunpack.c.l.b16 %v5272
      %v5310 = vunpack.c.h.b16 %v5272
      %v5311 = vunpack.c.l.b16 %v5273
      %v5312 = vunpack.c.h.b16 %v5273
      %v5313 = vunpack.c.l.b16 %v5274
      %v5314 = vunpack.c.h.b16 %v5274
      %v5315 = vunpack.c.l.b16 %v5275
      %v5316 = vunpack.c.h.b16 %v5275
      %v5317 = vunpack.c.l.b16 %v5276
      %v5318 = vunpack.c.h.b16 %v5276
      %v5319 = vunpack.c.l.b16 %v5277
      %v5320 = vunpack.c.h.b16 %v5277
      %v5321 = vunpack.c.l.b16 %v5278
      %v5322 = vunpack.c.h.b16 %v5278
      %v5323 = vunpack.c.l.b16 %v5279
      %v5324 = vunpack.c.h.b16 %v5279
      %v5325 = vunpack.c.l.b16 %v5280
      %v5326 = vunpack.c.h.b16 %v5280
      %v5327 = vunpack.c.l.b16 %v5281
      %v5328 = vunpack.c.h.b16 %v5281
      %v5329 = vunpack.c.l.b16 %v5282
      %v5330 = vunpack.c.h.b16 %v5282
      %v5331 = vpack.c.b16 %v5299, %v5299
      %v5332 = vpack.c.b16 %v5300, %v5300
      %v5333 = vpack.c.b16 %v5301, %v5301
      %v5334 = vpack.c.b16 %v5302, %v5302
      %v5335 = vpack.c.b16 %v5303, %v5303
      %v5336 = vpack.c.b16 %v5304, %v5304
      %v5337 = vpack.c.b16 %v5305, %v5305
      %v5338 = vpack.c.b16 %v5306, %v5306
      %v5339 = vpack.c.b16 %v5307, %v5307
      %v5340 = vpack.c.b16 %v5308, %v5308
      %v5341 = vpack.c.b16 %v5309, %v5309
      %v5342 = vpack.c.b16 %v5310, %v5310
      %v5343 = vpack.c.b16 %v5311, %v5311
      %v5344 = vpack.c.b16 %v5312, %v5312
      %v5345 = vpack.c.b16 %v5313, %v5313
      %v5346 = vpack.c.b16 %v5314, %v5314
      %v5347 = vpack.c.b16 %v5315, %v5315
      %v5348 = vpack.c.b16 %v5316, %v5316
      %v5349 = vpack.c.b16 %v5317, %v5317
      %v5350 = vpack.c.b16 %v5318, %v5318
      %v5351 = vpack.c.b16 %v5319, %v5319
      %v5352 = vpack.c.b16 %v5320, %v5320
      %v5353 = vpack.c.b16 %v5321, %v5321
      %v5354 = vpack.c.b16 %v5322, %v5322
      %v5355 = vpack.c.b16 %v5323, %v5323
      %v5356 = vpack.c.b16 %v5324, %v5324
      %v5357 = vpack.c.b16 %v5325, %v5325
      %v5358 = vpack.c.b16 %v5326, %v5326
      %v5359 = vpack.c.b16 %v5327, %v5327
      %v5360 = vpack.c.b16 %v5328, %v5328
      %v5361 = vpack.c.b16 %v5329, %v5329
      %v5362 = vpack.c.b16 %v5330, %v5330
      %5395 = vst [vmem:[%s187] sm:$0xf] %v5331
      %5396 = vst [vmem:[%s187 + $0x4] sm:$0xf] %v5332
      %5397 = vst [vmem:[%s187 + $0x8] sm:$0xf] %v5333
      %5398 = vst [vmem:[%s187 + $0xc] sm:$0xf] %v5334
      %5399 = vst [vmem:[%s187 + $0x10] sm:$0xf] %v5335
      %5400 = vst [vmem:[%s187 + $0x14] sm:$0xf] %v5336
      %5401 = vst [vmem:[%s187 + $0x18] sm:$0xf] %v5337
      %5402 = vst [vmem:[%s187 + $0x1c] sm:$0xf] %v5338
      %5403 = vst [vmem:[%s187 + $0x20] sm:$0xf] %v5339
      %5404 = vst [vmem:[%s187 + $0x24] sm:$0xf] %v5340
      %5405 = vst [vmem:[%s187 + $0x28] sm:$0xf] %v5341
      %5406 = vst [vmem:[%s187 + $0x2c] sm:$0xf] %v5342
      %5407 = vst [vmem:[%s187 + $0x30] sm:$0xf] %v5343
      %5408 = vst [vmem:[%s187 + $0x34] sm:$0xf] %v5344
      %5409 = vst [vmem:[%s187 + $0x38] sm:$0xf] %v5345
      %5410 = vst [vmem:[%s187 + $0x3c] sm:$0xf] %v5346
      %5411 = vst [vmem:[%s187 + $0x40] sm:$0xf] %v5347
      %5412 = vst [vmem:[%s187 + $0x44] sm:$0xf] %v5348
      %5413 = vst [vmem:[%s187 + $0x48] sm:$0xf] %v5349
      %5414 = vst [vmem:[%s187 + $0x4c] sm:$0xf] %v5350
      %5415 = vst [vmem:[%s187 + $0x50] sm:$0xf] %v5351
      %5416 = vst [vmem:[%s187 + $0x54] sm:$0xf] %v5352
      %5417 = vst [vmem:[%s187 + $0x58] sm:$0xf] %v5353
      %5418 = vst [vmem:[%s187 + $0x5c] sm:$0xf] %v5354
      %5419 = vst [vmem:[%s187 + $0x60] sm:$0xf] %v5355
      %5420 = vst [vmem:[%s187 + $0x64] sm:$0xf] %v5356
      %5421 = vst [vmem:[%s187 + $0x68] sm:$0xf] %v5357
      %5422 = vst [vmem:[%s187 + $0x6c] sm:$0xf] %v5358
      %5423 = vst [vmem:[%s187 + $0x70] sm:$0xf] %v5359
      %5424 = vst [vmem:[%s187 + $0x74] sm:$0xf] %v5360
      %5425 = vst [vmem:[%s187 + $0x78] sm:$0xf] %v5361
      %5426 = vst [vmem:[%s187 + $0x7c] sm:$0xf] %v5362
      %v5427 = vadd.f32 %v5235, %v5236
      %v5428 = vadd.f32 %v5427, %v5237
      %v5429 = vadd.f32 %v5428, %v5238
      %v5430 = vadd.f32 %v5429, %v5239
      %v5431 = vadd.f32 %v5430, %v5240
      %v5432 = vadd.f32 %v5431, %v5241
      %v5433 = vadd.f32 %v5432, %v5242
      %v5434 = vadd.f32 %v5433, %v5243
      %v5435 = vadd.f32 %v5434, %v5244
      %v5436 = vadd.f32 %v5435, %v5245
      %v5437 = vadd.f32 %v5436, %v5246
      %v5438 = vadd.f32 %v5437, %v5247
      %v5439 = vadd.f32 %v5438, %v5248
      %v5440 = vadd.f32 %v5439, %v5249
      %v5441 = vadd.f32 %v5440, %v5250
      %v5442 = vadd.f32 %v5441, %v5251
      %v5443 = vadd.f32 %v5442, %v5252
      %v5444 = vadd.f32 %v5443, %v5253
      %v5445 = vadd.f32 %v5444, %v5254
      %v5446 = vadd.f32 %v5445, %v5255
      %v5447 = vadd.f32 %v5446, %v5256
      %v5448 = vadd.f32 %v5447, %v5257
      %v5449 = vadd.f32 %v5448, %v5258
      %v5450 = vadd.f32 %v5449, %v5259
      %v5451 = vadd.f32 %v5450, %v5260
      %v5452 = vadd.f32 %v5451, %v5261
      %v5453 = vadd.f32 %v5452, %v5262
      %v5454 = vadd.f32 %v5453, %v5263
      %v5455 = vadd.f32 %v5454, %v5264
      %v5456 = vadd.f32 %v5455, %v5265
      %v5457 = vadd.f32 %v5456, %v5266
      %v5458 = vrot.slane %v5457, 4
      %v5459 = vadd.f32 %v5457, %v5458
      %v5460 = vrot.slane %v5459, 2
      %v5461 = vadd.f32 %v5459, %v5460
      %v5462 = vrot.slane %v5461, 1
      %v5463 = vadd.f32 %v5461, %v5462
      %v5464 = vmul.f32 %v5235, %v5235
      %v5465 = vmul.f32 %v5236, %v5236
      %v5466 = vmul.f32 %v5237, %v5237
      %v5467 = vmul.f32 %v5238, %v5238
      %v5468 = vmul.f32 %v5239, %v5239
      %v5469 = vmul.f32 %v5240, %v5240
      %v5470 = vmul.f32 %v5241, %v5241
      %v5471 = vmul.f32 %v5242, %v5242
      %v5472 = vmul.f32 %v5243, %v5243
      %v5473 = vmul.f32 %v5244, %v5244
      %v5474 = vmul.f32 %v5245, %v5245
      %v5475 = vmul.f32 %v5246, %v5246
      %v5476 = vmul.f32 %v5247, %v5247
      %v5477 = vmul.f32 %v5248, %v5248
      %v5478 = vmul.f32 %v5249, %v5249
      %v5479 = vmul.f32 %v5250, %v5250
      %v5480 = vmul.f32 %v5251, %v5251
      %v5481 = vmul.f32 %v5252, %v5252
      %v5482 = vmul.f32 %v5253, %v5253
      %v5483 = vmul.f32 %v5254, %v5254
      %v5484 = vmul.f32 %v5255, %v5255
      %v5485 = vmul.f32 %v5256, %v5256
      %v5486 = vmul.f32 %v5257, %v5257
      %v5487 = vmul.f32 %v5258, %v5258
      %v5488 = vmul.f32 %v5259, %v5259
      %v5489 = vmul.f32 %v5260, %v5260
      %v5490 = vmul.f32 %v5261, %v5261
      %v5491 = vmul.f32 %v5262, %v5262
      %v5492 = vmul.f32 %v5263, %v5263
      %v5493 = vmul.f32 %v5264, %v5264
      %v5494 = vmul.f32 %v5265, %v5265
      %v5495 = vmul.f32 %v5266, %v5266
      %v5496 = vadd.f32 %v5464, %v5465
      %v5497 = vadd.f32 %v5496, %v5466
      %v5498 = vadd.f32 %v5497, %v5467
      %v5499 = vadd.f32 %v5498, %v5468
      %v5500 = vadd.f32 %v5499, %v5469
      %v5501 = vadd.f32 %v5500, %v5470
      %v5502 = vadd.f32 %v5501, %v5471
      %v5503 = vadd.f32 %v5502, %v5472
      %v5504 = vadd.f32 %v5503, %v5473
      %v5505 = vadd.f32 %v5504, %v5474
      %v5506 = vadd.f32 %v5505, %v5475
      %v5507 = vadd.f32 %v5506, %v5476
      %v5508 = vadd.f32 %v5507, %v5477
      %v5509 = vadd.f32 %v5508, %v5478
      %v5510 = vadd.f32 %v5509, %v5479
      %v5511 = vadd.f32 %v5510, %v5480
      %v5512 = vadd.f32 %v5511, %v5481
      %v5513 = vadd.f32 %v5512, %v5482
      %v5514 = vadd.f32 %v5513, %v5483
      %v5515 = vadd.f32 %v5514, %v5484
      %v5516 = vadd.f32 %v5515, %v5485
      %v5517 = vadd.f32 %v5516, %v5486
      %v5518 = vadd.f32 %v5517, %v5487
      %v5519 = vadd.f32 %v5518, %v5488
      %v5520 = vadd.f32 %v5519, %v5489
      %v5521 = vadd.f32 %v5520, %v5490
      %v5522 = vadd.f32 %v5521, %v5491
      %v5523 = vadd.f32 %v5522, %v5492
      %v5524 = vadd.f32 %v5523, %v5493
      %v5525 = vadd.f32 %v5524, %v5494
      %v5526 = vadd.f32 %v5525, %v5495
      %v5527 = vrot.slane %v5526, 4
      %v5528 = vadd.f32 %v5526, %v5527
      %v5529 = vrot.slane %v5528, 2
      %v5530 = vadd.f32 %v5528, %v5529
      %v5531 = vrot.slane %v5530, 1
      %v5532 = vadd.f32 %v5530, %v5531
      %vm5533 = vcmask 1040384
      %v5534 = vsel %vm5533, %v5463, %v5532
      %vm5535 = vcmask 1041408
      %v5536 = vsel %vm5535, %v5534, 0.0
      %5537 = vst [vmem:[%s195] sm:$0xff] %v5536
      %s5538 = smul.u32 16, %s21
      %p5539 = scmp.lt.s32.totalorder %s20, 1
      %s5540 = scalar_select %p5539, %s20, 1
      %p5541 = scmp.lt.s32.totalorder %s5538, 15
      %s5542 = scalar_select %p5541, %s5538, 15
      %s5543 = smul.addr %s5542, 2
      %s5544 = smul.addr %s5540, 32
      %s5545 = sadd.s32 %s5543, %s5544
      %s5546 = smul.addr %s5545, 4
      %s5547 = scalar_lea.vmem %s3, %s5546
      %p5548 = scmp.lt.s32.totalorder %s20, 1
      %s5549 = scalar_select %p5548, %s20, 1
      %p5550 = scmp.lt.s32.totalorder %s21, 0
      %s5551 = scalar_select %p5550, %s21, 0
      %s5552 = sadd.s32 %s5551, %s5549
      %s5553 = smul.addr %s5552, 8
      %s5554 = scalar_lea.vmem %s4, %s5553
      // Predicated region
      $region105: #{conv_bn_relu.2} parent=27 // pred_check
        %p5555 = pneg %p90
      $region106: #{conv_bn_relu.2} parent=27 // pred_check_branch
        %5557 = sbr.rel (%p5555) target = $region108
      $region107: #{conv_bn_relu.2} parent=27 // pred_region
        %s5558 = smul.u32 16, %s21
      $region108: #{conv_bn_relu.2} parent=27 // pred_fallthru
        _
      // Predicated region
      $region109: #{conv_bn_relu.2} parent=27 // pred_check
        %p5559 = pneg %p118
      $region110: #{conv_bn_relu.2} parent=27 // pred_check_branch
        %5561 = sbr.rel (%p5559) target = $region112
      $region111: #{conv_bn_relu.2} parent=27 // pred_region
        _
      $region112: #{conv_bn_relu.2} parent=27 // pred_fallthru
        _
    $region28: #{conv_bn_relu.2} parent=5 // pred_fallthru
      _
    %p5562 = scmp.le.s32.totalorder 2, %s11
    // Predicated region
    $region113: #{conv_bn_relu.2} parent=5 // pred_check
      %p5563 = pneg %p5562
    $region114: #{conv_bn_relu.2} parent=5 // pred_check_branch
      %5565 = sbr.rel (%p5563) target = $region116
    $region115: #{conv_bn_relu.2} parent=5 // pred_region
      %s5566 = ssub.s32 %s11, 2
      // Predicated region
      $region117: #{conv_bn_relu.2} parent=115 // pred_check
        %p5567 = pneg %p96
      $region118: #{conv_bn_relu.2} parent=115 // pred_check_branch
        %5569 = sbr.rel (%p5567) target = $region120
      $region119: #{conv_bn_relu.2} parent=115 // pred_region
        %s5570 = smul.u32 16, %s23
        %p5571 = scmp.lt.s32.totalorder %s22, 1
        %s5572 = scalar_select %p5571, %s22, 1
        %p5573 = scmp.lt.s32.totalorder %s5570, 15
        %s5574 = scalar_select %p5573, %s5570, 15
        %s5575 = smul.addr %s5574, 2
        %s5576 = smul.addr %s5572, 32
        %s5577 = sadd.s32 %s5575, %s5576
        %s5578 = smul.addr %s5577, 4
        %s5579 = scalar_lea.vmem %s3, %s5578
      $region120: #{conv_bn_relu.2} parent=115 // pred_fallthru
        _
      // Predicated region
      $region121: #{conv_bn_relu.2} parent=115 // pred_check
        %p5580 = pneg %p124
      $region122: #{conv_bn_relu.2} parent=115 // pred_check_branch
        %5582 = sbr.rel (%p5580) target = $region124
      $region123: #{conv_bn_relu.2} parent=115 // pred_region
        %p5583 = scmp.lt.s32.totalorder %s22, 1
        %s5584 = scalar_select %p5583, %s22, 1
        %p5585 = scmp.lt.s32.totalorder %s23, 0
        %s5586 = scalar_select %p5585, %s23, 0
        %s5587 = sadd.s32 %s5586, %s5584
        %s5588 = smul.addr %s5587, 8
        %s5589 = scalar_lea.vmem %s4, %s5588
      $region124: #{conv_bn_relu.2} parent=115 // pred_fallthru
        _
    $region116: #{conv_bn_relu.2} parent=5 // pred_fallthru
      _
  $region6: #{conv_bn_relu.2} parent=0 // loop_footer
    %s15 = sadd.s32 1, %s11
  $region7: #{conv_bn_relu.2} parent=0 // loop_footer_branch
    %10 = sbr.rel target = $region3
  $region8: #{conv_bn_relu.2} parent=0 // loop_exit
    _
  %5590 = vsyncmov [#allocation3]
  %s5591 = vpop.sfrf %5590
  %p5592 = scmp.eq.s32.totalorder %s5591, 0
  %p5593 = pneg %p5592
  %5595 = shalt.err (%p5593)
  %s5596 = scalar_lea.sflag [#allocation3], 1
  %5597 = vsyncmov %s5596
  %s5598 = vpop.sfrf %5597
  %p5599 = scmp.eq.s32.totalorder %s5598, 0
  %p5600 = pneg %p5599
  %5602 = shalt.err (%p5600)

</llo_original>
